<compile_context>
chip_gen: v7x
topology: tpu7x:2x2x1
jax: 0.10.0
libtpu: 0.0.40
codegen_flags: <defaults>
</compile_context>

<pallas_src>
import functools

import jax
import jax.numpy as jnp
from jax.experimental import pallas as pl
from jax.experimental.pallas import tpu as pltpu

EPS = 2e-5
# > v5e/v6e scoped defaults (16/32 MiB), < v7x physical VMEM (64 MiB).
VMEM_LIMIT_BYTES = 48 * 1024 * 1024


def _compiler_params():
    return pltpu.CompilerParams(
        dimension_semantics=("parallel", "parallel"),
        vmem_limit_bytes=VMEM_LIMIT_BYTES,
    )


# ----------------------------------------------------------------------------
# Kernel 1: BN0 -> conv3x3(stride 1, pad 1) -> BN1 -> PReLU
#   grid = (batch, output-channel tiles); conv = 9 accumulated shifted matmuls
#   over a haloed VMEM scratch (halo written in-kernel, BN0 applied pre-pad).
# ----------------------------------------------------------------------------
def _stage1_kernel(x_ref, w_ref, bn0s_ref, bn0t_ref, bias_ref, alpha_ref,
                   o_ref, xpad_ref):
    _, H, W, C = x_ref.shape
    TN = o_ref.shape[3]

    # BN0 applied before zero padding -> padded halo is exactly pad(BN0(x)).
    xpad_ref[...] = jnp.zeros_like(xpad_ref)
    xpad_ref[1:H + 1, 1:W + 1, :] = x_ref[0] * bn0s_ref[...] + bn0t_ref[...]

    acc = jnp.zeros((H * W, TN), jnp.float32)
    for k in range(9):                                   # static, unrolled tap loop
        dy, dx = k // 3, k % 3
        win = xpad_ref[dy:dy + H, dx:dx + W, :].reshape(H * W, C)
        acc = acc + jnp.dot(win, w_ref[k], preferred_element_type=jnp.float32)

    y = acc + bias_ref[...]                              # BN1 scale folded into w1
    y = jnp.where(y >= 0.0, y, alpha_ref[...] * y)       # PReLU (per channel)
    o_ref[0] = y.reshape(H, W, TN).astype(o_ref.dtype)


def _stage1_call(x, w1, bn0s, bn0t, bias1, alpha, tn):
    N, H, W, C = x.shape
    D = w1.shape[2]
    nd = pl.cdiv(D, tn)
    return pl.pallas_call(
        _stage1_kernel,
        out_shape=jax.ShapeDtypeStruct((N, H, W, D), jnp.float32),
        grid=(N, nd),
        in_specs=[
            pl.BlockSpec((1, H, W, C), lambda n, d: (n, 0, 0, 0)),
            pl.BlockSpec((9, C, tn), lambda n, d: (0, 0, d)),
            pl.BlockSpec((1, 1, C), lambda n, d: (0, 0, 0)),
            pl.BlockSpec((1, 1, C), lambda n, d: (0, 0, 0)),
            pl.BlockSpec((1, tn), lambda n, d: (0, d)),
            pl.BlockSpec((1, tn), lambda n, d: (0, d)),
        ],
        out_specs=pl.BlockSpec((1, H, W, tn), lambda n, d: (n, 0, 0, d)),
        scratch_shapes=[pltpu.VMEM((H + 2, W + 2, C), jnp.float32)],
        compiler_params=_compiler_params(),
    )(x, w1, bn0s, bn0t, bias1, alpha)


# ----------------------------------------------------------------------------
# Kernel 2: conv3x3(stride s, pad 1) -> BN2, fused with shortcut + residual add.
#   The strided conv reads a wrapper-side space-to-batch (parity) layout of the
#   padded stage-1 output, so every tap is a static window (no strided access).
# ----------------------------------------------------------------------------
def _conv2_acc(yq_ref, w_ref, Ho, Wo, TN, stride):
    s = stride
    D = yq_ref.shape[-1]
    acc = jnp.zeros((Ho * Wo, TN), jnp.float32)
    for k in range(9):                                   # static, unrolled tap loop
        dy, dx = k // 3, k % 3
        p = (dy % s) * s + (dx % s)                      # parity plane index
        a0, d0 = dy // s, dx // s                        # static offsets in the plane
        win = yq_ref[0, p, a0:a0 + Ho, d0:d0 + Wo, :].reshape(Ho * Wo, D)
        acc = acc + jnp.dot(win, w_ref[k], preferred_element_type=jnp.float32)
    return acc


def _stage2_proj_kernel(yq_ref, w_ref, bias_ref, sp_ref, ws_ref, sbias_ref,
                        o_ref, *, stride):
    _, Ho, Wo, TN = o_ref.shape
    Cin = sp_ref.shape[3]
    res = _conv2_acc(yq_ref, w_ref, Ho, Wo, TN, stride) + bias_ref[...]
    sc = jnp.dot(sp_ref[0].reshape(Ho * Wo, Cin), ws_ref[...],
                 preferred_element_type=jnp.float32) + sbias_ref[...]
    o_ref[0] = (res + sc).reshape(Ho, Wo, TN).astype(o_ref.dtype)


def _stage2_ident_kernel(yq_ref, w_ref, bias_ref, sp_ref, o_ref, *, stride):
    _, Ho, Wo, TN = o_ref.shape
    res = _conv2_acc(yq_ref, w_ref, Ho, Wo, TN, stride) + bias_ref[...]
    sc = sp_ref[0].reshape(Ho * Wo, TN)   # MaxPool2d(1, stride) == strided identity
    o_ref[0] = (res + sc).reshape(Ho, Wo, TN).astype(o_ref.dtype)


def _stage2_proj_call(y1q, w2, bias2, sp, ws, sbias, s, tn, Ho, Wo):
    N = y1q.shape[0]
    Hq, Wq, D = y1q.shape[2:]
    Cin = sp.shape[3]
    nd = pl.cdiv(D, tn)
    return pl.pallas_call(
        functools.partial(_stage2_proj_kernel, stride=s),
        out_shape=jax.ShapeDtypeStruct((N, Ho, Wo, D), jnp.float32),
        grid=(N, nd),
        in_specs=[
            pl.BlockSpec((1, s * s, Hq, Wq, D), lambda n, d: (n, 0, 0, 0, 0)),
            pl.BlockSpec((9, D, tn), lambda n, d: (0, 0, d)),
            pl.BlockSpec((1, tn), lambda n, d: (0, d)),
            pl.BlockSpec((1, Ho, Wo, Cin), lambda n, d: (n, 0, 0, 0)),
            pl.BlockSpec((Cin, tn), lambda n, d: (0, d)),
            pl.BlockSpec((1, tn), lambda n, d: (0, d)),
        ],
        out_specs=pl.BlockSpec((1, Ho, Wo, tn), lambda n, d: (n, 0, 0, d)),
        compiler_params=_compiler_params(),
    )(y1q, w2, bias2, sp, ws, sbias)


def _stage2_ident_call(y1q, w2, bias2, sp, s, tn, Ho, Wo):
    N = y1q.shape[0]
    Hq, Wq, D = y1q.shape[2:]
    nd = pl.cdiv(D, tn)
    return pl.pallas_call(
        functools.partial(_stage2_ident_kernel, stride=s),
        out_shape=jax.ShapeDtypeStruct((N, Ho, Wo, D), jnp.float32),
        grid=(N, nd),
        in_specs=[
            pl.BlockSpec((1, s * s, Hq, Wq, D), lambda n, d: (n, 0, 0, 0, 0)),
            pl.BlockSpec((9, D, tn), lambda n, d: (0, 0, d)),
            pl.BlockSpec((1, tn), lambda n, d: (0, d)),
            pl.BlockSpec((1, Ho, Wo, tn), lambda n, d: (n, 0, 0, d)),
        ],
        out_specs=pl.BlockSpec((1, Ho, Wo, tn), lambda n, d: (n, 0, 0, d)),
        compiler_params=_compiler_params(),
    )(y1q, w2, bias2, sp)


# ----------------------------------------------------------------------------
# Glue: BN folding, weight relayout, wrapper
# ----------------------------------------------------------------------------
def bn_fold(bn):
    gamma, beta, mean, var = bn
    s = gamma / jnp.sqrt(var + EPS)
    t = beta - mean * s
    return s, t


def _conv3x3_weight(w_oihw, out_scale):
    # (O, I, 3, 3) -> (9, I, O) with k = dy*3 + dx, output-channel scale folded in.
    O, I, kh, kw = w_oihw.shape
    w = jnp.transpose(w_oihw, (2, 3, 1, 0)).reshape(kh * kw, I, O)
    return w * out_scale[None, None, :]


def bottleneck_ir_pallas(x_nchw, params, stride, *, tn=128):
    x = jnp.transpose(x_nchw, (0, 2, 3, 1)).astype(jnp.float32)   # NHWC
    N, H, W, Cin = x.shape
    depth = params["w1"].shape[0]
    s = int(stride)
    assert (H + 2) % s == 0 and (W + 2) % s == 0, "even spatial dims required for stride 2"
    tn = min(tn, depth)   # output-channel lane tile (full 128 lanes at production depths)

    s0, t0 = bn_fold(params["bn0"])
    s1, t1 = bn_fold(params["bn1"])
    s2, t2 = bn_fold(params["bn2"])

    # ---- stage 1: BN0 -> conv3x3/1 -> BN1 -> PReLU (single fused kernel) ----
    w1 = _conv3x3_weight(params["w1"], s1)
    bias1 = t1.reshape(1, depth)
    alpha = params["alpha"].reshape(1, depth)
    y1 = _stage1_call(x, w1, s0.reshape(1, 1, Cin), t0.reshape(1, 1, Cin),
                      bias1, alpha, tn)                               # (N, H, W, depth)

    # ---- wrapper-side pad + space-to-batch (pure layout plumbing in XLA) ----
    Hq, Wq = (H + 2) // s, (W + 2) // s
    Ho, Wo = (H - 1) // s + 1, (W - 1) // s + 1
    y1p = jnp.pad(y1, ((0, 0), (1, 1), (1, 1), (0, 0)))
    y1q = y1p.reshape(N, Hq, s, Wq, s, depth)
    y1q = jnp.transpose(y1q, (0, 2, 4, 1, 3, 5)).reshape(N, s * s, Hq, Wq, depth)

    # ---- stage 2: conv3x3/s -> BN2, + shortcut, + residual add (fused) ------
    w2 = _conv3x3_weight(params["w2"], s2)
    bias2 = t2.reshape(1, depth)
    sp = x[:, ::s, ::s, :]                                            # (N, Ho, Wo, Cin)

    if "ws" in params:
        ss, ts = bn_fold(params["bns"])
        ws = params["ws"][:, :, 0, 0].T * ss[None, :]                 # (Cin, depth)
        sbias = ts.reshape(1, depth)
        out = _stage2_proj_call(y1q, w2, bias2, sp, ws, sbias, s, tn, Ho, Wo)
    else:
        out = _stage2_ident_call(y1q, w2, bias2, sp, s, tn, Ho, Wo)

    return jnp.transpose(out, (0, 3, 1, 2))                           # back to NCHW


# ----------------------------------------------------------------------------
# Pure-JAX reference (mirrors the PyTorch module in eval mode)
# ----------------------------------------------------------------------------
def bottleneck_ir_ref(x_nchw, params, stride):
    x = x_nchw.astype(jnp.float32)

    def bn(z, p):
        g, b, m, v = p
        return (z - m[None, :, None, None]) / jnp.sqrt(v + EPS)[None, :, None, None] \
            * g[None, :, None, None] + b[None, :, None, None]

    def conv(z, w, s, pad):
        return jax.lax.conv_general_dilated(
            z, w, (s, s), [(pad, pad), (pad, pad)],
            dimension_numbers=("NCHW", "OIHW", "NCHW"),
            precision=jax.lax.Precision.HIGHEST)

    r = bn(x, params["bn0"])
    r = conv(r, params["w1"], 1, 1)
    r = bn(r, params["bn1"])
    a = params["alpha"][None, :, None, None]
    r = jnp.where(r >= 0, r, a * r)
    r = conv(r, params["w2"], stride, 1)
    r = bn(r, params["bn2"])
    if "ws" in params:
        sc = bn(conv(x, params["ws"], stride, 0), params["bns"])
    else:
        sc = x[:, :, ::stride, ::stride]
    return r + sc


# ----------------------------------------------------------------------------
# Deterministic parameter construction
# ----------------------------------------------------------------------------
def make_bn(key, c):
    k1, k2, k3, k4 = jax.random.split(key, 4)
    gamma = 1.0 + 0.1 * jax.random.normal(k1, (c,), jnp.float32)
    beta = 0.1 * jax.random.normal(k2, (c,), jnp.float32)
    mean = 0.1 * jax.random.normal(k3, (c,), jnp.float32)
    var = jax.random.uniform(k4, (c,), jnp.float32, 0.5, 1.5)
    return (gamma, beta, mean, var)


def make_params(key, in_ch, depth):
    keys = jax.random.split(key, 8)
    p = {
        "w1": 0.2 * jax.random.normal(keys[0], (depth, in_ch, 3, 3), jnp.float32),
        "w2": 0.2 * jax.random.normal(keys[1], (depth, depth, 3, 3), jnp.float32),
        "bn0": make_bn(keys[2], in_ch),
        "bn1": make_bn(keys[3], depth),
        "bn2": make_bn(keys[4], depth),
        "alpha": jnp.full((depth,), 0.25, jnp.float32),  # PReLU default init
    }
    if in_ch != depth:
        p["ws"] = 0.2 * jax.random.normal(keys[5], (depth, in_ch, 1, 1), jnp.float32)
        p["bns"] = make_bn(keys[6], depth)
    return p


if __name__ == "__main__":
    key = jax.random.PRNGKey(0)
    kx, kp1, kp2, kp3 = jax.random.split(key, 4)

    # Case A: projection shortcut (Conv1x1 + BN), in_ch != depth, stride 2.
    N, Cin, H, W, depth, stride = 2, 4, 16, 16, 8, 2
    x = jax.random.normal(kx, (N, Cin, H, W), jnp.float32)
    params_a = make_params(kp1, Cin, depth)
    out_a = jax.block_until_ready(bottleneck_ir_pallas(x, params_a, stride))
    ref_a = bottleneck_ir_ref(x, params_a, stride)
    assert out_a.shape == ref_a.shape == (N, depth, H // stride, W // stride)
    assert jnp.allclose(out_a, ref_a, atol=2e-2, rtol=2e-2), \
        float(jnp.max(jnp.abs(out_a - ref_a)))

    # Case B: identity shortcut (MaxPool2d(1, 2)), in_ch == depth, stride 2.
    params_b = make_params(kp2, 8, 8)
    x_b = jax.random.normal(jax.random.PRNGKey(1), (2, 8, 16, 16), jnp.float32)
    out_b = jax.block_until_ready(bottleneck_ir_pallas(x_b, params_b, 2))
    ref_b = bottleneck_ir_ref(x_b, params_b, 2)
    assert jnp.allclose(out_b, ref_b, atol=2e-2, rtol=2e-2), \
        float(jnp.max(jnp.abs(out_b - ref_b)))

    # Case C: identity shortcut, stride 1.
    params_c = make_params(kp3, 8, 8)
    x_c = jax.random.normal(jax.random.PRNGKey(2), (2, 8, 16, 16), jnp.float32)
    out_c = jax.block_until_ready(bottleneck_ir_pallas(x_c, params_c, 1))
    ref_c = bottleneck_ir_ref(x_c, params_c, 1)
    assert jnp.allclose(out_c, ref_c, atol=2e-2, rtol=2e-2), \
        float(jnp.max(jnp.abs(out_c - ref_c)))

    print("KERNEL_OK")
</pallas_src>

<mosaic_0001>
module attributes {stable_mosaic.version = 11 : i64} {
  func.func @_stage1_kernel(%arg0: i32, %arg1: i32, %arg2: memref<1x16x16x4xf32, #tpu.memory_space<vmem>>, %arg3: memref<9x4x8xf32, #tpu.memory_space<vmem>>, %arg4: memref<1x1x4xf32, #tpu.memory_space<vmem>>, %arg5: memref<1x1x4xf32, #tpu.memory_space<vmem>>, %arg6: memref<1x8xf32, #tpu.memory_space<vmem>>, %arg7: memref<1x8xf32, #tpu.memory_space<vmem>>, %arg8: memref<1x16x16x8xf32, #tpu.memory_space<vmem>>, %arg9: memref<18x18x4xf32, #tpu.memory_space<vmem>>) attributes {dimension_semantics = [#tpu.dimension_semantics<parallel>, #tpu.dimension_semantics<parallel>], iteration_bounds = array<i64: 2, 1>, scalar_prefetch = 0 : i64, scratch_operands = 1 : i64, tpu.core_type = #tpu.core_type<tc>, window_params = [{transform_indices = @transform_0, window_bounds = array<i64: 1, 16, 16, 4>}, {transform_indices = @transform_1, window_bounds = array<i64: 9, 4, 8>}, {pipeline_mode = #tpu.pipeline_mode<synchronous>, transform_indices = @transform_2, window_bounds = array<i64: 1, 1, 4>}, {pipeline_mode = #tpu.pipeline_mode<synchronous>, transform_indices = @transform_3, window_bounds = array<i64: 1, 1, 4>}, {transform_indices = @transform_4, window_bounds = array<i64: 1, 8>}, {transform_indices = @transform_5, window_bounds = array<i64: 1, 8>}, {transform_indices = @transform_6, window_bounds = array<i64: 1, 16, 16, 8>}]} {
    %cst = arith.constant 0.000000e+00 : f32
    %0 = vector.broadcast %cst : f32 to vector<18x18x4xf32>
    %c0 = arith.constant 0 : index
    %c0_0 = arith.constant 0 : index
    %c0_1 = arith.constant 0 : index
    %1 = vector.load %arg9[%c0, %c0_0, %c0_1] : memref<18x18x4xf32, #tpu.memory_space<vmem>>, vector<18x18x4xf32>
    tpu.vector_store %arg9[%c0, %c0_0, %c0_1], %0 {strides = array<i32>} : memref<18x18x4xf32, #tpu.memory_space<vmem>>, vector<18x18x4xf32>,
    %c0_2 = arith.constant 0 : index
    %c0_3 = arith.constant 0 : index
    %c0_4 = arith.constant 0 : index
    %c0_5 = arith.constant 0 : index
    %2 = vector.load %arg2[%c0_2, %c0_3, %c0_4, %c0_5] : memref<1x16x16x4xf32, #tpu.memory_space<vmem>>, vector<1x16x16x4xf32>
    %3 = vector.shape_cast %2 : vector<1x16x16x4xf32> to vector<16x16x4xf32>
    %c0_6 = arith.constant 0 : index
    %c0_7 = arith.constant 0 : index
    %c0_8 = arith.constant 0 : index
    %4 = vector.load %arg4[%c0_6, %c0_7, %c0_8] : memref<1x1x4xf32, #tpu.memory_space<vmem>>, vector<1x1x4xf32>
    %5 = vector.broadcast %4 : vector<1x1x4xf32> to vector<16x16x4xf32>
    %6 = arith.mulf %3, %5 : vector<16x16x4xf32>
    %c0_9 = arith.constant 0 : index
    %c0_10 = arith.constant 0 : index
    %c0_11 = arith.constant 0 : index
    %7 = vector.load %arg5[%c0_9, %c0_10, %c0_11] : memref<1x1x4xf32, #tpu.memory_space<vmem>>, vector<1x1x4xf32>
    %8 = vector.broadcast %7 : vector<1x1x4xf32> to vector<16x16x4xf32>
    %9 = arith.addf %6, %8 : vector<16x16x4xf32>
    %c1 = arith.constant 1 : index
    %c1_12 = arith.constant 1 : index
    %c0_13 = arith.constant 0 : index
    %10 = vector.load %arg9[%c1, %c1_12, %c0_13] : memref<18x18x4xf32, #tpu.memory_space<vmem>>, vector<16x16x4xf32>
    tpu.vector_store %arg9[%c1, %c1_12, %c0_13], %9 {strides = array<i32>} : memref<18x18x4xf32, #tpu.memory_space<vmem>>, vector<16x16x4xf32>,
    %cst_14 = arith.constant 0.000000e+00 : f32
    %11 = vector.broadcast %cst_14 : f32 to vector<256x8xf32>
    %c0_15 = arith.constant 0 : index
    %c0_16 = arith.constant 0 : index
    %c0_17 = arith.constant 0 : index
    %12 = vector.load %arg9[%c0_15, %c0_16, %c0_17] : memref<18x18x4xf32, #tpu.memory_space<vmem>>, vector<16x16x4xf32>
    %13 = vector.shape_cast %12 : vector<16x16x4xf32> to vector<256x4xf32>
    %c0_18 = arith.constant 0 : index
    %c0_19 = arith.constant 0 : index
    %c0_20 = arith.constant 0 : index
    %14 = vector.load %arg3[%c0_18, %c0_19, %c0_20] : memref<9x4x8xf32, #tpu.memory_space<vmem>>, vector<1x4x8xf32>
    %15 = vector.shape_cast %14 : vector<1x4x8xf32> to vector<4x8xf32>
    %cst_21 = arith.constant dense<0.000000e+00> : vector<256x8xf32>
    %16 = tpu.matmul %13, %15, %cst_21 {dimension_numbers = #tpu.dot_dimension_numbers<[1], [0], [0], [1], [0, 0, 1, 1], [], []>} : vector<256x4xf32>, vector<4x8xf32>, vector<256x8xf32> -> vector<256x8xf32>
    %17 = arith.addf %11, %16 : vector<256x8xf32>
    %c0_22 = arith.constant 0 : index
    %c1_23 = arith.constant 1 : index
    %c0_24 = arith.constant 0 : index
    %18 = vector.load %arg9[%c0_22, %c1_23, %c0_24] : memref<18x18x4xf32, #tpu.memory_space<vmem>>, vector<16x16x4xf32>
    %19 = vector.shape_cast %18 : vector<16x16x4xf32> to vector<256x4xf32>
    %c1_25 = arith.constant 1 : index
    %c0_26 = arith.constant 0 : index
    %c0_27 = arith.constant 0 : index
    %20 = vector.load %arg3[%c1_25, %c0_26, %c0_27] : memref<9x4x8xf32, #tpu.memory_space<vmem>>, vector<1x4x8xf32>
    %21 = vector.shape_cast %20 : vector<1x4x8xf32> to vector<4x8xf32>
    %cst_28 = arith.constant dense<0.000000e+00> : vector<256x8xf32>
    %22 = tpu.matmul %19, %21, %cst_28 {dimension_numbers = #tpu.dot_dimension_numbers<[1], [0], [0], [1], [0, 0, 1, 1], [], []>} : vector<256x4xf32>, vector<4x8xf32>, vector<256x8xf32> -> vector<256x8xf32>
    %23 = arith.addf %17, %22 : vector<256x8xf32>
    %c0_29 = arith.constant 0 : index
    %c2 = arith.constant 2 : index
    %c0_30 = arith.constant 0 : index
    %24 = vector.load %arg9[%c0_29, %c2, %c0_30] : memref<18x18x4xf32, #tpu.memory_space<vmem>>, vector<16x16x4xf32>
    %25 = vector.shape_cast %24 : vector<16x16x4xf32> to vector<256x4xf32>
    %c2_31 = arith.constant 2 : index
    %c0_32 = arith.constant 0 : index
    %c0_33 = arith.constant 0 : index
    %26 = vector.load %arg3[%c2_31, %c0_32, %c0_33] : memref<9x4x8xf32, #tpu.memory_space<vmem>>, vector<1x4x8xf32>
    %27 = vector.shape_cast %26 : vector<1x4x8xf32> to vector<4x8xf32>
    %cst_34 = arith.constant dense<0.000000e+00> : vector<256x8xf32>
    %28 = tpu.matmul %25, %27, %cst_34 {dimension_numbers = #tpu.dot_dimension_numbers<[1], [0], [0], [1], [0, 0, 1, 1], [], []>} : vector<256x4xf32>, vector<4x8xf32>, vector<256x8xf32> -> vector<256x8xf32>
    %29 = arith.addf %23, %28 : vector<256x8xf32>
    %c1_35 = arith.constant 1 : index
    %c0_36 = arith.constant 0 : index
    %c0_37 = arith.constant 0 : index
    %30 = vector.load %arg9[%c1_35, %c0_36, %c0_37] : memref<18x18x4xf32, #tpu.memory_space<vmem>>, vector<16x16x4xf32>
    %31 = vector.shape_cast %30 : vector<16x16x4xf32> to vector<256x4xf32>
    %c3 = arith.constant 3 : index
    %c0_38 = arith.constant 0 : index
    %c0_39 = arith.constant 0 : index
    %32 = vector.load %arg3[%c3, %c0_38, %c0_39] : memref<9x4x8xf32, #tpu.memory_space<vmem>>, vector<1x4x8xf32>
    %33 = vector.shape_cast %32 : vector<1x4x8xf32> to vector<4x8xf32>
    %cst_40 = arith.constant dense<0.000000e+00> : vector<256x8xf32>
    %34 = tpu.matmul %31, %33, %cst_40 {dimension_numbers = #tpu.dot_dimension_numbers<[1], [0], [0], [1], [0, 0, 1, 1], [], []>} : vector<256x4xf32>, vector<4x8xf32>, vector<256x8xf32> -> vector<256x8xf32>
    %35 = arith.addf %29, %34 : vector<256x8xf32>
    %c1_41 = arith.constant 1 : index
    %c1_42 = arith.constant 1 : index
    %c0_43 = arith.constant 0 : index
    %36 = vector.load %arg9[%c1_41, %c1_42, %c0_43] : memref<18x18x4xf32, #tpu.memory_space<vmem>>, vector<16x16x4xf32>
    %37 = vector.shape_cast %36 : vector<16x16x4xf32> to vector<256x4xf32>
    %c4 = arith.constant 4 : index
    %c0_44 = arith.constant 0 : index
    %c0_45 = arith.constant 0 : index
    %38 = vector.load %arg3[%c4, %c0_44, %c0_45] : memref<9x4x8xf32, #tpu.memory_space<vmem>>, vector<1x4x8xf32>
    %39 = vector.shape_cast %38 : vector<1x4x8xf32> to vector<4x8xf32>
    %cst_46 = arith.constant dense<0.000000e+00> : vector<256x8xf32>
    %40 = tpu.matmul %37, %39, %cst_46 {dimension_numbers = #tpu.dot_dimension_numbers<[1], [0], [0], [1], [0, 0, 1, 1], [], []>} : vector<256x4xf32>, vector<4x8xf32>, vector<256x8xf32> -> vector<256x8xf32>
    %41 = arith.addf %35, %40 : vector<256x8xf32>
    %c1_47 = arith.constant 1 : index
    %c2_48 = arith.constant 2 : index
    %c0_49 = arith.constant 0 : index
    %42 = vector.load %arg9[%c1_47, %c2_48, %c0_49] : memref<18x18x4xf32, #tpu.memory_space<vmem>>, vector<16x16x4xf32>
    %43 = vector.shape_cast %42 : vector<16x16x4xf32> to vector<256x4xf32>
    %c5 = arith.constant 5 : index
    %c0_50 = arith.constant 0 : index
    %c0_51 = arith.constant 0 : index
    %44 = vector.load %arg3[%c5, %c0_50, %c0_51] : memref<9x4x8xf32, #tpu.memory_space<vmem>>, vector<1x4x8xf32>
    %45 = vector.shape_cast %44 : vector<1x4x8xf32> to vector<4x8xf32>
    %cst_52 = arith.constant dense<0.000000e+00> : vector<256x8xf32>
    %46 = tpu.matmul %43, %45, %cst_52 {dimension_numbers = #tpu.dot_dimension_numbers<[1], [0], [0], [1], [0, 0, 1, 1], [], []>} : vector<256x4xf32>, vector<4x8xf32>, vector<256x8xf32> -> vector<256x8xf32>
    %47 = arith.addf %41, %46 : vector<256x8xf32>
    %c2_53 = arith.constant 2 : index
    %c0_54 = arith.constant 0 : index
    %c0_55 = arith.constant 0 : index
    %48 = vector.load %arg9[%c2_53, %c0_54, %c0_55] : memref<18x18x4xf32, #tpu.memory_space<vmem>>, vector<16x16x4xf32>
    %49 = vector.shape_cast %48 : vector<16x16x4xf32> to vector<256x4xf32>
    %c6 = arith.constant 6 : index
    %c0_56 = arith.constant 0 : index
    %c0_57 = arith.constant 0 : index
    %50 = vector.load %arg3[%c6, %c0_56, %c0_57] : memref<9x4x8xf32, #tpu.memory_space<vmem>>, vector<1x4x8xf32>
    %51 = vector.shape_cast %50 : vector<1x4x8xf32> to vector<4x8xf32>
    %cst_58 = arith.constant dense<0.000000e+00> : vector<256x8xf32>
    %52 = tpu.matmul %49, %51, %cst_58 {dimension_numbers = #tpu.dot_dimension_numbers<[1], [0], [0], [1], [0, 0, 1, 1], [], []>} : vector<256x4xf32>, vector<4x8xf32>, vector<256x8xf32> -> vector<256x8xf32>
    %53 = arith.addf %47, %52 : vector<256x8xf32>
    %c2_59 = arith.constant 2 : index
    %c1_60 = arith.constant 1 : index
    %c0_61 = arith.constant 0 : index
    %54 = vector.load %arg9[%c2_59, %c1_60, %c0_61] : memref<18x18x4xf32, #tpu.memory_space<vmem>>, vector<16x16x4xf32>
    %55 = vector.shape_cast %54 : vector<16x16x4xf32> to vector<256x4xf32>
    %c7 = arith.constant 7 : index
    %c0_62 = arith.constant 0 : index
    %c0_63 = arith.constant 0 : index
    %56 = vector.load %arg3[%c7, %c0_62, %c0_63] : memref<9x4x8xf32, #tpu.memory_space<vmem>>, vector<1x4x8xf32>
    %57 = vector.shape_cast %56 : vector<1x4x8xf32> to vector<4x8xf32>
    %cst_64 = arith.constant dense<0.000000e+00> : vector<256x8xf32>
    %58 = tpu.matmul %55, %57, %cst_64 {dimension_numbers = #tpu.dot_dimension_numbers<[1], [0], [0], [1], [0, 0, 1, 1], [], []>} : vector<256x4xf32>, vector<4x8xf32>, vector<256x8xf32> -> vector<256x8xf32>
    %59 = arith.addf %53, %58 : vector<256x8xf32>
    %c2_65 = arith.constant 2 : index
    %c2_66 = arith.constant 2 : index
    %c0_67 = arith.constant 0 : index
    %60 = vector.load %arg9[%c2_65, %c2_66, %c0_67] : memref<18x18x4xf32, #tpu.memory_space<vmem>>, vector<16x16x4xf32>
    %61 = vector.shape_cast %60 : vector<16x16x4xf32> to vector<256x4xf32>
    %c8 = arith.constant 8 : index
    %c0_68 = arith.constant 0 : index
    %c0_69 = arith.constant 0 : index
    %62 = vector.load %arg3[%c8, %c0_68, %c0_69] : memref<9x4x8xf32, #tpu.memory_space<vmem>>, vector<1x4x8xf32>
    %63 = vector.shape_cast %62 : vector<1x4x8xf32> to vector<4x8xf32>
    %cst_70 = arith.constant dense<0.000000e+00> : vector<256x8xf32>
    %64 = tpu.matmul %61, %63, %cst_70 {dimension_numbers = #tpu.dot_dimension_numbers<[1], [0], [0], [1], [0, 0, 1, 1], [], []>} : vector<256x4xf32>, vector<4x8xf32>, vector<256x8xf32> -> vector<256x8xf32>
    %65 = arith.addf %59, %64 : vector<256x8xf32>
    %c0_71 = arith.constant 0 : index
    %c0_72 = arith.constant 0 : index
    %66 = vector.load %arg6[%c0_71, %c0_72] : memref<1x8xf32, #tpu.memory_space<vmem>>, vector<1x8xf32>
    %67 = vector.broadcast %66 : vector<1x8xf32> to vector<256x8xf32>
    %68 = arith.addf %65, %67 : vector<256x8xf32>
    %cst_73 = arith.constant 0.000000e+00 : f32
    %69 = vector.broadcast %cst_73 : f32 to vector<256x8xf32>
    %70 = arith.cmpf oge, %68, %69 : vector<256x8xf32>
    %c0_74 = arith.constant 0 : index
    %c0_75 = arith.constant 0 : index
    %71 = vector.load %arg7[%c0_74, %c0_75] : memref<1x8xf32, #tpu.memory_space<vmem>>, vector<1x8xf32>
    %72 = vector.broadcast %71 : vector<1x8xf32> to vector<256x8xf32>
    %73 = arith.mulf %72, %68 : vector<256x8xf32>
    %74 = arith.select %70, %68, %73 : vector<256x8xi1>, vector<256x8xf32>
    %75 = vector.shape_cast %74 : vector<256x8xf32> to vector<16x16x8xf32>
    %c0_76 = arith.constant 0 : index
    %c0_77 = arith.constant 0 : index
    %c0_78 = arith.constant 0 : index
    %c0_79 = arith.constant 0 : index
    %76 = vector.load %arg8[%c0_76, %c0_77, %c0_78, %c0_79] : memref<1x16x16x8xf32, #tpu.memory_space<vmem>>, vector<1x16x16x8xf32>
    %77 = vector.shape_cast %76 : vector<1x16x16x8xf32> to vector<16x16x8xf32>
    %78 = vector.shape_cast %75 : vector<16x16x8xf32> to vector<1x16x16x8xf32>
    tpu.vector_store %arg8[%c0_76, %c0_77, %c0_78, %c0_79], %78 {strides = array<i32>} : memref<1x16x16x8xf32, #tpu.memory_space<vmem>>, vector<1x16x16x8xf32>,
    return
  }
  func.func @transform_0(%arg0: i32, %arg1: i32) -> (i32, i32, i32, i32) {
    %c0_i32 = arith.constant 0 : i32
    %c0_i32_0 = arith.constant 0 : i32
    %c0_i32_1 = arith.constant 0 : i32
    %c0_i32_2 = arith.constant 0 : i32
    return %arg0, %c0_i32, %c0_i32_0, %c0_i32_1 : i32, i32, i32, i32
  }
  func.func @transform_1(%arg0: i32, %arg1: i32) -> (i32, i32, i32) {
    %c0_i32 = arith.constant 0 : i32
    %c0_i32_0 = arith.constant 0 : i32
    %c0_i32_1 = arith.constant 0 : i32
    return %c0_i32, %c0_i32_0, %arg1 : i32, i32, i32
  }
  func.func @transform_2(%arg0: i32, %arg1: i32) -> (i32, i32, i32) {
    %c0_i32 = arith.constant 0 : i32
    %c0_i32_0 = arith.constant 0 : i32
    %c0_i32_1 = arith.constant 0 : i32
    %c0_i32_2 = arith.constant 0 : i32
    return %c0_i32, %c0_i32_0, %c0_i32_1 : i32, i32, i32
  }
  func.func @transform_3(%arg0: i32, %arg1: i32) -> (i32, i32, i32) {
    %c0_i32 = arith.constant 0 : i32
    %c0_i32_0 = arith.constant 0 : i32
    %c0_i32_1 = arith.constant 0 : i32
    %c0_i32_2 = arith.constant 0 : i32
    return %c0_i32, %c0_i32_0, %c0_i32_1 : i32, i32, i32
  }
  func.func @transform_4(%arg0: i32, %arg1: i32) -> (i32, i32) {
    %c0_i32 = arith.constant 0 : i32
    %c0_i32_0 = arith.constant 0 : i32
    return %c0_i32, %arg1 : i32, i32
  }
  func.func @transform_5(%arg0: i32, %arg1: i32) -> (i32, i32) {
    %c0_i32 = arith.constant 0 : i32
    %c0_i32_0 = arith.constant 0 : i32
    return %c0_i32, %arg1 : i32, i32
  }
  func.func @transform_6(%arg0: i32, %arg1: i32) -> (i32, i32, i32, i32) {
    %c0_i32 = arith.constant 0 : i32
    %c0_i32_0 = arith.constant 0 : i32
    %c0_i32_1 = arith.constant 0 : i32
    return %arg0, %c0_i32, %c0_i32_0, %arg1 : i32, i32, i32, i32
  }
}

</mosaic_0001>

<llo_original>
// kernel: tpu_custom_call.1
$region0: #{tpu_custom_call.1}
  #allocation0 [shape = 'u32[]', space=smem, size = 0x4, offset = 0x4, fixed_abs, tag = 'smem constant byte address 0x4 - core index']
  #allocation1 [shape = 'u32[144,128]{1,0:T(1,128)}', space=vmem, size = 0x12000, scoped, tag = 'internal scratch']
  #allocation2 [shape = 'f32[18,18,4]{2,1,0:T(8,128)}', space=vmem, size = 0x36000, scoped, tag = 'scratch operand']
  %s0 = inlined_call_operand.vmem [shape: f32[2,16,16,4], index: 0, kind: input, shape index: {}]
  %s1 = inlined_call_operand.vmem [shape: f32[9,4,8], index: 1, kind: input, shape index: {}]
  %s2 = inlined_call_operand.vmem [shape: f32[1,1,4], index: 2, kind: input, shape index: {}]
  %s3 = inlined_call_operand.vmem [shape: f32[1,1,4], index: 3, kind: input, shape index: {}]
  %s4 = inlined_call_operand.vmem [shape: f32[1,8], index: 4, kind: input, shape index: {}]
  %s5 = inlined_call_operand.vmem [shape: f32[1,8], index: 5, kind: input, shape index: {}]
  %s6 = inlined_call_operand.vmem [shape: f32[2,16,16,8], index: 6, kind: output, shape index: {}]
  %s7 = sld [smem:[#allocation0]]
  $region57: #{tpu_custom_call.1} parent=0
    _
  %s9 = ssub.s32 1, %s7
  %s10 = scalar_select 0, %s9, %s7
  loop: start=0, step=1, limit=4
  $region2: #{tpu_custom_call.1} parent=0 // loop_pre_header
    _
  $region3: #{tpu_custom_call.1} parent=0 // loop_header
    %s12 = sphi 0, %s16
    %p13 = scmp.ge.s32.totalorder %s12, 4
    %s19 = sphi 0, %s31
    %s20 = sphi 0, %s27
    %s21 = sphi 0, %s19
    %s22 = sphi 0, %s20
    %s23 = sphi 0, %s21
    %s24 = sphi 0, %s22
    %s34 = sphi 0, %s36
    %s37 = sphi 0, %s34
    %s38 = sphi 0, %s37
    %s54 = sphi 0, %s38
    %s60 = sphi 0, %s62
    %s63 = sphi 0, %s60
    %s64 = sphi 0, %s63
    %s80 = sphi 0, %s64
    %s84 = sphi 0, %s84
    %s86 = sphi 0, %s84
    %s87 = sphi 0, %s86
    %s101 = sphi 0, %s87
    %s105 = sphi 0, %s105
    %s107 = sphi 0, %s105
    %s108 = sphi 0, %s107
    %s122 = sphi 0, %s108
    %s128 = sphi 0, %s130
    %s131 = sphi 0, %s128
    %s132 = sphi 0, %s131
    %s148 = sphi 0, %s132
    %s154 = sphi 0, %s156
    %s157 = sphi 0, %s154
    %s158 = sphi 0, %s157
    %s174 = sphi 0, %s158
    %s182 = sphi 0, %s184
    %s185 = sphi 0, %s182
    %s186 = sphi 0, %s185
    %s202 = sphi 0, %s186
  $region4: #{tpu_custom_call.1} parent=0 // loop_header_branch
    %15 = sbr.rel (%p13) target = $region8
  $region5: #{tpu_custom_call.1} parent=0 // loop_body
    %s17 = ssub.s32 %s12, 1
    %s18 = ssub.s32 %s12, 2
    %s25 = sadd.s32 1, %s20
    %p26 = scmp.ge.s32.totalorder %s25, 1
    %s27 = scalar_select %p26, 0, %s25
    %s28 = sadd.s32 1, %s19
    %s29 = scalar_select %p26, %s28, %s19
    %p30 = scmp.ge.s32.totalorder %s29, 2
    %s31 = scalar_select %p30, 0, %s29
    %s32 = ssub.s32 %s19, %s31
    %p33 = scmp.eq.s32.totalorder %s32, 0
    %s35 = sadd.s32 %s34, 1
    %s36 = scalar_select %p33, %s34, %s35
    %p39 = pneg %p33
    %p40 = scmp.eq.s32.totalorder %s12, 1
    %p41 = por %p39, %p40
    %p42 = scmp.ne.s32.totalorder %s34, %s37
    %p43 = scmp.eq.s32.totalorder %s12, 0
    %p44 = por %p42, %p43
    %p45 = scmp.ne.s32.totalorder %s34, %s37
    %p46 = scmp.eq.s32.totalorder %s17, 1
    %p47 = por %p45, %p46
    %p48 = scmp.ne.s32.totalorder %s37, %s38
    %p49 = scmp.eq.s32.totalorder %s17, 0
    %p50 = por %p48, %p49
    %p51 = scmp.ne.s32.totalorder %s37, %s38
    %p52 = scmp.eq.s32.totalorder %s18, 1
    %p53 = por %p51, %p52
    %p55 = scmp.ne.s32.totalorder %s38, %s54
    %p56 = scmp.eq.s32.totalorder %s18, 0
    %p57 = por %p55, %p56
    %s58 = ssub.s32 %s20, %s27
    %p59 = scmp.eq.s32.totalorder %s58, 0
    %s61 = sadd.s32 %s60, 1
    %s62 = scalar_select %p59, %s60, %s61
    %p65 = pneg %p59
    %p66 = scmp.eq.s32.totalorder %s12, 1
    %p67 = por %p65, %p66
    %p68 = scmp.ne.s32.totalorder %s60, %s63
    %p69 = scmp.eq.s32.totalorder %s12, 0
    %p70 = por %p68, %p69
    %p71 = scmp.ne.s32.totalorder %s60, %s63
    %p72 = scmp.eq.s32.totalorder %s17, 1
    %p73 = por %p71, %p72
    %p74 = scmp.ne.s32.totalorder %s63, %s64
    %p75 = scmp.eq.s32.totalorder %s17, 0
    %p76 = por %p74, %p75
    %p77 = scmp.ne.s32.totalorder %s63, %s64
    %p78 = scmp.eq.s32.totalorder %s18, 1
    %p79 = por %p77, %p78
    %p81 = scmp.ne.s32.totalorder %s64, %s80
    %p82 = scmp.eq.s32.totalorder %s18, 0
    %p83 = por %p81, %p82
    %s85 = sadd.s32 %s84, 1
    %p88 = scmp.eq.s32.totalorder %s12, 1
    %p89 = scmp.ne.s32.totalorder %s84, %s86
    %p90 = scmp.eq.s32.totalorder %s12, 0
    %p91 = por %p89, %p90
    %p92 = scmp.ne.s32.totalorder %s84, %s86
    %p93 = scmp.eq.s32.totalorder %s17, 1
    %p94 = por %p92, %p93
    %p95 = scmp.ne.s32.totalorder %s86, %s87
    %p96 = scmp.eq.s32.totalorder %s17, 0
    %p97 = por %p95, %p96
    %p98 = scmp.ne.s32.totalorder %s86, %s87
    %p99 = scmp.eq.s32.totalorder %s18, 1
    %p100 = por %p98, %p99
    %p102 = scmp.ne.s32.totalorder %s87, %s101
    %p103 = scmp.eq.s32.totalorder %s18, 0
    %p104 = por %p102, %p103
    %s106 = sadd.s32 %s105, 1
    %p109 = scmp.eq.s32.totalorder %s12, 1
    %p110 = scmp.ne.s32.totalorder %s105, %s107
    %p111 = scmp.eq.s32.totalorder %s12, 0
    %p112 = por %p110, %p111
    %p113 = scmp.ne.s32.totalorder %s105, %s107
    %p114 = scmp.eq.s32.totalorder %s17, 1
    %p115 = por %p113, %p114
    %p116 = scmp.ne.s32.totalorder %s107, %s108
    %p117 = scmp.eq.s32.totalorder %s17, 0
    %p118 = por %p116, %p117
    %p119 = scmp.ne.s32.totalorder %s107, %s108
    %p120 = scmp.eq.s32.totalorder %s18, 1
    %p121 = por %p119, %p120
    %p123 = scmp.ne.s32.totalorder %s108, %s122
    %p124 = scmp.eq.s32.totalorder %s18, 0
    %p125 = por %p123, %p124
    %s126 = ssub.s32 %s20, %s27
    %p127 = scmp.eq.s32.totalorder %s126, 0
    %s129 = sadd.s32 %s128, 1
    %s130 = scalar_select %p127, %s128, %s129
    %p133 = pneg %p127
    %p134 = scmp.eq.s32.totalorder %s12, 1
    %p135 = por %p133, %p134
    %p136 = scmp.ne.s32.totalorder %s128, %s131
    %p137 = scmp.eq.s32.totalorder %s12, 0
    %p138 = por %p136, %p137
    %p139 = scmp.ne.s32.totalorder %s128, %s131
    %p140 = scmp.eq.s32.totalorder %s17, 1
    %p141 = por %p139, %p140
    %p142 = scmp.ne.s32.totalorder %s131, %s132
    %p143 = scmp.eq.s32.totalorder %s17, 0
    %p144 = por %p142, %p143
    %p145 = scmp.ne.s32.totalorder %s131, %s132
    %p146 = scmp.eq.s32.totalorder %s18, 1
    %p147 = por %p145, %p146
    %p149 = scmp.ne.s32.totalorder %s132, %s148
    %p150 = scmp.eq.s32.totalorder %s18, 0
    %p151 = por %p149, %p150
    %s152 = ssub.s32 %s20, %s27
    %p153 = scmp.eq.s32.totalorder %s152, 0
    %s155 = sadd.s32 %s154, 1
    %s156 = scalar_select %p153, %s154, %s155
    %p159 = pneg %p153
    %p160 = scmp.eq.s32.totalorder %s12, 1
    %p161 = por %p159, %p160
    %p162 = scmp.ne.s32.totalorder %s154, %s157
    %p163 = scmp.eq.s32.totalorder %s12, 0
    %p164 = por %p162, %p163
    %p165 = scmp.ne.s32.totalorder %s154, %s157
    %p166 = scmp.eq.s32.totalorder %s17, 1
    %p167 = por %p165, %p166
    %p168 = scmp.ne.s32.totalorder %s157, %s158
    %p169 = scmp.eq.s32.totalorder %s17, 0
    %p170 = por %p168, %p169
    %p171 = scmp.ne.s32.totalorder %s157, %s158
    %p172 = scmp.eq.s32.totalorder %s18, 1
    %p173 = por %p171, %p172
    %p175 = scmp.ne.s32.totalorder %s158, %s174
    %p176 = scmp.eq.s32.totalorder %s18, 0
    %p177 = por %p175, %p176
    %s178 = ssub.s32 %s19, %s31
    %s179 = ssub.s32 %s20, %s27
    %s180 = sor.u32 %s178, %s179
    %p181 = scmp.eq.s32.totalorder %s180, 0
    %s183 = sadd.s32 %s182, 1
    %s184 = scalar_select %p181, %s182, %s183
    %p187 = pneg %p181
    %p188 = scmp.eq.s32.totalorder %s12, 1
    %p189 = por %p187, %p188
    %p190 = scmp.ne.s32.totalorder %s182, %s185
    %p191 = scmp.eq.s32.totalorder %s12, 0
    %p192 = por %p190, %p191
    %p193 = scmp.ne.s32.totalorder %s182, %s185
    %p194 = scmp.eq.s32.totalorder %s17, 1
    %p195 = por %p193, %p194
    %p196 = scmp.ne.s32.totalorder %s185, %s186
    %p197 = scmp.eq.s32.totalorder %s17, 0
    %p198 = por %p196, %p197
    %p199 = scmp.ne.s32.totalorder %s185, %s186
    %p200 = scmp.eq.s32.totalorder %s18, 1
    %p201 = por %p199, %p200
    %p203 = scmp.ne.s32.totalorder %s186, %s202
    %p204 = scmp.eq.s32.totalorder %s18, 0
    %p205 = por %p203, %p204
    %p206 = scmp.le.s32.totalorder 1, %s12
    %p207 = scmp.lt.s32.totalorder %s12, 3
    %p208 = pnand %p206, %p207
    %p209 = pneg %p208
    // Predicated region
    $region9: #{tpu_custom_call.1} parent=5 // pred_check
      _
    $region10: #{tpu_custom_call.1} parent=5 // pred_check_branch
      %211 = sbr.rel (%p208) target = $region12
    $region11: #{tpu_custom_call.1} parent=5 // pred_region
      %s212 = ssub.s32 %s12, 1
      // Predicated region
      $region13: #{tpu_custom_call.1} parent=11 // pred_check
        %p213 = pneg %p76
      $region14: #{tpu_custom_call.1} parent=11 // pred_check_branch
        %215 = sbr.rel (%p213) target = $region16
      $region15: #{tpu_custom_call.1} parent=11 // pred_region
        %p216 = scmp.lt.s32.totalorder %s22, 0
        %s217 = scalar_select %p216, %s22, 0
        %s218 = smul.addr %s217, 4
        %s219 = scalar_lea.vmem %s1, %s218
      $region16: #{tpu_custom_call.1} parent=11 // pred_fallthru
        _
      // Predicated region
      $region17: #{tpu_custom_call.1} parent=11 // pred_check
        %p220 = pneg %p97
      $region18: #{tpu_custom_call.1} parent=11 // pred_check_branch
        %222 = sbr.rel (%p220) target = $region20
      $region19: #{tpu_custom_call.1} parent=11 // pred_region
        _
      $region20: #{tpu_custom_call.1} parent=11 // pred_fallthru
        _
      // Predicated region
      $region21: #{tpu_custom_call.1} parent=11 // pred_check
        %p223 = pneg %p118
      $region22: #{tpu_custom_call.1} parent=11 // pred_check_branch
        %225 = sbr.rel (%p223) target = $region24
      $region23: #{tpu_custom_call.1} parent=11 // pred_region
        _
      $region24: #{tpu_custom_call.1} parent=11 // pred_fallthru
        _
      // Predicated region
      $region25: #{tpu_custom_call.1} parent=11 // pred_check
        %p226 = pneg %p144
      $region26: #{tpu_custom_call.1} parent=11 // pred_check_branch
        %228 = sbr.rel (%p226) target = $region28
      $region27: #{tpu_custom_call.1} parent=11 // pred_region
        %p229 = scmp.lt.s32.totalorder %s22, 0
        %s230 = scalar_select %p229, %s22, 0
        %s231 = scalar_lea.vmem %s4, %s230
      $region28: #{tpu_custom_call.1} parent=11 // pred_fallthru
        _
      // Predicated region
      $region29: #{tpu_custom_call.1} parent=11 // pred_check
        %p232 = pneg %p170
      $region30: #{tpu_custom_call.1} parent=11 // pred_check_branch
        %234 = sbr.rel (%p232) target = $region32
      $region31: #{tpu_custom_call.1} parent=11 // pred_region
        %p235 = scmp.lt.s32.totalorder %s22, 0
        %s236 = scalar_select %p235, %s22, 0
        %s237 = scalar_lea.vmem %s5, %s236
      $region32: #{tpu_custom_call.1} parent=11 // pred_fallthru
        _
    $region12: #{tpu_custom_call.1} parent=5 // pred_fallthru
      _
    %p238 = scmp.lt.s32.totalorder %s12, 2
    // Predicated region
    $region33: #{tpu_custom_call.1} parent=5 // pred_check
      %p239 = pneg %p238
    $region34: #{tpu_custom_call.1} parent=5 // pred_check_branch
      %241 = sbr.rel (%p239) target = $region36
    $region35: #{tpu_custom_call.1} parent=5 // pred_region
      // Predicated region
      $region37: #{tpu_custom_call.1} parent=35 // pred_check
        %p242 = pneg %p44
      $region38: #{tpu_custom_call.1} parent=35 // pred_check_branch
        %244 = sbr.rel (%p242) target = $region40
      $region39: #{tpu_custom_call.1} parent=35 // pred_region
        %p245 = scmp.lt.s32.totalorder %s19, 1
        %s246 = scalar_select %p245, %s19, 1
        %s247 = smul.addr %s246, 32
        %s248 = smul.addr %s247, 8
        %s249 = scalar_lea.vmem %s0, %s248
      $region40: #{tpu_custom_call.1} parent=35 // pred_fallthru
        _
    $region36: #{tpu_custom_call.1} parent=5 // pred_fallthru
      _
    %p250 = scmp.le.s32.totalorder 1, %s12
    %p251 = scmp.lt.s32.totalorder %s12, 3
    %p252 = pnand %p250, %p251
    %p253 = pneg %p252
    // Predicated region
    $region41: #{tpu_custom_call.1} parent=5 // pred_check
      _
    $region42: #{tpu_custom_call.1} parent=5 // pred_check_branch
      %255 = sbr.rel (%p252) target = $region44
    $region43: #{tpu_custom_call.1} parent=5 // pred_region
      %s256 = ssub.s32 %s12, 1
      %p257 = scmp.lt.s32.totalorder %s21, 1
      %s258 = scalar_select %p257, %s21, 1
      %s259 = smul.addr %s258, 32
      %s260 = smul.addr %s259, 8
      %s261 = scalar_lea.vmem %s0, %s260
      %p262 = pneg %p50
      %p263 = pneg %p47
      %p264 = scmp.lt.s32.totalorder %s22, 0
      %s265 = scalar_select %p264, %s22, 0
      %s266 = smul.addr %s265, 4
      %s267 = scalar_lea.vmem %s1, %s266
      %p268 = pneg %p76
      %p269 = pneg %p73
      %p270 = pneg %p97
      %p271 = pneg %p94
      %p272 = pneg %p118
      %p273 = pneg %p115
      %p274 = scmp.lt.s32.totalorder %s22, 0
      %s275 = scalar_select %p274, %s22, 0
      %s276 = scalar_lea.vmem %s4, %s275
      %p277 = pneg %p144
      %p278 = pneg %p141
      %p279 = scmp.lt.s32.totalorder %s22, 0
      %s280 = scalar_select %p279, %s22, 0
      %s281 = scalar_lea.vmem %s5, %s280
      %p282 = pneg %p170
      %p283 = pneg %p167
      %p284 = pneg %p198
      %p285 = pneg %p195
      %p286 = scmp.lt.s32.totalorder %s21, 1
      %s287 = scalar_select %p286, %s21, 1
      %p288 = scmp.lt.s32.totalorder %s22, 0
      %s289 = scalar_select %p288, %s22, 0
      %s290 = smul.addr %s287, 32
      %s291 = sadd.s32 %s289, %s290
      %s292 = smul.addr %s291, 8
      %s293 = scalar_lea.vmem %s6, %s292
      %p294 = scmp.lt.s32.totalorder %s21, 1
      %s295 = scalar_select %p294, %s21, 1
      %s296 = smul.addr %s295, 32
      %s297 = smul.addr %s296, 8
      %s298 = scalar_lea.vmem %s0, %s297
      %p299 = scmp.lt.s32.totalorder %s22, 0
      %s300 = scalar_select %p299, %s22, 0
      %s301 = smul.addr %s300, 4
      %s302 = scalar_lea.vmem %s1, %s301
      %p303 = scmp.lt.s32.totalorder %s22, 0
      %s304 = scalar_select %p303, %s22, 0
      %s305 = scalar_lea.vmem %s4, %s304
      %p306 = scmp.lt.s32.totalorder %s22, 0
      %s307 = scalar_select %p306, %s22, 0
      %s308 = scalar_lea.vmem %s5, %s307
      %p309 = scmp.lt.s32.totalorder %s21, 1
      %s310 = scalar_select %p309, %s21, 1
      %p311 = scmp.lt.s32.totalorder %s22, 0
      %s312 = scalar_select %p311, %s22, 0
      %s313 = smul.addr %s310, 32
      %s314 = sadd.s32 %s312, %s313
      %s315 = smul.addr %s314, 8
      %s316 = scalar_lea.vmem %s6, %s315
      %vm317 = vcmask 31744
      %318 = vst.msk [vmem:[#allocation2] sm:$0xff] %vm317, 0.0
      %319 = vst.msk [vmem:[#allocation2 + $0x8] sm:$0xff] %vm317, 0.0
      %vm320 = vcmask 25600
      %321 = vst.msk [vmem:[#allocation2 + $0x10] sm:$0x3] %vm320, 0.0
      %322 = vst.msk [vmem:[#allocation2 + $0x18] sm:$0xff] %vm317, 0.0
      %323 = vst.msk [vmem:[#allocation2 + $0x20] sm:$0xff] %vm317, 0.0
      %324 = vst.msk [vmem:[#allocation2 + $0x28] sm:$0x3] %vm320, 0.0
      %325 = vst.msk [vmem:[#allocation2 + $0x30] sm:$0xff] %vm317, 0.0
      %326 = vst.msk [vmem:[#allocation2 + $0x38] sm:$0xff] %vm317, 0.0
      %327 = vst.msk [vmem:[#allocation2 + $0x40] sm:$0x3] %vm320, 0.0
      %328 = vst.msk [vmem:[#allocation2 + $0x48] sm:$0xff] %vm317, 0.0
      %329 = vst.msk [vmem:[#allocation2 + $0x50] sm:$0xff] %vm317, 0.0
      %330 = vst.msk [vmem:[#allocation2 + $0x58] sm:$0x3] %vm320, 0.0
      %331 = vst.msk [vmem:[#allocation2 + $0x60] sm:$0xff] %vm317, 0.0
      %332 = vst.msk [vmem:[#allocation2 + $0x68] sm:$0xff] %vm317, 0.0
      %333 = vst.msk [vmem:[#allocation2 + $0x70] sm:$0x3] %vm320, 0.0
      %334 = vst.msk [vmem:[#allocation2 + $0x78] sm:$0xff] %vm317, 0.0
      %335 = vst.msk [vmem:[#allocation2 + $0x80] sm:$0xff] %vm317, 0.0
      %336 = vst.msk [vmem:[#allocation2 + $0x88] sm:$0x3] %vm320, 0.0
      %337 = vst.msk [vmem:[#allocation2 + $0x90] sm:$0xff] %vm317, 0.0
      %338 = vst.msk [vmem:[#allocation2 + $0x98] sm:$0xff] %vm317, 0.0
      %339 = vst.msk [vmem:[#allocation2 + $0xa0] sm:$0x3] %vm320, 0.0
      %340 = vst.msk [vmem:[#allocation2 + $0xa8] sm:$0xff] %vm317, 0.0
      %341 = vst.msk [vmem:[#allocation2 + $0xb0] sm:$0xff] %vm317, 0.0
      %342 = vst.msk [vmem:[#allocation2 + $0xb8] sm:$0x3] %vm320, 0.0
      %343 = vst.msk [vmem:[#allocation2 + $0xc0] sm:$0xff] %vm317, 0.0
      %344 = vst.msk [vmem:[#allocation2 + $0xc8] sm:$0xff] %vm317, 0.0
      %345 = vst.msk [vmem:[#allocation2 + $0xd0] sm:$0x3] %vm320, 0.0
      %346 = vst.msk [vmem:[#allocation2 + $0xd8] sm:$0xff] %vm317, 0.0
      %347 = vst.msk [vmem:[#allocation2 + $0xe0] sm:$0xff] %vm317, 0.0
      %348 = vst.msk [vmem:[#allocation2 + $0xe8] sm:$0x3] %vm320, 0.0
      %349 = vst.msk [vmem:[#allocation2 + $0xf0] sm:$0xff] %vm317, 0.0
      %350 = vst.msk [vmem:[#allocation2 + $0xf8] sm:$0xff] %vm317, 0.0
      %351 = vst.msk [vmem:[#allocation2 + $0x100] sm:$0x3] %vm320, 0.0
      %352 = vst.msk [vmem:[#allocation2 + $0x108] sm:$0xff] %vm317, 0.0
      %353 = vst.msk [vmem:[#allocation2 + $0x110] sm:$0xff] %vm317, 0.0
      %354 = vst.msk [vmem:[#allocation2 + $0x118] sm:$0x3] %vm320, 0.0
      %355 = vst.msk [vmem:[#allocation2 + $0x120] sm:$0xff] %vm317, 0.0
      %356 = vst.msk [vmem:[#allocation2 + $0x128] sm:$0xff] %vm317, 0.0
      %357 = vst.msk [vmem:[#allocation2 + $0x130] sm:$0x3] %vm320, 0.0
      %358 = vst.msk [vmem:[#allocation2 + $0x138] sm:$0xff] %vm317, 0.0
      %359 = vst.msk [vmem:[#allocation2 + $0x140] sm:$0xff] %vm317, 0.0
      %360 = vst.msk [vmem:[#allocation2 + $0x148] sm:$0x3] %vm320, 0.0
      %361 = vst.msk [vmem:[#allocation2 + $0x150] sm:$0xff] %vm317, 0.0
      %362 = vst.msk [vmem:[#allocation2 + $0x158] sm:$0xff] %vm317, 0.0
      %363 = vst.msk [vmem:[#allocation2 + $0x160] sm:$0x3] %vm320, 0.0
      %364 = vst.msk [vmem:[#allocation2 + $0x168] sm:$0xff] %vm317, 0.0
      %365 = vst.msk [vmem:[#allocation2 + $0x170] sm:$0xff] %vm317, 0.0
      %366 = vst.msk [vmem:[#allocation2 + $0x178] sm:$0x3] %vm320, 0.0
      %367 = vst.msk [vmem:[#allocation2 + $0x180] sm:$0xff] %vm317, 0.0
      %368 = vst.msk [vmem:[#allocation2 + $0x188] sm:$0xff] %vm317, 0.0
      %369 = vst.msk [vmem:[#allocation2 + $0x190] sm:$0x3] %vm320, 0.0
      %370 = vst.msk [vmem:[#allocation2 + $0x198] sm:$0xff] %vm317, 0.0
      %371 = vst.msk [vmem:[#allocation2 + $0x1a0] sm:$0xff] %vm317, 0.0
      %372 = vst.msk [vmem:[#allocation2 + $0x1a8] sm:$0x3] %vm320, 0.0
      %v373 = vld [vmem:[%s298] sm:$0xff]
      %v374 = vld [vmem:[%s298 + $0x8] sm:$0xff]
      %v375 = vld [vmem:[%s298 + $0x10] sm:$0xff]
      %v376 = vld [vmem:[%s298 + $0x18] sm:$0xff]
      %v377 = vld [vmem:[%s298 + $0x20] sm:$0xff]
      %v378 = vld [vmem:[%s298 + $0x28] sm:$0xff]
      %v379 = vld [vmem:[%s298 + $0x30] sm:$0xff]
      %v380 = vld [vmem:[%s298 + $0x38] sm:$0xff]
      %v381 = vld [vmem:[%s298 + $0x40] sm:$0xff]
      %v382 = vld [vmem:[%s298 + $0x48] sm:$0xff]
      %v383 = vld [vmem:[%s298 + $0x50] sm:$0xff]
      %v384 = vld [vmem:[%s298 + $0x58] sm:$0xff]
      %v385 = vld [vmem:[%s298 + $0x60] sm:$0xff]
      %v386 = vld [vmem:[%s298 + $0x68] sm:$0xff]
      %v387 = vld [vmem:[%s298 + $0x70] sm:$0xff]
      %v388 = vld [vmem:[%s298 + $0x78] sm:$0xff]
      %v389 = vld [vmem:[%s298 + $0x80] sm:$0xff]
      %v390 = vld [vmem:[%s298 + $0x88] sm:$0xff]
      %v391 = vld [vmem:[%s298 + $0x90] sm:$0xff]
      %v392 = vld [vmem:[%s298 + $0x98] sm:$0xff]
      %v393 = vld [vmem:[%s298 + $0xa0] sm:$0xff]
      %v394 = vld [vmem:[%s298 + $0xa8] sm:$0xff]
      %v395 = vld [vmem:[%s298 + $0xb0] sm:$0xff]
      %v396 = vld [vmem:[%s298 + $0xb8] sm:$0xff]
      %v397 = vld [vmem:[%s298 + $0xc0] sm:$0xff]
      %v398 = vld [vmem:[%s298 + $0xc8] sm:$0xff]
      %v399 = vld [vmem:[%s298 + $0xd0] sm:$0xff]
      %v400 = vld [vmem:[%s298 + $0xd8] sm:$0xff]
      %v401 = vld [vmem:[%s298 + $0xe0] sm:$0xff]
      %v402 = vld [vmem:[%s298 + $0xe8] sm:$0xff]
      %v403 = vld [vmem:[%s298 + $0xf0] sm:$0xff]
      %v404 = vld [vmem:[%s298 + $0xf8] sm:$0xff]
      %v405 = vld [vmem:[%s2] sm:$0x1]
      %v407 = vlaneseq
      %v408 = vshrl.u32 %v407, 7
      %v409 = vsub.s32 0, %v408
      %v410 = vrot.slane %v405, %v409
      %v412 = vmul.f32 %v373, %v410
      %v413 = vmul.f32 %v374, %v410
      %v414 = vmul.f32 %v375, %v410
      %v415 = vmul.f32 %v376, %v410
      %v416 = vmul.f32 %v377, %v410
      %v417 = vmul.f32 %v378, %v410
      %v418 = vmul.f32 %v379, %v410
      %v419 = vmul.f32 %v380, %v410
      %v420 = vmul.f32 %v381, %v410
      %v421 = vmul.f32 %v382, %v410
      %v422 = vmul.f32 %v383, %v410
      %v423 = vmul.f32 %v384, %v410
      %v424 = vmul.f32 %v385, %v410
      %v425 = vmul.f32 %v386, %v410
      %v426 = vmul.f32 %v387, %v410
      %v427 = vmul.f32 %v388, %v410
      %v428 = vmul.f32 %v389, %v410
      %v429 = vmul.f32 %v390, %v410
      %v430 = vmul.f32 %v391, %v410
      %v431 = vmul.f32 %v392, %v410
      %v432 = vmul.f32 %v393, %v410
      %v433 = vmul.f32 %v394, %v410
      %v434 = vmul.f32 %v395, %v410
      %v435 = vmul.f32 %v396, %v410
      %v436 = vmul.f32 %v397, %v410
      %v437 = vmul.f32 %v398, %v410
      %v438 = vmul.f32 %v399, %v410
      %v439 = vmul.f32 %v400, %v410
      %v440 = vmul.f32 %v401, %v410
      %v441 = vmul.f32 %v402, %v410
      %v442 = vmul.f32 %v403, %v410
      %v443 = vmul.f32 %v404, %v410
      %v444 = vld [vmem:[%s3] sm:$0x1]
      %v446 = vlaneseq
      %v447 = vshrl.u32 %v446, 7
      %v448 = vsub.s32 0, %v447
      %v449 = vrot.slane %v444, %v448
      %v451 = vadd.f32 %v412, %v449
      %v452 = vadd.f32 %v413, %v449
      %v453 = vadd.f32 %v414, %v449
      %v454 = vadd.f32 %v415, %v449
      %v455 = vadd.f32 %v416, %v449
      %v456 = vadd.f32 %v417, %v449
      %v457 = vadd.f32 %v418, %v449
      %v458 = vadd.f32 %v419, %v449
      %v459 = vadd.f32 %v420, %v449
      %v460 = vadd.f32 %v421, %v449
      %v461 = vadd.f32 %v422, %v449
      %v462 = vadd.f32 %v423, %v449
      %v463 = vadd.f32 %v424, %v449
      %v464 = vadd.f32 %v425, %v449
      %v465 = vadd.f32 %v426, %v449
      %v466 = vadd.f32 %v427, %v449
      %v467 = vadd.f32 %v428, %v449
      %v468 = vadd.f32 %v429, %v449
      %v469 = vadd.f32 %v430, %v449
      %v470 = vadd.f32 %v431, %v449
      %v471 = vadd.f32 %v432, %v449
      %v472 = vadd.f32 %v433, %v449
      %v473 = vadd.f32 %v434, %v449
      %v474 = vadd.f32 %v435, %v449
      %v475 = vadd.f32 %v436, %v449
      %v476 = vadd.f32 %v437, %v449
      %v477 = vadd.f32 %v438, %v449
      %v478 = vadd.f32 %v439, %v449
      %v479 = vadd.f32 %v440, %v449
      %v480 = vadd.f32 %v441, %v449
      %v481 = vadd.f32 %v442, %v449
      %v482 = vadd.f32 %v443, %v449
      %s483 = scalar_lea.vmem [#allocation2], 24
      %484 = vst.msk [vmem:[%s483 + $0x1] sm:$0xff] %vm317, %v451
      %485 = vst.msk [vmem:[%s483 + $0x9] sm:$0xff] %vm317, %v452
      %486 = vst.msk [vmem:[%s483 + $0x19] sm:$0xff] %vm317, %v453
      %487 = vst.msk [vmem:[%s483 + $0x21] sm:$0xff] %vm317, %v454
      %488 = vst.msk [vmem:[%s483 + $0x31] sm:$0xff] %vm317, %v455
      %489 = vst.msk [vmem:[%s483 + $0x39] sm:$0xff] %vm317, %v456
      %490 = vst.msk [vmem:[%s483 + $0x49] sm:$0xff] %vm317, %v457
      %491 = vst.msk [vmem:[%s483 + $0x51] sm:$0xff] %vm317, %v458
      %492 = vst.msk [vmem:[%s483 + $0x61] sm:$0xff] %vm317, %v459
      %493 = vst.msk [vmem:[%s483 + $0x69] sm:$0xff] %vm317, %v460
      %494 = vst.msk [vmem:[%s483 + $0x79] sm:$0xff] %vm317, %v461
      %495 = vst.msk [vmem:[%s483 + $0x81] sm:$0xff] %vm317, %v462
      %496 = vst.msk [vmem:[%s483 + $0x91] sm:$0xff] %vm317, %v463
      %497 = vst.msk [vmem:[%s483 + $0x99] sm:$0xff] %vm317, %v464
      %498 = vst.msk [vmem:[%s483 + $0xa9] sm:$0xff] %vm317, %v465
      %499 = vst.msk [vmem:[%s483 + $0xb1] sm:$0xff] %vm317, %v466
      %500 = vst.msk [vmem:[%s483 + $0xc1] sm:$0xff] %vm317, %v467
      %501 = vst.msk [vmem:[%s483 + $0xc9] sm:$0xff] %vm317, %v468
      %502 = vst.msk [vmem:[%s483 + $0xd9] sm:$0xff] %vm317, %v469
      %503 = vst.msk [vmem:[%s483 + $0xe1] sm:$0xff] %vm317, %v470
      %504 = vst.msk [vmem:[%s483 + $0xf1] sm:$0xff] %vm317, %v471
      %505 = vst.msk [vmem:[%s483 + $0xf9] sm:$0xff] %vm317, %v472
      %506 = vst.msk [vmem:[%s483 + $0x109] sm:$0xff] %vm317, %v473
      %507 = vst.msk [vmem:[%s483 + $0x111] sm:$0xff] %vm317, %v474
      %508 = vst.msk [vmem:[%s483 + $0x121] sm:$0xff] %vm317, %v475
      %509 = vst.msk [vmem:[%s483 + $0x129] sm:$0xff] %vm317, %v476
      %510 = vst.msk [vmem:[%s483 + $0x139] sm:$0xff] %vm317, %v477
      %511 = vst.msk [vmem:[%s483 + $0x141] sm:$0xff] %vm317, %v478
      %512 = vst.msk [vmem:[%s483 + $0x151] sm:$0xff] %vm317, %v479
      %513 = vst.msk [vmem:[%s483 + $0x159] sm:$0xff] %vm317, %v480
      %514 = vst.msk [vmem:[%s483 + $0x169] sm:$0xff] %vm317, %v481
      %515 = vst.msk [vmem:[%s483 + $0x171] sm:$0xff] %vm317, %v482
      %v516 = vld [vmem:[#allocation2] sm:$0xff]
      %v517 = vld [vmem:[#allocation2 + $0x8] sm:$0xff]
      %v518 = vld [vmem:[#allocation2 + $0x18] sm:$0xff]
      %v519 = vld [vmem:[#allocation2 + $0x20] sm:$0xff]
      %v520 = vld [vmem:[#allocation2 + $0x30] sm:$0xff]
      %v521 = vld [vmem:[#allocation2 + $0x38] sm:$0xff]
      %v522 = vld [vmem:[#allocation2 + $0x48] sm:$0xff]
      %v523 = vld [vmem:[#allocation2 + $0x50] sm:$0xff]
      %v524 = vld [vmem:[#allocation2 + $0x60] sm:$0xff]
      %v525 = vld [vmem:[#allocation2 + $0x68] sm:$0xff]
      %v526 = vld [vmem:[#allocation2 + $0x78] sm:$0xff]
      %v527 = vld [vmem:[#allocation2 + $0x80] sm:$0xff]
      %v528 = vld [vmem:[#allocation2 + $0x90] sm:$0xff]
      %v529 = vld [vmem:[#allocation2 + $0x98] sm:$0xff]
      %v530 = vld [vmem:[#allocation2 + $0xa8] sm:$0xff]
      %v531 = vld [vmem:[#allocation2 + $0xb0] sm:$0xff]
      %v532 = vld [vmem:[#allocation2 + $0xc0] sm:$0xff]
      %v533 = vld [vmem:[#allocation2 + $0xc8] sm:$0xff]
      %v534 = vld [vmem:[#allocation2 + $0xd8] sm:$0xff]
      %v535 = vld [vmem:[#allocation2 + $0xe0] sm:$0xff]
      %v536 = vld [vmem:[#allocation2 + $0xf0] sm:$0xff]
      %v537 = vld [vmem:[#allocation2 + $0xf8] sm:$0xff]
      %v538 = vld [vmem:[#allocation2 + $0x108] sm:$0xff]
      %v539 = vld [vmem:[#allocation2 + $0x110] sm:$0xff]
      %v540 = vld [vmem:[#allocation2 + $0x120] sm:$0xff]
      %v541 = vld [vmem:[#allocation2 + $0x128] sm:$0xff]
      %v542 = vld [vmem:[#allocation2 + $0x138] sm:$0xff]
      %v543 = vld [vmem:[#allocation2 + $0x140] sm:$0xff]
      %v544 = vld [vmem:[#allocation2 + $0x150] sm:$0xff]
      %v545 = vld [vmem:[#allocation2 + $0x158] sm:$0xff]
      %v546 = vld [vmem:[#allocation2 + $0x168] sm:$0xff]
      %v547 = vld [vmem:[#allocation2 + $0x170] sm:$0xff]
      %v548 = vld [vmem:[%s302] sm:$0xf]
      %v549 = vld [vmem:[#allocation2 + $0x1] sm:$0xff]
      %v550 = vld [vmem:[#allocation2 + $0x9] sm:$0xff]
      %v551 = vld [vmem:[#allocation2 + $0x19] sm:$0xff]
      %v552 = vld [vmem:[#allocation2 + $0x21] sm:$0xff]
      %v553 = vld [vmem:[#allocation2 + $0x31] sm:$0xff]
      %v554 = vld [vmem:[#allocation2 + $0x39] sm:$0xff]
      %v555 = vld [vmem:[#allocation2 + $0x49] sm:$0xff]
      %v556 = vld [vmem:[#allocation2 + $0x51] sm:$0xff]
      %v557 = vld [vmem:[#allocation2 + $0x61] sm:$0xff]
      %v558 = vld [vmem:[#allocation2 + $0x69] sm:$0xff]
      %v559 = vld [vmem:[#allocation2 + $0x79] sm:$0xff]
      %v560 = vld [vmem:[#allocation2 + $0x81] sm:$0xff]
      %v561 = vld [vmem:[#allocation2 + $0x91] sm:$0xff]
      %v562 = vld [vmem:[#allocation2 + $0x99] sm:$0xff]
      %v563 = vld [vmem:[#allocation2 + $0xa9] sm:$0xff]
      %v564 = vld [vmem:[#allocation2 + $0xb1] sm:$0xff]
      %v565 = vld [vmem:[#allocation2 + $0xc1] sm:$0xff]
      %v566 = vld [vmem:[#allocation2 + $0xc9] sm:$0xff]
      %v567 = vld [vmem:[#allocation2 + $0xd9] sm:$0xff]
      %v568 = vld [vmem:[#allocation2 + $0xe1] sm:$0xff]
      %v569 = vld [vmem:[#allocation2 + $0xf1] sm:$0xff]
      %v570 = vld [vmem:[#allocation2 + $0xf9] sm:$0xff]
      %v571 = vld [vmem:[#allocation2 + $0x109] sm:$0xff]
      %v572 = vld [vmem:[#allocation2 + $0x111] sm:$0xff]
      %v573 = vld [vmem:[#allocation2 + $0x121] sm:$0xff]
      %v574 = vld [vmem:[#allocation2 + $0x129] sm:$0xff]
      %v575 = vld [vmem:[#allocation2 + $0x139] sm:$0xff]
      %v576 = vld [vmem:[#allocation2 + $0x141] sm:$0xff]
      %v577 = vld [vmem:[#allocation2 + $0x151] sm:$0xff]
      %v578 = vld [vmem:[#allocation2 + $0x159] sm:$0xff]
      %v579 = vld [vmem:[#allocation2 + $0x169] sm:$0xff]
      %v580 = vld [vmem:[#allocation2 + $0x171] sm:$0xff]
      %s581 = scalar_lea.vmem %s302, 4
      %v582 = vld [vmem:[%s581] sm:$0xf]
      %v584 = vsel %vm317, %v549, 0
      %v587 = vsel %vm317, %v550, 0
      %v590 = vsel %vm317, %v551, 0
      %v593 = vsel %vm317, %v552, 0
      %v596 = vsel %vm317, %v553, 0
      %v599 = vsel %vm317, %v554, 0
      %v602 = vsel %vm317, %v555, 0
      %v605 = vsel %vm317, %v556, 0
      %v608 = vsel %vm317, %v557, 0
      %v611 = vsel %vm317, %v558, 0
      %v614 = vsel %vm317, %v559, 0
      %v617 = vsel %vm317, %v560, 0
      %v620 = vsel %vm317, %v561, 0
      %v623 = vsel %vm317, %v562, 0
      %v626 = vsel %vm317, %v563, 0
      %v629 = vsel %vm317, %v564, 0
      %v632 = vsel %vm317, %v565, 0
      %v635 = vsel %vm317, %v566, 0
      %v638 = vsel %vm317, %v567, 0
      %v641 = vsel %vm317, %v568, 0
      %v644 = vsel %vm317, %v569, 0
      %v647 = vsel %vm317, %v570, 0
      %v650 = vsel %vm317, %v571, 0
      %v653 = vsel %vm317, %v572, 0
      %v656 = vsel %vm317, %v573, 0
      %v659 = vsel %vm317, %v574, 0
      %v662 = vsel %vm317, %v575, 0
      %v665 = vsel %vm317, %v576, 0
      %v668 = vsel %vm317, %v577, 0
      %v671 = vsel %vm317, %v578, 0
      %v674 = vsel %vm317, %v579, 0
      %v677 = vsel %vm317, %v580, 0
      %vm679 = vcmask 1043456
      %v681 = vsel %vm679, %v582, 0
      %683 = vmatprep.subr.mxu0 0.0
      %684 = vmatpush1.msra.mxu0 %v681
      %685 = vmatprep.subr.mxu0 0.0
      %686 = vmatpush1.msra.mxu0 0.0
      %687 = vmatprep.subr.mxu0 0.0
      %688 = vmatpush1.msra.mxu0 0.0
      %689 = vmatprep.subr.mxu0 0.0
      %690 = vmatpush1.msra.mxu0 0.0
      %691 = vmatprep.subr.mxu0 0.0
      %692 = vmatpush1.msra.mxu0 0.0
      %693 = vmatprep.subr.mxu0 0.0
      %694 = vmatpush1.msra.mxu0 0.0
      %695 = vmatprep.subr.mxu0 0.0
      %696 = vmatpush1.msra.mxu0 0.0
      %697 = vmatprep.subr.mxu0 0.0
      %698 = vmatpush1.msra.mxu0 0.0
      %699 = vmatprep.subr.mxu0 0.0
      %700 = vmatpush1.msra.mxu0 0.0
      %701 = vmatprep.subr.mxu0 0.0
      %702 = vmatpush1.msra.mxu0 0.0
      %703 = vmatprep.subr.mxu0 0.0
      %704 = vmatpush1.msra.mxu0 0.0
      %705 = vmatprep.subr.mxu0 0.0
      %706 = vmatpush1.msra.mxu0 0.0
      %707 = vmatprep.subr.mxu0 0.0
      %708 = vmatpush1.msra.mxu0 0.0
      %709 = vmatprep.subr.mxu0 0.0
      %710 = vmatpush1.msra.mxu0 0.0
      %711 = vmatprep.subr.mxu0 0.0
      %712 = vmatpush1.msra.mxu0 0.0
      %713 = vmatprep.subr.mxu0 0.0
      %714 = vmatpush1.msra.mxu0 0.0
      %715 = vmatprep.subr.mxu0 0.0
      %716 = vmatpush1.msra.mxu0 0.0
      %717 = vmatprep.subr.mxu0 0.0
      %718 = vmatpush1.msra.mxu0 0.0
      %719 = vmatprep.subr.mxu0 0.0
      %720 = vmatpush1.msra.mxu0 0.0
      %721 = vmatprep.subr.mxu0 0.0
      %722 = vmatpush1.msra.mxu0 0.0
      %723 = vmatprep.subr.mxu0 0.0
      %724 = vmatpush1.msra.mxu0 0.0
      %725 = vmatprep.subr.mxu0 0.0
      %726 = vmatpush1.msra.mxu0 0.0
      %727 = vmatprep.subr.mxu0 0.0
      %728 = vmatpush1.msra.mxu0 0.0
      %729 = vmatprep.subr.mxu0 0.0
      %730 = vmatpush1.msra.mxu0 0.0
      %731 = vmatprep.subr.mxu0 0.0
      %732 = vmatpush1.msra.mxu0 0.0
      %733 = vmatprep.subr.mxu0 0.0
      %734 = vmatpush1.msra.mxu0 0.0
      %735 = vmatprep.subr.mxu0 0.0
      %736 = vmatpush1.msra.mxu0 0.0
      %737 = vmatprep.subr.mxu0 0.0
      %738 = vmatpush1.msra.mxu0 0.0
      %739 = vmatprep.subr.mxu0 0.0
      %740 = vmatpush1.msra.mxu0 0.0
      %741 = vmatprep.subr.mxu0 0.0
      %742 = vmatpush1.msra.mxu0 0.0
      %743 = vmatprep.subr.mxu0 0.0
      %744 = vmatpush1.msra.mxu0 0.0
      %745 = vmatprep.subr.mxu0 0.0
      %746 = vmatpush1.msra.mxu0 0.0
      %747 = vmatprep.mubr.f32.mxu0 0.0
      %748 = vmatmul.mubr.f32.gmra.mrb[0].mxu0 %v584
      %v749 = vpop.f32.mrb[0].mxu0
      %v750 = vadd.f32 0.0, %v749
      %v751 = vpop.f32.mrb[0].mxu0
      %752 = vmatprep.mubr.f32.mxu0 0.0
      %753 = vmatmul.mubr.f32.gmra.mrb[0].mxu0 %v587
      %v754 = vpop.f32.mrb[0].mxu0
      %v755 = vadd.f32 0.0, %v754
      %v756 = vpop.f32.mrb[0].mxu0
      %757 = vmatprep.mubr.f32.mxu0 0.0
      %758 = vmatmul.mubr.f32.gmra.mrb[0].mxu0 %v590
      %v759 = vpop.f32.mrb[0].mxu0
      %v760 = vadd.f32 0.0, %v759
      %v761 = vpop.f32.mrb[0].mxu0
      %762 = vmatprep.mubr.f32.mxu0 0.0
      %763 = vmatmul.mubr.f32.gmra.mrb[0].mxu0 %v593
      %v764 = vpop.f32.mrb[0].mxu0
      %v765 = vadd.f32 0.0, %v764
      %v766 = vpop.f32.mrb[0].mxu0
      %767 = vmatprep.mubr.f32.mxu0 0.0
      %768 = vmatmul.mubr.f32.gmra.mrb[0].mxu0 %v596
      %v769 = vpop.f32.mrb[0].mxu0
      %v770 = vadd.f32 0.0, %v769
      %v771 = vpop.f32.mrb[0].mxu0
      %772 = vmatprep.mubr.f32.mxu0 0.0
      %773 = vmatmul.mubr.f32.gmra.mrb[0].mxu0 %v599
      %v774 = vpop.f32.mrb[0].mxu0
      %v775 = vadd.f32 0.0, %v774
      %v776 = vpop.f32.mrb[0].mxu0
      %777 = vmatprep.mubr.f32.mxu0 0.0
      %778 = vmatmul.mubr.f32.gmra.mrb[0].mxu0 %v602
      %v779 = vpop.f32.mrb[0].mxu0
      %v780 = vadd.f32 0.0, %v779
      %v781 = vpop.f32.mrb[0].mxu0
      %782 = vmatprep.mubr.f32.mxu0 0.0
      %783 = vmatmul.mubr.f32.gmra.mrb[0].mxu0 %v605
      %v784 = vpop.f32.mrb[0].mxu0
      %v785 = vadd.f32 0.0, %v784
      %v786 = vpop.f32.mrb[0].mxu0
      %787 = vmatprep.mubr.f32.mxu0 0.0
      %788 = vmatmul.mubr.f32.gmra.mrb[0].mxu0 %v608
      %v789 = vpop.f32.mrb[0].mxu0
      %v790 = vadd.f32 0.0, %v789
      %v791 = vpop.f32.mrb[0].mxu0
      %792 = vmatprep.mubr.f32.mxu0 0.0
      %793 = vmatmul.mubr.f32.gmra.mrb[0].mxu0 %v611
      %v794 = vpop.f32.mrb[0].mxu0
      %v795 = vadd.f32 0.0, %v794
      %v796 = vpop.f32.mrb[0].mxu0
      %797 = vmatprep.mubr.f32.mxu0 0.0
      %798 = vmatmul.mubr.f32.gmra.mrb[0].mxu0 %v614
      %v799 = vpop.f32.mrb[0].mxu0
      %v800 = vadd.f32 0.0, %v799
      %v801 = vpop.f32.mrb[0].mxu0
      %802 = vmatprep.mubr.f32.mxu0 0.0
      %803 = vmatmul.mubr.f32.gmra.mrb[0].mxu0 %v617
      %v804 = vpop.f32.mrb[0].mxu0
      %v805 = vadd.f32 0.0, %v804
      %v806 = vpop.f32.mrb[0].mxu0
      %807 = vmatprep.mubr.f32.mxu0 0.0
      %808 = vmatmul.mubr.f32.gmra.mrb[0].mxu0 %v620
      %v809 = vpop.f32.mrb[0].mxu0
      %v810 = vadd.f32 0.0, %v809
      %v811 = vpop.f32.mrb[0].mxu0
      %812 = vmatprep.mubr.f32.mxu0 0.0
      %813 = vmatmul.mubr.f32.gmra.mrb[0].mxu0 %v623
      %v814 = vpop.f32.mrb[0].mxu0
      %v815 = vadd.f32 0.0, %v814
      %v816 = vpop.f32.mrb[0].mxu0
      %817 = vmatprep.mubr.f32.mxu0 0.0
      %818 = vmatmul.mubr.f32.gmra.mrb[0].mxu0 %v626
      %v819 = vpop.f32.mrb[0].mxu0
      %v820 = vadd.f32 0.0, %v819
      %v821 = vpop.f32.mrb[0].mxu0
      %822 = vmatprep.mubr.f32.mxu0 0.0
      %823 = vmatmul.mubr.f32.gmra.mrb[0].mxu0 %v629
      %v824 = vpop.f32.mrb[0].mxu0
      %v825 = vadd.f32 0.0, %v824
      %v826 = vpop.f32.mrb[0].mxu0
      %827 = vmatprep.mubr.f32.mxu0 0.0
      %828 = vmatmul.mubr.f32.gmra.mrb[0].mxu0 %v632
      %v829 = vpop.f32.mrb[0].mxu0
      %v830 = vadd.f32 0.0, %v829
      %v831 = vpop.f32.mrb[0].mxu0
      %832 = vmatprep.mubr.f32.mxu0 0.0
      %833 = vmatmul.mubr.f32.gmra.mrb[0].mxu0 %v635
      %v834 = vpop.f32.mrb[0].mxu0
      %v835 = vadd.f32 0.0, %v834
      %v836 = vpop.f32.mrb[0].mxu0
      %837 = vmatprep.mubr.f32.mxu0 0.0
      %838 = vmatmul.mubr.f32.gmra.mrb[0].mxu0 %v638
      %v839 = vpop.f32.mrb[0].mxu0
      %v840 = vadd.f32 0.0, %v839
      %v841 = vpop.f32.mrb[0].mxu0
      %842 = vmatprep.mubr.f32.mxu0 0.0
      %843 = vmatmul.mubr.f32.gmra.mrb[0].mxu0 %v641
      %v844 = vpop.f32.mrb[0].mxu0
      %v845 = vadd.f32 0.0, %v844
      %v846 = vpop.f32.mrb[0].mxu0
      %847 = vmatprep.mubr.f32.mxu0 0.0
      %848 = vmatmul.mubr.f32.gmra.mrb[0].mxu0 %v644
      %v849 = vpop.f32.mrb[0].mxu0
      %v850 = vadd.f32 0.0, %v849
      %v851 = vpop.f32.mrb[0].mxu0
      %852 = vmatprep.mubr.f32.mxu0 0.0
      %853 = vmatmul.mubr.f32.gmra.mrb[0].mxu0 %v647
      %v854 = vpop.f32.mrb[0].mxu0
      %v855 = vadd.f32 0.0, %v854
      %v856 = vpop.f32.mrb[0].mxu0
      %857 = vmatprep.mubr.f32.mxu0 0.0
      %858 = vmatmul.mubr.f32.gmra.mrb[0].mxu0 %v650
      %v859 = vpop.f32.mrb[0].mxu0
      %v860 = vadd.f32 0.0, %v859
      %v861 = vpop.f32.mrb[0].mxu0
      %862 = vmatprep.mubr.f32.mxu0 0.0
      %863 = vmatmul.mubr.f32.gmra.mrb[0].mxu0 %v653
      %v864 = vpop.f32.mrb[0].mxu0
      %v865 = vadd.f32 0.0, %v864
      %v866 = vpop.f32.mrb[0].mxu0
      %867 = vmatprep.mubr.f32.mxu0 0.0
      %868 = vmatmul.mubr.f32.gmra.mrb[0].mxu0 %v656
      %v869 = vpop.f32.mrb[0].mxu0
      %v870 = vadd.f32 0.0, %v869
      %v871 = vpop.f32.mrb[0].mxu0
      %872 = vmatprep.mubr.f32.mxu0 0.0
      %873 = vmatmul.mubr.f32.gmra.mrb[0].mxu0 %v659
      %v874 = vpop.f32.mrb[0].mxu0
      %v875 = vadd.f32 0.0, %v874
      %v876 = vpop.f32.mrb[0].mxu0
      %877 = vmatprep.mubr.f32.mxu0 0.0
      %878 = vmatmul.mubr.f32.gmra.mrb[0].mxu0 %v662
      %v879 = vpop.f32.mrb[0].mxu0
      %v880 = vadd.f32 0.0, %v879
      %v881 = vpop.f32.mrb[0].mxu0
      %882 = vmatprep.mubr.f32.mxu0 0.0
      %883 = vmatmul.mubr.f32.gmra.mrb[0].mxu0 %v665
      %v884 = vpop.f32.mrb[0].mxu0
      %v885 = vadd.f32 0.0, %v884
      %v886 = vpop.f32.mrb[0].mxu0
      %887 = vmatprep.mubr.f32.mxu0 0.0
      %888 = vmatmul.mubr.f32.gmra.mrb[0].mxu0 %v668
      %v889 = vpop.f32.mrb[0].mxu0
      %v890 = vadd.f32 0.0, %v889
      %v891 = vpop.f32.mrb[0].mxu0
      %892 = vmatprep.mubr.f32.mxu0 0.0
      %893 = vmatmul.mubr.f32.gmra.mrb[0].mxu0 %v671
      %v894 = vpop.f32.mrb[0].mxu0
      %v895 = vadd.f32 0.0, %v894
      %v896 = vpop.f32.mrb[0].mxu0
      %897 = vmatprep.mubr.f32.mxu0 0.0
      %898 = vmatmul.mubr.f32.gmra.mrb[0].mxu0 %v674
      %v899 = vpop.f32.mrb[0].mxu0
      %v900 = vadd.f32 0.0, %v899
      %v901 = vpop.f32.mrb[0].mxu0
      %902 = vmatprep.mubr.f32.mxu0 0.0
      %903 = vmatmul.mubr.f32.gmra.mrb[0].mxu0 %v677
      %v904 = vpop.f32.mrb[0].mxu0
      %v905 = vadd.f32 0.0, %v904
      %v906 = vpop.f32.mrb[0].mxu0
      %907 = vdwg.mxu0
      %v909 = vsel %vm317, %v516, 0
      %v912 = vsel %vm317, %v517, 0
      %v915 = vsel %vm317, %v518, 0
      %v918 = vsel %vm317, %v519, 0
      %v921 = vsel %vm317, %v520, 0
      %v924 = vsel %vm317, %v521, 0
      %v927 = vsel %vm317, %v522, 0
      %v930 = vsel %vm317, %v523, 0
      %v933 = vsel %vm317, %v524, 0
      %v936 = vsel %vm317, %v525, 0
      %v939 = vsel %vm317, %v526, 0
      %v942 = vsel %vm317, %v527, 0
      %v945 = vsel %vm317, %v528, 0
      %v948 = vsel %vm317, %v529, 0
      %v951 = vsel %vm317, %v530, 0
      %v954 = vsel %vm317, %v531, 0
      %v957 = vsel %vm317, %v532, 0
      %v960 = vsel %vm317, %v533, 0
      %v963 = vsel %vm317, %v534, 0
      %v966 = vsel %vm317, %v535, 0
      %v969 = vsel %vm317, %v536, 0
      %v972 = vsel %vm317, %v537, 0
      %v975 = vsel %vm317, %v538, 0
      %v978 = vsel %vm317, %v539, 0
      %v981 = vsel %vm317, %v540, 0
      %v984 = vsel %vm317, %v541, 0
      %v987 = vsel %vm317, %v542, 0
      %v990 = vsel %vm317, %v543, 0
      %v993 = vsel %vm317, %v544, 0
      %v996 = vsel %vm317, %v545, 0
      %v999 = vsel %vm317, %v546, 0
      %v1002 = vsel %vm317, %v547, 0
      %v1005 = vsel %vm679, %v548, 0
      %1007 = vmatprep.subr.mxu0 0.0
      %1008 = vmatpush1.msra.mxu0 %v1005
      %1009 = vmatprep.subr.mxu0 0.0
      %1010 = vmatpush1.msra.mxu0 0.0
      %1011 = vmatprep.subr.mxu0 0.0
      %1012 = vmatpush1.msra.mxu0 0.0
      %1013 = vmatprep.subr.mxu0 0.0
      %1014 = vmatpush1.msra.mxu0 0.0
      %1015 = vmatprep.subr.mxu0 0.0
      %1016 = vmatpush1.msra.mxu0 0.0
      %1017 = vmatprep.subr.mxu0 0.0
      %1018 = vmatpush1.msra.mxu0 0.0
      %1019 = vmatprep.subr.mxu0 0.0
      %1020 = vmatpush1.msra.mxu0 0.0
      %1021 = vmatprep.subr.mxu0 0.0
      %1022 = vmatpush1.msra.mxu0 0.0
      %1023 = vmatprep.subr.mxu0 0.0
      %1024 = vmatpush1.msra.mxu0 0.0
      %1025 = vmatprep.subr.mxu0 0.0
      %1026 = vmatpush1.msra.mxu0 0.0
      %1027 = vmatprep.subr.mxu0 0.0
      %1028 = vmatpush1.msra.mxu0 0.0
      %1029 = vmatprep.subr.mxu0 0.0
      %1030 = vmatpush1.msra.mxu0 0.0
      %1031 = vmatprep.subr.mxu0 0.0
      %1032 = vmatpush1.msra.mxu0 0.0
      %1033 = vmatprep.subr.mxu0 0.0
      %1034 = vmatpush1.msra.mxu0 0.0
      %1035 = vmatprep.subr.mxu0 0.0
      %1036 = vmatpush1.msra.mxu0 0.0
      %1037 = vmatprep.subr.mxu0 0.0
      %1038 = vmatpush1.msra.mxu0 0.0
      %1039 = vmatprep.subr.mxu0 0.0
      %1040 = vmatpush1.msra.mxu0 0.0
      %1041 = vmatprep.subr.mxu0 0.0
      %1042 = vmatpush1.msra.mxu0 0.0
      %1043 = vmatprep.subr.mxu0 0.0
      %1044 = vmatpush1.msra.mxu0 0.0
      %1045 = vmatprep.subr.mxu0 0.0
      %1046 = vmatpush1.msra.mxu0 0.0
      %1047 = vmatprep.subr.mxu0 0.0
      %1048 = vmatpush1.msra.mxu0 0.0
      %1049 = vmatprep.subr.mxu0 0.0
      %1050 = vmatpush1.msra.mxu0 0.0
      %1051 = vmatprep.subr.mxu0 0.0
      %1052 = vmatpush1.msra.mxu0 0.0
      %1053 = vmatprep.subr.mxu0 0.0
      %1054 = vmatpush1.msra.mxu0 0.0
      %1055 = vmatprep.subr.mxu0 0.0
      %1056 = vmatpush1.msra.mxu0 0.0
      %1057 = vmatprep.subr.mxu0 0.0
      %1058 = vmatpush1.msra.mxu0 0.0
      %1059 = vmatprep.subr.mxu0 0.0
      %1060 = vmatpush1.msra.mxu0 0.0
      %1061 = vmatprep.subr.mxu0 0.0
      %1062 = vmatpush1.msra.mxu0 0.0
      %1063 = vmatprep.subr.mxu0 0.0
      %1064 = vmatpush1.msra.mxu0 0.0
      %1065 = vmatprep.subr.mxu0 0.0
      %1066 = vmatpush1.msra.mxu0 0.0
      %1067 = vmatprep.subr.mxu0 0.0
      %1068 = vmatpush1.msra.mxu0 0.0
      %1069 = vmatprep.subr.mxu0 0.0
      %1070 = vmatpush1.msra.mxu0 0.0
      %1071 = vmatprep.mubr.f32.mxu0 0.0
      %1072 = vmatmul.mubr.f32.gmra.mrb[0].mxu0 %v909
      %v1073 = vpop.f32.mrb[0].mxu0
      %v1074 = vadd.f32 %v750, %v1073
      %v1075 = vpop.f32.mrb[0].mxu0
      %1076 = vmatprep.mubr.f32.mxu0 0.0
      %1077 = vmatmul.mubr.f32.gmra.mrb[0].mxu0 %v912
      %v1078 = vpop.f32.mrb[0].mxu0
      %v1079 = vadd.f32 %v755, %v1078
      %v1080 = vpop.f32.mrb[0].mxu0
      %1081 = vmatprep.mubr.f32.mxu0 0.0
      %1082 = vmatmul.mubr.f32.gmra.mrb[0].mxu0 %v915
      %v1083 = vpop.f32.mrb[0].mxu0
      %v1084 = vadd.f32 %v760, %v1083
      %v1085 = vpop.f32.mrb[0].mxu0
      %1086 = vmatprep.mubr.f32.mxu0 0.0
      %1087 = vmatmul.mubr.f32.gmra.mrb[0].mxu0 %v918
      %v1088 = vpop.f32.mrb[0].mxu0
      %v1089 = vadd.f32 %v765, %v1088
      %v1090 = vpop.f32.mrb[0].mxu0
      %1091 = vmatprep.mubr.f32.mxu0 0.0
      %1092 = vmatmul.mubr.f32.gmra.mrb[0].mxu0 %v921
      %v1093 = vpop.f32.mrb[0].mxu0
      %v1094 = vadd.f32 %v770, %v1093
      %v1095 = vpop.f32.mrb[0].mxu0
      %1096 = vmatprep.mubr.f32.mxu0 0.0
      %1097 = vmatmul.mubr.f32.gmra.mrb[0].mxu0 %v924
      %v1098 = vpop.f32.mrb[0].mxu0
      %v1099 = vadd.f32 %v775, %v1098
      %v1100 = vpop.f32.mrb[0].mxu0
      %1101 = vmatprep.mubr.f32.mxu0 0.0
      %1102 = vmatmul.mubr.f32.gmra.mrb[0].mxu0 %v927
      %v1103 = vpop.f32.mrb[0].mxu0
      %v1104 = vadd.f32 %v780, %v1103
      %v1105 = vpop.f32.mrb[0].mxu0
      %1106 = vmatprep.mubr.f32.mxu0 0.0
      %1107 = vmatmul.mubr.f32.gmra.mrb[0].mxu0 %v930
      %v1108 = vpop.f32.mrb[0].mxu0
      %v1109 = vadd.f32 %v785, %v1108
      %v1110 = vpop.f32.mrb[0].mxu0
      %1111 = vmatprep.mubr.f32.mxu0 0.0
      %1112 = vmatmul.mubr.f32.gmra.mrb[0].mxu0 %v933
      %v1113 = vpop.f32.mrb[0].mxu0
      %v1114 = vadd.f32 %v790, %v1113
      %v1115 = vpop.f32.mrb[0].mxu0
      %1116 = vmatprep.mubr.f32.mxu0 0.0
      %1117 = vmatmul.mubr.f32.gmra.mrb[0].mxu0 %v936
      %v1118 = vpop.f32.mrb[0].mxu0
      %v1119 = vadd.f32 %v795, %v1118
      %v1120 = vpop.f32.mrb[0].mxu0
      %1121 = vmatprep.mubr.f32.mxu0 0.0
      %1122 = vmatmul.mubr.f32.gmra.mrb[0].mxu0 %v939
      %v1123 = vpop.f32.mrb[0].mxu0
      %v1124 = vadd.f32 %v800, %v1123
      %v1125 = vpop.f32.mrb[0].mxu0
      %1126 = vmatprep.mubr.f32.mxu0 0.0
      %1127 = vmatmul.mubr.f32.gmra.mrb[0].mxu0 %v942
      %v1128 = vpop.f32.mrb[0].mxu0
      %v1129 = vadd.f32 %v805, %v1128
      %v1130 = vpop.f32.mrb[0].mxu0
      %1131 = vmatprep.mubr.f32.mxu0 0.0
      %1132 = vmatmul.mubr.f32.gmra.mrb[0].mxu0 %v945
      %v1133 = vpop.f32.mrb[0].mxu0
      %v1134 = vadd.f32 %v810, %v1133
      %v1135 = vpop.f32.mrb[0].mxu0
      %1136 = vmatprep.mubr.f32.mxu0 0.0
      %1137 = vmatmul.mubr.f32.gmra.mrb[0].mxu0 %v948
      %v1138 = vpop.f32.mrb[0].mxu0
      %v1139 = vadd.f32 %v815, %v1138
      %v1140 = vpop.f32.mrb[0].mxu0
      %1141 = vmatprep.mubr.f32.mxu0 0.0
      %1142 = vmatmul.mubr.f32.gmra.mrb[0].mxu0 %v951
      %v1143 = vpop.f32.mrb[0].mxu0
      %v1144 = vadd.f32 %v820, %v1143
      %v1145 = vpop.f32.mrb[0].mxu0
      %1146 = vmatprep.mubr.f32.mxu0 0.0
      %1147 = vmatmul.mubr.f32.gmra.mrb[0].mxu0 %v954
      %v1148 = vpop.f32.mrb[0].mxu0
      %v1149 = vadd.f32 %v825, %v1148
      %v1150 = vpop.f32.mrb[0].mxu0
      %1151 = vmatprep.mubr.f32.mxu0 0.0
      %1152 = vmatmul.mubr.f32.gmra.mrb[0].mxu0 %v957
      %v1153 = vpop.f32.mrb[0].mxu0
      %v1154 = vadd.f32 %v830, %v1153
      %v1155 = vpop.f32.mrb[0].mxu0
      %1156 = vmatprep.mubr.f32.mxu0 0.0
      %1157 = vmatmul.mubr.f32.gmra.mrb[0].mxu0 %v960
      %v1158 = vpop.f32.mrb[0].mxu0
      %v1159 = vadd.f32 %v835, %v1158
      %v1160 = vpop.f32.mrb[0].mxu0
      %1161 = vmatprep.mubr.f32.mxu0 0.0
      %1162 = vmatmul.mubr.f32.gmra.mrb[0].mxu0 %v963
      %v1163 = vpop.f32.mrb[0].mxu0
      %v1164 = vadd.f32 %v840, %v1163
      %v1165 = vpop.f32.mrb[0].mxu0
      %1166 = vmatprep.mubr.f32.mxu0 0.0
      %1167 = vmatmul.mubr.f32.gmra.mrb[0].mxu0 %v966
      %v1168 = vpop.f32.mrb[0].mxu0
      %v1169 = vadd.f32 %v845, %v1168
      %v1170 = vpop.f32.mrb[0].mxu0
      %1171 = vmatprep.mubr.f32.mxu0 0.0
      %1172 = vmatmul.mubr.f32.gmra.mrb[0].mxu0 %v969
      %v1173 = vpop.f32.mrb[0].mxu0
      %v1174 = vadd.f32 %v850, %v1173
      %v1175 = vpop.f32.mrb[0].mxu0
      %1176 = vmatprep.mubr.f32.mxu0 0.0
      %1177 = vmatmul.mubr.f32.gmra.mrb[0].mxu0 %v972
      %v1178 = vpop.f32.mrb[0].mxu0
      %v1179 = vadd.f32 %v855, %v1178
      %v1180 = vpop.f32.mrb[0].mxu0
      %1181 = vmatprep.mubr.f32.mxu0 0.0
      %1182 = vmatmul.mubr.f32.gmra.mrb[0].mxu0 %v975
      %v1183 = vpop.f32.mrb[0].mxu0
      %v1184 = vadd.f32 %v860, %v1183
      %v1185 = vpop.f32.mrb[0].mxu0
      %1186 = vmatprep.mubr.f32.mxu0 0.0
      %1187 = vmatmul.mubr.f32.gmra.mrb[0].mxu0 %v978
      %v1188 = vpop.f32.mrb[0].mxu0
      %v1189 = vadd.f32 %v865, %v1188
      %v1190 = vpop.f32.mrb[0].mxu0
      %1191 = vmatprep.mubr.f32.mxu0 0.0
      %1192 = vmatmul.mubr.f32.gmra.mrb[0].mxu0 %v981
      %v1193 = vpop.f32.mrb[0].mxu0
      %v1194 = vadd.f32 %v870, %v1193
      %v1195 = vpop.f32.mrb[0].mxu0
      %1196 = vmatprep.mubr.f32.mxu0 0.0
      %1197 = vmatmul.mubr.f32.gmra.mrb[0].mxu0 %v984
      %v1198 = vpop.f32.mrb[0].mxu0
      %v1199 = vadd.f32 %v875, %v1198
      %v1200 = vpop.f32.mrb[0].mxu0
      %1201 = vmatprep.mubr.f32.mxu0 0.0
      %1202 = vmatmul.mubr.f32.gmra.mrb[0].mxu0 %v987
      %v1203 = vpop.f32.mrb[0].mxu0
      %v1204 = vadd.f32 %v880, %v1203
      %v1205 = vpop.f32.mrb[0].mxu0
      %1206 = vmatprep.mubr.f32.mxu0 0.0
      %1207 = vmatmul.mubr.f32.gmra.mrb[0].mxu0 %v990
      %v1208 = vpop.f32.mrb[0].mxu0
      %v1209 = vadd.f32 %v885, %v1208
      %v1210 = vpop.f32.mrb[0].mxu0
      %1211 = vmatprep.mubr.f32.mxu0 0.0
      %1212 = vmatmul.mubr.f32.gmra.mrb[0].mxu0 %v993
      %v1213 = vpop.f32.mrb[0].mxu0
      %v1214 = vadd.f32 %v890, %v1213
      %v1215 = vpop.f32.mrb[0].mxu0
      %1216 = vmatprep.mubr.f32.mxu0 0.0
      %1217 = vmatmul.mubr.f32.gmra.mrb[0].mxu0 %v996
      %v1218 = vpop.f32.mrb[0].mxu0
      %v1219 = vadd.f32 %v895, %v1218
      %v1220 = vpop.f32.mrb[0].mxu0
      %1221 = vmatprep.mubr.f32.mxu0 0.0
      %1222 = vmatmul.mubr.f32.gmra.mrb[0].mxu0 %v999
      %v1223 = vpop.f32.mrb[0].mxu0
      %v1224 = vadd.f32 %v900, %v1223
      %v1225 = vpop.f32.mrb[0].mxu0
      %1226 = vmatprep.mubr.f32.mxu0 0.0
      %1227 = vmatmul.mubr.f32.gmra.mrb[0].mxu0 %v1002
      %v1228 = vpop.f32.mrb[0].mxu0
      %v1229 = vadd.f32 %v905, %v1228
      %v1230 = vpop.f32.mrb[0].mxu0
      %1231 = vdwg.mxu0
      %v1232 = vld [vmem:[#allocation2 + $0x2] sm:$0xff]
      %v1233 = vld [vmem:[#allocation2 + $0xa] sm:$0xff]
      %v1234 = vld [vmem:[#allocation2 + $0x1a] sm:$0xff]
      %v1235 = vld [vmem:[#allocation2 + $0x22] sm:$0xff]
      %v1236 = vld [vmem:[#allocation2 + $0x32] sm:$0xff]
      %v1237 = vld [vmem:[#allocation2 + $0x3a] sm:$0xff]
      %v1238 = vld [vmem:[#allocation2 + $0x4a] sm:$0xff]
      %v1239 = vld [vmem:[#allocation2 + $0x52] sm:$0xff]
      %v1240 = vld [vmem:[#allocation2 + $0x62] sm:$0xff]
      %v1241 = vld [vmem:[#allocation2 + $0x6a] sm:$0xff]
      %v1242 = vld [vmem:[#allocation2 + $0x7a] sm:$0xff]
      %v1243 = vld [vmem:[#allocation2 + $0x82] sm:$0xff]
      %v1244 = vld [vmem:[#allocation2 + $0x92] sm:$0xff]
      %v1245 = vld [vmem:[#allocation2 + $0x9a] sm:$0xff]
      %v1246 = vld [vmem:[#allocation2 + $0xaa] sm:$0xff]
      %v1247 = vld [vmem:[#allocation2 + $0xb2] sm:$0xff]
      %v1248 = vld [vmem:[#allocation2 + $0xc2] sm:$0xff]
      %v1249 = vld [vmem:[#allocation2 + $0xca] sm:$0xff]
      %v1250 = vld [vmem:[#allocation2 + $0xda] sm:$0xff]
      %v1251 = vld [vmem:[#allocation2 + $0xe2] sm:$0xff]
      %v1252 = vld [vmem:[#allocation2 + $0xf2] sm:$0xff]
      %v1253 = vld [vmem:[#allocation2 + $0xfa] sm:$0xff]
      %v1254 = vld [vmem:[#allocation2 + $0x10a] sm:$0xff]
      %v1255 = vld [vmem:[#allocation2 + $0x112] sm:$0xff]
      %v1256 = vld [vmem:[#allocation2 + $0x122] sm:$0xff]
      %v1257 = vld [vmem:[#allocation2 + $0x12a] sm:$0xff]
      %v1258 = vld [vmem:[#allocation2 + $0x13a] sm:$0xff]
      %v1259 = vld [vmem:[#allocation2 + $0x142] sm:$0xff]
      %v1260 = vld [vmem:[#allocation2 + $0x152] sm:$0xff]
      %v1261 = vld [vmem:[#allocation2 + $0x15a] sm:$0xff]
      %v1262 = vld [vmem:[#allocation2 + $0x16a] sm:$0xff]
      %v1263 = vld [vmem:[#allocation2 + $0x172] sm:$0xff]
      %s1264 = scalar_lea.vmem %s302, 8
      %v1265 = vld [vmem:[%s1264] sm:$0xf]
      %v1267 = vsel %vm317, %v1232, 0
      %v1270 = vsel %vm317, %v1233, 0
      %v1273 = vsel %vm317, %v1234, 0
      %v1276 = vsel %vm317, %v1235, 0
      %v1279 = vsel %vm317, %v1236, 0
      %v1282 = vsel %vm317, %v1237, 0
      %v1285 = vsel %vm317, %v1238, 0
      %v1288 = vsel %vm317, %v1239, 0
      %v1291 = vsel %vm317, %v1240, 0
      %v1294 = vsel %vm317, %v1241, 0
      %v1297 = vsel %vm317, %v1242, 0
      %v1300 = vsel %vm317, %v1243, 0
      %v1303 = vsel %vm317, %v1244, 0
      %v1306 = vsel %vm317, %v1245, 0
      %v1309 = vsel %vm317, %v1246, 0
      %v1312 = vsel %vm317, %v1247, 0
      %v1315 = vsel %vm317, %v1248, 0
      %v1318 = vsel %vm317, %v1249, 0
      %v1321 = vsel %vm317, %v1250, 0
      %v1324 = vsel %vm317, %v1251, 0
      %v1327 = vsel %vm317, %v1252, 0
      %v1330 = vsel %vm317, %v1253, 0
      %v1333 = vsel %vm317, %v1254, 0
      %v1336 = vsel %vm317, %v1255, 0
      %v1339 = vsel %vm317, %v1256, 0
      %v1342 = vsel %vm317, %v1257, 0
      %v1345 = vsel %vm317, %v1258, 0
      %v1348 = vsel %vm317, %v1259, 0
      %v1351 = vsel %vm317, %v1260, 0
      %v1354 = vsel %vm317, %v1261, 0
      %v1357 = vsel %vm317, %v1262, 0
      %v1360 = vsel %vm317, %v1263, 0
      %v1363 = vsel %vm679, %v1265, 0
      %1365 = vmatprep.subr.mxu0 0.0
      %1366 = vmatpush1.msra.mxu0 %v1363
      %1367 = vmatprep.subr.mxu0 0.0
      %1368 = vmatpush1.msra.mxu0 0.0
      %1369 = vmatprep.subr.mxu0 0.0
      %1370 = vmatpush1.msra.mxu0 0.0
      %1371 = vmatprep.subr.mxu0 0.0
      %1372 = vmatpush1.msra.mxu0 0.0
      %1373 = vmatprep.subr.mxu0 0.0
      %1374 = vmatpush1.msra.mxu0 0.0
      %1375 = vmatprep.subr.mxu0 0.0
      %1376 = vmatpush1.msra.mxu0 0.0
      %1377 = vmatprep.subr.mxu0 0.0
      %1378 = vmatpush1.msra.mxu0 0.0
      %1379 = vmatprep.subr.mxu0 0.0
      %1380 = vmatpush1.msra.mxu0 0.0
      %1381 = vmatprep.subr.mxu0 0.0
      %1382 = vmatpush1.msra.mxu0 0.0
      %1383 = vmatprep.subr.mxu0 0.0
      %1384 = vmatpush1.msra.mxu0 0.0
      %1385 = vmatprep.subr.mxu0 0.0
      %1386 = vmatpush1.msra.mxu0 0.0
      %1387 = vmatprep.subr.mxu0 0.0
      %1388 = vmatpush1.msra.mxu0 0.0
      %1389 = vmatprep.subr.mxu0 0.0
      %1390 = vmatpush1.msra.mxu0 0.0
      %1391 = vmatprep.subr.mxu0 0.0
      %1392 = vmatpush1.msra.mxu0 0.0
      %1393 = vmatprep.subr.mxu0 0.0
      %1394 = vmatpush1.msra.mxu0 0.0
      %1395 = vmatprep.subr.mxu0 0.0
      %1396 = vmatpush1.msra.mxu0 0.0
      %1397 = vmatprep.subr.mxu0 0.0
      %1398 = vmatpush1.msra.mxu0 0.0
      %1399 = vmatprep.subr.mxu0 0.0
      %1400 = vmatpush1.msra.mxu0 0.0
      %1401 = vmatprep.subr.mxu0 0.0
      %1402 = vmatpush1.msra.mxu0 0.0
      %1403 = vmatprep.subr.mxu0 0.0
      %1404 = vmatpush1.msra.mxu0 0.0
      %1405 = vmatprep.subr.mxu0 0.0
      %1406 = vmatpush1.msra.mxu0 0.0
      %1407 = vmatprep.subr.mxu0 0.0
      %1408 = vmatpush1.msra.mxu0 0.0
      %1409 = vmatprep.subr.mxu0 0.0
      %1410 = vmatpush1.msra.mxu0 0.0
      %1411 = vmatprep.subr.mxu0 0.0
      %1412 = vmatpush1.msra.mxu0 0.0
      %1413 = vmatprep.subr.mxu0 0.0
      %1414 = vmatpush1.msra.mxu0 0.0
      %1415 = vmatprep.subr.mxu0 0.0
      %1416 = vmatpush1.msra.mxu0 0.0
      %1417 = vmatprep.subr.mxu0 0.0
      %1418 = vmatpush1.msra.mxu0 0.0
      %1419 = vmatprep.subr.mxu0 0.0
      %1420 = vmatpush1.msra.mxu0 0.0
      %1421 = vmatprep.subr.mxu0 0.0
      %1422 = vmatpush1.msra.mxu0 0.0
      %1423 = vmatprep.subr.mxu0 0.0
      %1424 = vmatpush1.msra.mxu0 0.0
      %1425 = vmatprep.subr.mxu0 0.0
      %1426 = vmatpush1.msra.mxu0 0.0
      %1427 = vmatprep.subr.mxu0 0.0
      %1428 = vmatpush1.msra.mxu0 0.0
      %1429 = vmatprep.mubr.f32.mxu0 0.0
      %1430 = vmatmul.mubr.f32.gmra.mrb[0].mxu0 %v1267
      %v1431 = vpop.f32.mrb[0].mxu0
      %v1432 = vadd.f32 0.0, %v1431
      %v1433 = vpop.f32.mrb[0].mxu0
      %1434 = vmatprep.mubr.f32.mxu0 0.0
      %1435 = vmatmul.mubr.f32.gmra.mrb[0].mxu0 %v1270
      %v1436 = vpop.f32.mrb[0].mxu0
      %v1437 = vadd.f32 0.0, %v1436
      %v1438 = vpop.f32.mrb[0].mxu0
      %1439 = vmatprep.mubr.f32.mxu0 0.0
      %1440 = vmatmul.mubr.f32.gmra.mrb[0].mxu0 %v1273
      %v1441 = vpop.f32.mrb[0].mxu0
      %v1442 = vadd.f32 0.0, %v1441
      %v1443 = vpop.f32.mrb[0].mxu0
      %1444 = vmatprep.mubr.f32.mxu0 0.0
      %1445 = vmatmul.mubr.f32.gmra.mrb[0].mxu0 %v1276
      %v1446 = vpop.f32.mrb[0].mxu0
      %v1447 = vadd.f32 0.0, %v1446
      %v1448 = vpop.f32.mrb[0].mxu0
      %1449 = vmatprep.mubr.f32.mxu0 0.0
      %1450 = vmatmul.mubr.f32.gmra.mrb[0].mxu0 %v1279
      %v1451 = vpop.f32.mrb[0].mxu0
      %v1452 = vadd.f32 0.0, %v1451
      %v1453 = vpop.f32.mrb[0].mxu0
      %1454 = vmatprep.mubr.f32.mxu0 0.0
      %1455 = vmatmul.mubr.f32.gmra.mrb[0].mxu0 %v1282
      %v1456 = vpop.f32.mrb[0].mxu0
      %v1457 = vadd.f32 0.0, %v1456
      %v1458 = vpop.f32.mrb[0].mxu0
      %1459 = vmatprep.mubr.f32.mxu0 0.0
      %1460 = vmatmul.mubr.f32.gmra.mrb[0].mxu0 %v1285
      %v1461 = vpop.f32.mrb[0].mxu0
      %v1462 = vadd.f32 0.0, %v1461
      %v1463 = vpop.f32.mrb[0].mxu0
      %1464 = vmatprep.mubr.f32.mxu0 0.0
      %1465 = vmatmul.mubr.f32.gmra.mrb[0].mxu0 %v1288
      %v1466 = vpop.f32.mrb[0].mxu0
      %v1467 = vadd.f32 0.0, %v1466
      %v1468 = vpop.f32.mrb[0].mxu0
      %1469 = vmatprep.mubr.f32.mxu0 0.0
      %1470 = vmatmul.mubr.f32.gmra.mrb[0].mxu0 %v1291
      %v1471 = vpop.f32.mrb[0].mxu0
      %v1472 = vadd.f32 0.0, %v1471
      %v1473 = vpop.f32.mrb[0].mxu0
      %1474 = vmatprep.mubr.f32.mxu0 0.0
      %1475 = vmatmul.mubr.f32.gmra.mrb[0].mxu0 %v1294
      %v1476 = vpop.f32.mrb[0].mxu0
      %v1477 = vadd.f32 0.0, %v1476
      %v1478 = vpop.f32.mrb[0].mxu0
      %1479 = vmatprep.mubr.f32.mxu0 0.0
      %1480 = vmatmul.mubr.f32.gmra.mrb[0].mxu0 %v1297
      %v1481 = vpop.f32.mrb[0].mxu0
      %v1482 = vadd.f32 0.0, %v1481
      %v1483 = vpop.f32.mrb[0].mxu0
      %1484 = vmatprep.mubr.f32.mxu0 0.0
      %1485 = vmatmul.mubr.f32.gmra.mrb[0].mxu0 %v1300
      %v1486 = vpop.f32.mrb[0].mxu0
      %v1487 = vadd.f32 0.0, %v1486
      %v1488 = vpop.f32.mrb[0].mxu0
      %1489 = vmatprep.mubr.f32.mxu0 0.0
      %1490 = vmatmul.mubr.f32.gmra.mrb[0].mxu0 %v1303
      %v1491 = vpop.f32.mrb[0].mxu0
      %v1492 = vadd.f32 0.0, %v1491
      %v1493 = vpop.f32.mrb[0].mxu0
      %1494 = vmatprep.mubr.f32.mxu0 0.0
      %1495 = vmatmul.mubr.f32.gmra.mrb[0].mxu0 %v1306
      %v1496 = vpop.f32.mrb[0].mxu0
      %v1497 = vadd.f32 0.0, %v1496
      %v1498 = vpop.f32.mrb[0].mxu0
      %1499 = vmatprep.mubr.f32.mxu0 0.0
      %1500 = vmatmul.mubr.f32.gmra.mrb[0].mxu0 %v1309
      %v1501 = vpop.f32.mrb[0].mxu0
      %v1502 = vadd.f32 0.0, %v1501
      %v1503 = vpop.f32.mrb[0].mxu0
      %1504 = vmatprep.mubr.f32.mxu0 0.0
      %1505 = vmatmul.mubr.f32.gmra.mrb[0].mxu0 %v1312
      %v1506 = vpop.f32.mrb[0].mxu0
      %v1507 = vadd.f32 0.0, %v1506
      %v1508 = vpop.f32.mrb[0].mxu0
      %1509 = vmatprep.mubr.f32.mxu0 0.0
      %1510 = vmatmul.mubr.f32.gmra.mrb[0].mxu0 %v1315
      %v1511 = vpop.f32.mrb[0].mxu0
      %v1512 = vadd.f32 0.0, %v1511
      %v1513 = vpop.f32.mrb[0].mxu0
      %1514 = vmatprep.mubr.f32.mxu0 0.0
      %1515 = vmatmul.mubr.f32.gmra.mrb[0].mxu0 %v1318
      %v1516 = vpop.f32.mrb[0].mxu0
      %v1517 = vadd.f32 0.0, %v1516
      %v1518 = vpop.f32.mrb[0].mxu0
      %1519 = vmatprep.mubr.f32.mxu0 0.0
      %1520 = vmatmul.mubr.f32.gmra.mrb[0].mxu0 %v1321
      %v1521 = vpop.f32.mrb[0].mxu0
      %v1522 = vadd.f32 0.0, %v1521
      %v1523 = vpop.f32.mrb[0].mxu0
      %1524 = vmatprep.mubr.f32.mxu0 0.0
      %1525 = vmatmul.mubr.f32.gmra.mrb[0].mxu0 %v1324
      %v1526 = vpop.f32.mrb[0].mxu0
      %v1527 = vadd.f32 0.0, %v1526
      %v1528 = vpop.f32.mrb[0].mxu0
      %1529 = vmatprep.mubr.f32.mxu0 0.0
      %1530 = vmatmul.mubr.f32.gmra.mrb[0].mxu0 %v1327
      %v1531 = vpop.f32.mrb[0].mxu0
      %v1532 = vadd.f32 0.0, %v1531
      %v1533 = vpop.f32.mrb[0].mxu0
      %1534 = vmatprep.mubr.f32.mxu0 0.0
      %1535 = vmatmul.mubr.f32.gmra.mrb[0].mxu0 %v1330
      %v1536 = vpop.f32.mrb[0].mxu0
      %v1537 = vadd.f32 0.0, %v1536
      %v1538 = vpop.f32.mrb[0].mxu0
      %1539 = vmatprep.mubr.f32.mxu0 0.0
      %1540 = vmatmul.mubr.f32.gmra.mrb[0].mxu0 %v1333
      %v1541 = vpop.f32.mrb[0].mxu0
      %v1542 = vadd.f32 0.0, %v1541
      %v1543 = vpop.f32.mrb[0].mxu0
      %1544 = vmatprep.mubr.f32.mxu0 0.0
      %1545 = vmatmul.mubr.f32.gmra.mrb[0].mxu0 %v1336
      %v1546 = vpop.f32.mrb[0].mxu0
      %v1547 = vadd.f32 0.0, %v1546
      %v1548 = vpop.f32.mrb[0].mxu0
      %1549 = vmatprep.mubr.f32.mxu0 0.0
      %1550 = vmatmul.mubr.f32.gmra.mrb[0].mxu0 %v1339
      %v1551 = vpop.f32.mrb[0].mxu0
      %v1552 = vadd.f32 0.0, %v1551
      %v1553 = vpop.f32.mrb[0].mxu0
      %1554 = vmatprep.mubr.f32.mxu0 0.0
      %1555 = vmatmul.mubr.f32.gmra.mrb[0].mxu0 %v1342
      %v1556 = vpop.f32.mrb[0].mxu0
      %v1557 = vadd.f32 0.0, %v1556
      %v1558 = vpop.f32.mrb[0].mxu0
      %1559 = vmatprep.mubr.f32.mxu0 0.0
      %1560 = vmatmul.mubr.f32.gmra.mrb[0].mxu0 %v1345
      %v1561 = vpop.f32.mrb[0].mxu0
      %v1562 = vadd.f32 0.0, %v1561
      %v1563 = vpop.f32.mrb[0].mxu0
      %1564 = vmatprep.mubr.f32.mxu0 0.0
      %1565 = vmatmul.mubr.f32.gmra.mrb[0].mxu0 %v1348
      %v1566 = vpop.f32.mrb[0].mxu0
      %v1567 = vadd.f32 0.0, %v1566
      %v1568 = vpop.f32.mrb[0].mxu0
      %1569 = vmatprep.mubr.f32.mxu0 0.0
      %1570 = vmatmul.mubr.f32.gmra.mrb[0].mxu0 %v1351
      %v1571 = vpop.f32.mrb[0].mxu0
      %v1572 = vadd.f32 0.0, %v1571
      %v1573 = vpop.f32.mrb[0].mxu0
      %1574 = vmatprep.mubr.f32.mxu0 0.0
      %1575 = vmatmul.mubr.f32.gmra.mrb[0].mxu0 %v1354
      %v1576 = vpop.f32.mrb[0].mxu0
      %v1577 = vadd.f32 0.0, %v1576
      %v1578 = vpop.f32.mrb[0].mxu0
      %1579 = vmatprep.mubr.f32.mxu0 0.0
      %1580 = vmatmul.mubr.f32.gmra.mrb[0].mxu0 %v1357
      %v1581 = vpop.f32.mrb[0].mxu0
      %v1582 = vadd.f32 0.0, %v1581
      %v1583 = vpop.f32.mrb[0].mxu0
      %1584 = vmatprep.mubr.f32.mxu0 0.0
      %1585 = vmatmul.mubr.f32.gmra.mrb[0].mxu0 %v1360
      %v1586 = vpop.f32.mrb[0].mxu0
      %v1587 = vadd.f32 0.0, %v1586
      %v1588 = vpop.f32.mrb[0].mxu0
      %1589 = vdwg.mxu0
      %v1590 = vadd.f32 %v1074, %v1432
      %v1591 = vadd.f32 %v1079, %v1437
      %v1592 = vadd.f32 %v1084, %v1442
      %v1593 = vadd.f32 %v1089, %v1447
      %v1594 = vadd.f32 %v1094, %v1452
      %v1595 = vadd.f32 %v1099, %v1457
      %v1596 = vadd.f32 %v1104, %v1462
      %v1597 = vadd.f32 %v1109, %v1467
      %v1598 = vadd.f32 %v1114, %v1472
      %v1599 = vadd.f32 %v1119, %v1477
      %v1600 = vadd.f32 %v1124, %v1482
      %v1601 = vadd.f32 %v1129, %v1487
      %v1602 = vadd.f32 %v1134, %v1492
      %v1603 = vadd.f32 %v1139, %v1497
      %v1604 = vadd.f32 %v1144, %v1502
      %v1605 = vadd.f32 %v1149, %v1507
      %v1606 = vadd.f32 %v1154, %v1512
      %v1607 = vadd.f32 %v1159, %v1517
      %v1608 = vadd.f32 %v1164, %v1522
      %v1609 = vadd.f32 %v1169, %v1527
      %v1610 = vadd.f32 %v1174, %v1532
      %v1611 = vadd.f32 %v1179, %v1537
      %v1612 = vadd.f32 %v1184, %v1542
      %v1613 = vadd.f32 %v1189, %v1547
      %v1614 = vadd.f32 %v1194, %v1552
      %v1615 = vadd.f32 %v1199, %v1557
      %v1616 = vadd.f32 %v1204, %v1562
      %v1617 = vadd.f32 %v1209, %v1567
      %v1618 = vadd.f32 %v1214, %v1572
      %v1619 = vadd.f32 %v1219, %v1577
      %v1620 = vadd.f32 %v1224, %v1582
      %v1621 = vadd.f32 %v1229, %v1587
      %v1622 = vld [vmem:[%s483] sm:$0xff]
      %v1623 = vld [vmem:[%s483 + $0x8] sm:$0xff]
      %v1624 = vld [vmem:[%s483 + $0x18] sm:$0xff]
      %v1625 = vld [vmem:[%s483 + $0x20] sm:$0xff]
      %v1626 = vld [vmem:[%s483 + $0x30] sm:$0xff]
      %v1627 = vld [vmem:[%s483 + $0x38] sm:$0xff]
      %v1628 = vld [vmem:[%s483 + $0x48] sm:$0xff]
      %v1629 = vld [vmem:[%s483 + $0x50] sm:$0xff]
      %v1630 = vld [vmem:[%s483 + $0x60] sm:$0xff]
      %v1631 = vld [vmem:[%s483 + $0x68] sm:$0xff]
      %v1632 = vld [vmem:[%s483 + $0x78] sm:$0xff]
      %v1633 = vld [vmem:[%s483 + $0x80] sm:$0xff]
      %v1634 = vld [vmem:[%s483 + $0x90] sm:$0xff]
      %v1635 = vld [vmem:[%s483 + $0x98] sm:$0xff]
      %v1636 = vld [vmem:[%s483 + $0xa8] sm:$0xff]
      %v1637 = vld [vmem:[%s483 + $0xb0] sm:$0xff]
      %v1638 = vld [vmem:[%s483 + $0xc0] sm:$0xff]
      %v1639 = vld [vmem:[%s483 + $0xc8] sm:$0xff]
      %v1640 = vld [vmem:[%s483 + $0xd8] sm:$0xff]
      %v1641 = vld [vmem:[%s483 + $0xe0] sm:$0xff]
      %v1642 = vld [vmem:[%s483 + $0xf0] sm:$0xff]
      %v1643 = vld [vmem:[%s483 + $0xf8] sm:$0xff]
      %v1644 = vld [vmem:[%s483 + $0x108] sm:$0xff]
      %v1645 = vld [vmem:[%s483 + $0x110] sm:$0xff]
      %v1646 = vld [vmem:[%s483 + $0x120] sm:$0xff]
      %v1647 = vld [vmem:[%s483 + $0x128] sm:$0xff]
      %v1648 = vld [vmem:[%s483 + $0x138] sm:$0xff]
      %v1649 = vld [vmem:[%s483 + $0x140] sm:$0xff]
      %v1650 = vld [vmem:[%s483 + $0x150] sm:$0xff]
      %v1651 = vld [vmem:[%s483 + $0x158] sm:$0xff]
      %v1652 = vld [vmem:[%s483 + $0x168] sm:$0xff]
      %v1653 = vld [vmem:[%s483 + $0x170] sm:$0xff]
      %s1654 = scalar_lea.vmem %s302, 12
      %v1655 = vld [vmem:[%s1654] sm:$0xf]
      %v1657 = vsel %vm317, %v1622, 0
      %v1660 = vsel %vm317, %v1623, 0
      %v1663 = vsel %vm317, %v1624, 0
      %v1666 = vsel %vm317, %v1625, 0
      %v1669 = vsel %vm317, %v1626, 0
      %v1672 = vsel %vm317, %v1627, 0
      %v1675 = vsel %vm317, %v1628, 0
      %v1678 = vsel %vm317, %v1629, 0
      %v1681 = vsel %vm317, %v1630, 0
      %v1684 = vsel %vm317, %v1631, 0
      %v1687 = vsel %vm317, %v1632, 0
      %v1690 = vsel %vm317, %v1633, 0
      %v1693 = vsel %vm317, %v1634, 0
      %v1696 = vsel %vm317, %v1635, 0
      %v1699 = vsel %vm317, %v1636, 0
      %v1702 = vsel %vm317, %v1637, 0
      %v1705 = vsel %vm317, %v1638, 0
      %v1708 = vsel %vm317, %v1639, 0
      %v1711 = vsel %vm317, %v1640, 0
      %v1714 = vsel %vm317, %v1641, 0
      %v1717 = vsel %vm317, %v1642, 0
      %v1720 = vsel %vm317, %v1643, 0
      %v1723 = vsel %vm317, %v1644, 0
      %v1726 = vsel %vm317, %v1645, 0
      %v1729 = vsel %vm317, %v1646, 0
      %v1732 = vsel %vm317, %v1647, 0
      %v1735 = vsel %vm317, %v1648, 0
      %v1738 = vsel %vm317, %v1649, 0
      %v1741 = vsel %vm317, %v1650, 0
      %v1744 = vsel %vm317, %v1651, 0
      %v1747 = vsel %vm317, %v1652, 0
      %v1750 = vsel %vm317, %v1653, 0
      %v1753 = vsel %vm679, %v1655, 0
      %1755 = vmatprep.subr.mxu0 0.0
      %1756 = vmatpush1.msra.mxu0 %v1753
      %1757 = vmatprep.subr.mxu0 0.0
      %1758 = vmatpush1.msra.mxu0 0.0
      %1759 = vmatprep.subr.mxu0 0.0
      %1760 = vmatpush1.msra.mxu0 0.0
      %1761 = vmatprep.subr.mxu0 0.0
      %1762 = vmatpush1.msra.mxu0 0.0
      %1763 = vmatprep.subr.mxu0 0.0
      %1764 = vmatpush1.msra.mxu0 0.0
      %1765 = vmatprep.subr.mxu0 0.0
      %1766 = vmatpush1.msra.mxu0 0.0
      %1767 = vmatprep.subr.mxu0 0.0
      %1768 = vmatpush1.msra.mxu0 0.0
      %1769 = vmatprep.subr.mxu0 0.0
      %1770 = vmatpush1.msra.mxu0 0.0
      %1771 = vmatprep.subr.mxu0 0.0
      %1772 = vmatpush1.msra.mxu0 0.0
      %1773 = vmatprep.subr.mxu0 0.0
      %1774 = vmatpush1.msra.mxu0 0.0
      %1775 = vmatprep.subr.mxu0 0.0
      %1776 = vmatpush1.msra.mxu0 0.0
      %1777 = vmatprep.subr.mxu0 0.0
      %1778 = vmatpush1.msra.mxu0 0.0
      %1779 = vmatprep.subr.mxu0 0.0
      %1780 = vmatpush1.msra.mxu0 0.0
      %1781 = vmatprep.subr.mxu0 0.0
      %1782 = vmatpush1.msra.mxu0 0.0
      %1783 = vmatprep.subr.mxu0 0.0
      %1784 = vmatpush1.msra.mxu0 0.0
      %1785 = vmatprep.subr.mxu0 0.0
      %1786 = vmatpush1.msra.mxu0 0.0
      %1787 = vmatprep.subr.mxu0 0.0
      %1788 = vmatpush1.msra.mxu0 0.0
      %1789 = vmatprep.subr.mxu0 0.0
      %1790 = vmatpush1.msra.mxu0 0.0
      %1791 = vmatprep.subr.mxu0 0.0
      %1792 = vmatpush1.msra.mxu0 0.0
      %1793 = vmatprep.subr.mxu0 0.0
      %1794 = vmatpush1.msra.mxu0 0.0
      %1795 = vmatprep.subr.mxu0 0.0
      %1796 = vmatpush1.msra.mxu0 0.0
      %1797 = vmatprep.subr.mxu0 0.0
      %1798 = vmatpush1.msra.mxu0 0.0
      %1799 = vmatprep.subr.mxu0 0.0
      %1800 = vmatpush1.msra.mxu0 0.0
      %1801 = vmatprep.subr.mxu0 0.0
      %1802 = vmatpush1.msra.mxu0 0.0
      %1803 = vmatprep.subr.mxu0 0.0
      %1804 = vmatpush1.msra.mxu0 0.0
      %1805 = vmatprep.subr.mxu0 0.0
      %1806 = vmatpush1.msra.mxu0 0.0
      %1807 = vmatprep.subr.mxu0 0.0
      %1808 = vmatpush1.msra.mxu0 0.0
      %1809 = vmatprep.subr.mxu0 0.0
      %1810 = vmatpush1.msra.mxu0 0.0
      %1811 = vmatprep.subr.mxu0 0.0
      %1812 = vmatpush1.msra.mxu0 0.0
      %1813 = vmatprep.subr.mxu0 0.0
      %1814 = vmatpush1.msra.mxu0 0.0
      %1815 = vmatprep.subr.mxu0 0.0
      %1816 = vmatpush1.msra.mxu0 0.0
      %1817 = vmatprep.subr.mxu0 0.0
      %1818 = vmatpush1.msra.mxu0 0.0
      %1819 = vmatprep.mubr.f32.mxu0 0.0
      %1820 = vmatmul.mubr.f32.gmra.mrb[0].mxu0 %v1657
      %v1821 = vpop.f32.mrb[0].mxu0
      %v1822 = vadd.f32 0.0, %v1821
      %v1823 = vpop.f32.mrb[0].mxu0
      %1824 = vmatprep.mubr.f32.mxu0 0.0
      %1825 = vmatmul.mubr.f32.gmra.mrb[0].mxu0 %v1660
      %v1826 = vpop.f32.mrb[0].mxu0
      %v1827 = vadd.f32 0.0, %v1826
      %v1828 = vpop.f32.mrb[0].mxu0
      %1829 = vmatprep.mubr.f32.mxu0 0.0
      %1830 = vmatmul.mubr.f32.gmra.mrb[0].mxu0 %v1663
      %v1831 = vpop.f32.mrb[0].mxu0
      %v1832 = vadd.f32 0.0, %v1831
      %v1833 = vpop.f32.mrb[0].mxu0
      %1834 = vmatprep.mubr.f32.mxu0 0.0
      %1835 = vmatmul.mubr.f32.gmra.mrb[0].mxu0 %v1666
      %v1836 = vpop.f32.mrb[0].mxu0
      %v1837 = vadd.f32 0.0, %v1836
      %v1838 = vpop.f32.mrb[0].mxu0
      %1839 = vmatprep.mubr.f32.mxu0 0.0
      %1840 = vmatmul.mubr.f32.gmra.mrb[0].mxu0 %v1669
      %v1841 = vpop.f32.mrb[0].mxu0
      %v1842 = vadd.f32 0.0, %v1841
      %v1843 = vpop.f32.mrb[0].mxu0
      %1844 = vmatprep.mubr.f32.mxu0 0.0
      %1845 = vmatmul.mubr.f32.gmra.mrb[0].mxu0 %v1672
      %v1846 = vpop.f32.mrb[0].mxu0
      %v1847 = vadd.f32 0.0, %v1846
      %v1848 = vpop.f32.mrb[0].mxu0
      %1849 = vmatprep.mubr.f32.mxu0 0.0
      %1850 = vmatmul.mubr.f32.gmra.mrb[0].mxu0 %v1675
      %v1851 = vpop.f32.mrb[0].mxu0
      %v1852 = vadd.f32 0.0, %v1851
      %v1853 = vpop.f32.mrb[0].mxu0
      %1854 = vmatprep.mubr.f32.mxu0 0.0
      %1855 = vmatmul.mubr.f32.gmra.mrb[0].mxu0 %v1678
      %v1856 = vpop.f32.mrb[0].mxu0
      %v1857 = vadd.f32 0.0, %v1856
      %v1858 = vpop.f32.mrb[0].mxu0
      %1859 = vmatprep.mubr.f32.mxu0 0.0
      %1860 = vmatmul.mubr.f32.gmra.mrb[0].mxu0 %v1681
      %v1861 = vpop.f32.mrb[0].mxu0
      %v1862 = vadd.f32 0.0, %v1861
      %v1863 = vpop.f32.mrb[0].mxu0
      %1864 = vmatprep.mubr.f32.mxu0 0.0
      %1865 = vmatmul.mubr.f32.gmra.mrb[0].mxu0 %v1684
      %v1866 = vpop.f32.mrb[0].mxu0
      %v1867 = vadd.f32 0.0, %v1866
      %v1868 = vpop.f32.mrb[0].mxu0
      %1869 = vmatprep.mubr.f32.mxu0 0.0
      %1870 = vmatmul.mubr.f32.gmra.mrb[0].mxu0 %v1687
      %v1871 = vpop.f32.mrb[0].mxu0
      %v1872 = vadd.f32 0.0, %v1871
      %v1873 = vpop.f32.mrb[0].mxu0
      %1874 = vmatprep.mubr.f32.mxu0 0.0
      %1875 = vmatmul.mubr.f32.gmra.mrb[0].mxu0 %v1690
      %v1876 = vpop.f32.mrb[0].mxu0
      %v1877 = vadd.f32 0.0, %v1876
      %v1878 = vpop.f32.mrb[0].mxu0
      %1879 = vmatprep.mubr.f32.mxu0 0.0
      %1880 = vmatmul.mubr.f32.gmra.mrb[0].mxu0 %v1693
      %v1881 = vpop.f32.mrb[0].mxu0
      %v1882 = vadd.f32 0.0, %v1881
      %v1883 = vpop.f32.mrb[0].mxu0
      %1884 = vmatprep.mubr.f32.mxu0 0.0
      %1885 = vmatmul.mubr.f32.gmra.mrb[0].mxu0 %v1696
      %v1886 = vpop.f32.mrb[0].mxu0
      %v1887 = vadd.f32 0.0, %v1886
      %v1888 = vpop.f32.mrb[0].mxu0
      %1889 = vmatprep.mubr.f32.mxu0 0.0
      %1890 = vmatmul.mubr.f32.gmra.mrb[0].mxu0 %v1699
      %v1891 = vpop.f32.mrb[0].mxu0
      %v1892 = vadd.f32 0.0, %v1891
      %v1893 = vpop.f32.mrb[0].mxu0
      %1894 = vmatprep.mubr.f32.mxu0 0.0
      %1895 = vmatmul.mubr.f32.gmra.mrb[0].mxu0 %v1702
      %v1896 = vpop.f32.mrb[0].mxu0
      %v1897 = vadd.f32 0.0, %v1896
      %v1898 = vpop.f32.mrb[0].mxu0
      %1899 = vmatprep.mubr.f32.mxu0 0.0
      %1900 = vmatmul.mubr.f32.gmra.mrb[0].mxu0 %v1705
      %v1901 = vpop.f32.mrb[0].mxu0
      %v1902 = vadd.f32 0.0, %v1901
      %v1903 = vpop.f32.mrb[0].mxu0
      %1904 = vmatprep.mubr.f32.mxu0 0.0
      %1905 = vmatmul.mubr.f32.gmra.mrb[0].mxu0 %v1708
      %v1906 = vpop.f32.mrb[0].mxu0
      %v1907 = vadd.f32 0.0, %v1906
      %v1908 = vpop.f32.mrb[0].mxu0
      %1909 = vmatprep.mubr.f32.mxu0 0.0
      %1910 = vmatmul.mubr.f32.gmra.mrb[0].mxu0 %v1711
      %v1911 = vpop.f32.mrb[0].mxu0
      %v1912 = vadd.f32 0.0, %v1911
      %v1913 = vpop.f32.mrb[0].mxu0
      %1914 = vmatprep.mubr.f32.mxu0 0.0
      %1915 = vmatmul.mubr.f32.gmra.mrb[0].mxu0 %v1714
      %v1916 = vpop.f32.mrb[0].mxu0
      %v1917 = vadd.f32 0.0, %v1916
      %v1918 = vpop.f32.mrb[0].mxu0
      %1919 = vmatprep.mubr.f32.mxu0 0.0
      %1920 = vmatmul.mubr.f32.gmra.mrb[0].mxu0 %v1717
      %v1921 = vpop.f32.mrb[0].mxu0
      %v1922 = vadd.f32 0.0, %v1921
      %v1923 = vpop.f32.mrb[0].mxu0
      %1924 = vmatprep.mubr.f32.mxu0 0.0
      %1925 = vmatmul.mubr.f32.gmra.mrb[0].mxu0 %v1720
      %v1926 = vpop.f32.mrb[0].mxu0
      %v1927 = vadd.f32 0.0, %v1926
      %v1928 = vpop.f32.mrb[0].mxu0
      %1929 = vmatprep.mubr.f32.mxu0 0.0
      %1930 = vmatmul.mubr.f32.gmra.mrb[0].mxu0 %v1723
      %v1931 = vpop.f32.mrb[0].mxu0
      %v1932 = vadd.f32 0.0, %v1931
      %v1933 = vpop.f32.mrb[0].mxu0
      %1934 = vmatprep.mubr.f32.mxu0 0.0
      %1935 = vmatmul.mubr.f32.gmra.mrb[0].mxu0 %v1726
      %v1936 = vpop.f32.mrb[0].mxu0
      %v1937 = vadd.f32 0.0, %v1936
      %v1938 = vpop.f32.mrb[0].mxu0
      %1939 = vmatprep.mubr.f32.mxu0 0.0
      %1940 = vmatmul.mubr.f32.gmra.mrb[0].mxu0 %v1729
      %v1941 = vpop.f32.mrb[0].mxu0
      %v1942 = vadd.f32 0.0, %v1941
      %v1943 = vpop.f32.mrb[0].mxu0
      %1944 = vmatprep.mubr.f32.mxu0 0.0
      %1945 = vmatmul.mubr.f32.gmra.mrb[0].mxu0 %v1732
      %v1946 = vpop.f32.mrb[0].mxu0
      %v1947 = vadd.f32 0.0, %v1946
      %v1948 = vpop.f32.mrb[0].mxu0
      %1949 = vmatprep.mubr.f32.mxu0 0.0
      %1950 = vmatmul.mubr.f32.gmra.mrb[0].mxu0 %v1735
      %v1951 = vpop.f32.mrb[0].mxu0
      %v1952 = vadd.f32 0.0, %v1951
      %v1953 = vpop.f32.mrb[0].mxu0
      %1954 = vmatprep.mubr.f32.mxu0 0.0
      %1955 = vmatmul.mubr.f32.gmra.mrb[0].mxu0 %v1738
      %v1956 = vpop.f32.mrb[0].mxu0
      %v1957 = vadd.f32 0.0, %v1956
      %v1958 = vpop.f32.mrb[0].mxu0
      %1959 = vmatprep.mubr.f32.mxu0 0.0
      %1960 = vmatmul.mubr.f32.gmra.mrb[0].mxu0 %v1741
      %v1961 = vpop.f32.mrb[0].mxu0
      %v1962 = vadd.f32 0.0, %v1961
      %v1963 = vpop.f32.mrb[0].mxu0
      %1964 = vmatprep.mubr.f32.mxu0 0.0
      %1965 = vmatmul.mubr.f32.gmra.mrb[0].mxu0 %v1744
      %v1966 = vpop.f32.mrb[0].mxu0
      %v1967 = vadd.f32 0.0, %v1966
      %v1968 = vpop.f32.mrb[0].mxu0
      %1969 = vmatprep.mubr.f32.mxu0 0.0
      %1970 = vmatmul.mubr.f32.gmra.mrb[0].mxu0 %v1747
      %v1971 = vpop.f32.mrb[0].mxu0
      %v1972 = vadd.f32 0.0, %v1971
      %v1973 = vpop.f32.mrb[0].mxu0
      %1974 = vmatprep.mubr.f32.mxu0 0.0
      %1975 = vmatmul.mubr.f32.gmra.mrb[0].mxu0 %v1750
      %v1976 = vpop.f32.mrb[0].mxu0
      %v1977 = vadd.f32 0.0, %v1976
      %v1978 = vpop.f32.mrb[0].mxu0
      %1979 = vdwg.mxu0
      %v1980 = vadd.f32 %v1590, %v1822
      %v1981 = vadd.f32 %v1591, %v1827
      %v1982 = vadd.f32 %v1592, %v1832
      %v1983 = vadd.f32 %v1593, %v1837
      %v1984 = vadd.f32 %v1594, %v1842
      %v1985 = vadd.f32 %v1595, %v1847
      %v1986 = vadd.f32 %v1596, %v1852
      %v1987 = vadd.f32 %v1597, %v1857
      %v1988 = vadd.f32 %v1598, %v1862
      %v1989 = vadd.f32 %v1599, %v1867
      %v1990 = vadd.f32 %v1600, %v1872
      %v1991 = vadd.f32 %v1601, %v1877
      %v1992 = vadd.f32 %v1602, %v1882
      %v1993 = vadd.f32 %v1603, %v1887
      %v1994 = vadd.f32 %v1604, %v1892
      %v1995 = vadd.f32 %v1605, %v1897
      %v1996 = vadd.f32 %v1606, %v1902
      %v1997 = vadd.f32 %v1607, %v1907
      %v1998 = vadd.f32 %v1608, %v1912
      %v1999 = vadd.f32 %v1609, %v1917
      %v2000 = vadd.f32 %v1610, %v1922
      %v2001 = vadd.f32 %v1611, %v1927
      %v2002 = vadd.f32 %v1612, %v1932
      %v2003 = vadd.f32 %v1613, %v1937
      %v2004 = vadd.f32 %v1614, %v1942
      %v2005 = vadd.f32 %v1615, %v1947
      %v2006 = vadd.f32 %v1616, %v1952
      %v2007 = vadd.f32 %v1617, %v1957
      %v2008 = vadd.f32 %v1618, %v1962
      %v2009 = vadd.f32 %v1619, %v1967
      %v2010 = vadd.f32 %v1620, %v1972
      %v2011 = vadd.f32 %v1621, %v1977
      %v2012 = vld [vmem:[%s483 + $0x1] sm:$0xff]
      %v2013 = vld [vmem:[%s483 + $0x9] sm:$0xff]
      %v2014 = vld [vmem:[%s483 + $0x19] sm:$0xff]
      %v2015 = vld [vmem:[%s483 + $0x21] sm:$0xff]
      %v2016 = vld [vmem:[%s483 + $0x31] sm:$0xff]
      %v2017 = vld [vmem:[%s483 + $0x39] sm:$0xff]
      %v2018 = vld [vmem:[%s483 + $0x49] sm:$0xff]
      %v2019 = vld [vmem:[%s483 + $0x51] sm:$0xff]
      %v2020 = vld [vmem:[%s483 + $0x61] sm:$0xff]
      %v2021 = vld [vmem:[%s483 + $0x69] sm:$0xff]
      %v2022 = vld [vmem:[%s483 + $0x79] sm:$0xff]
      %v2023 = vld [vmem:[%s483 + $0x81] sm:$0xff]
      %v2024 = vld [vmem:[%s483 + $0x91] sm:$0xff]
      %v2025 = vld [vmem:[%s483 + $0x99] sm:$0xff]
      %v2026 = vld [vmem:[%s483 + $0xa9] sm:$0xff]
      %v2027 = vld [vmem:[%s483 + $0xb1] sm:$0xff]
      %v2028 = vld [vmem:[%s483 + $0xc1] sm:$0xff]
      %v2029 = vld [vmem:[%s483 + $0xc9] sm:$0xff]
      %v2030 = vld [vmem:[%s483 + $0xd9] sm:$0xff]
      %v2031 = vld [vmem:[%s483 + $0xe1] sm:$0xff]
      %v2032 = vld [vmem:[%s483 + $0xf1] sm:$0xff]
      %v2033 = vld [vmem:[%s483 + $0xf9] sm:$0xff]
      %v2034 = vld [vmem:[%s483 + $0x109] sm:$0xff]
      %v2035 = vld [vmem:[%s483 + $0x111] sm:$0xff]
      %v2036 = vld [vmem:[%s483 + $0x121] sm:$0xff]
      %v2037 = vld [vmem:[%s483 + $0x129] sm:$0xff]
      %v2038 = vld [vmem:[%s483 + $0x139] sm:$0xff]
      %v2039 = vld [vmem:[%s483 + $0x141] sm:$0xff]
      %v2040 = vld [vmem:[%s483 + $0x151] sm:$0xff]
      %v2041 = vld [vmem:[%s483 + $0x159] sm:$0xff]
      %v2042 = vld [vmem:[%s483 + $0x169] sm:$0xff]
      %v2043 = vld [vmem:[%s483 + $0x171] sm:$0xff]
      %s2044 = scalar_lea.vmem %s302, 16
      %v2045 = vld [vmem:[%s2044] sm:$0xf]
      %v2047 = vsel %vm317, %v2012, 0
      %v2050 = vsel %vm317, %v2013, 0
      %v2053 = vsel %vm317, %v2014, 0
      %v2056 = vsel %vm317, %v2015, 0
      %v2059 = vsel %vm317, %v2016, 0
      %v2062 = vsel %vm317, %v2017, 0
      %v2065 = vsel %vm317, %v2018, 0
      %v2068 = vsel %vm317, %v2019, 0
      %v2071 = vsel %vm317, %v2020, 0
      %v2074 = vsel %vm317, %v2021, 0
      %v2077 = vsel %vm317, %v2022, 0
      %v2080 = vsel %vm317, %v2023, 0
      %v2083 = vsel %vm317, %v2024, 0
      %v2086 = vsel %vm317, %v2025, 0
      %v2089 = vsel %vm317, %v2026, 0
      %v2092 = vsel %vm317, %v2027, 0
      %v2095 = vsel %vm317, %v2028, 0
      %v2098 = vsel %vm317, %v2029, 0
      %v2101 = vsel %vm317, %v2030, 0
      %v2104 = vsel %vm317, %v2031, 0
      %v2107 = vsel %vm317, %v2032, 0
      %v2110 = vsel %vm317, %v2033, 0
      %v2113 = vsel %vm317, %v2034, 0
      %v2116 = vsel %vm317, %v2035, 0
      %v2119 = vsel %vm317, %v2036, 0
      %v2122 = vsel %vm317, %v2037, 0
      %v2125 = vsel %vm317, %v2038, 0
      %v2128 = vsel %vm317, %v2039, 0
      %v2131 = vsel %vm317, %v2040, 0
      %v2134 = vsel %vm317, %v2041, 0
      %v2137 = vsel %vm317, %v2042, 0
      %v2140 = vsel %vm317, %v2043, 0
      %v2143 = vsel %vm679, %v2045, 0
      %2145 = vmatprep.subr.mxu0 0.0
      %2146 = vmatpush1.msra.mxu0 %v2143
      %2147 = vmatprep.subr.mxu0 0.0
      %2148 = vmatpush1.msra.mxu0 0.0
      %2149 = vmatprep.subr.mxu0 0.0
      %2150 = vmatpush1.msra.mxu0 0.0
      %2151 = vmatprep.subr.mxu0 0.0
      %2152 = vmatpush1.msra.mxu0 0.0
      %2153 = vmatprep.subr.mxu0 0.0
      %2154 = vmatpush1.msra.mxu0 0.0
      %2155 = vmatprep.subr.mxu0 0.0
      %2156 = vmatpush1.msra.mxu0 0.0
      %2157 = vmatprep.subr.mxu0 0.0
      %2158 = vmatpush1.msra.mxu0 0.0
      %2159 = vmatprep.subr.mxu0 0.0
      %2160 = vmatpush1.msra.mxu0 0.0
      %2161 = vmatprep.subr.mxu0 0.0
      %2162 = vmatpush1.msra.mxu0 0.0
      %2163 = vmatprep.subr.mxu0 0.0
      %2164 = vmatpush1.msra.mxu0 0.0
      %2165 = vmatprep.subr.mxu0 0.0
      %2166 = vmatpush1.msra.mxu0 0.0
      %2167 = vmatprep.subr.mxu0 0.0
      %2168 = vmatpush1.msra.mxu0 0.0
      %2169 = vmatprep.subr.mxu0 0.0
      %2170 = vmatpush1.msra.mxu0 0.0
      %2171 = vmatprep.subr.mxu0 0.0
      %2172 = vmatpush1.msra.mxu0 0.0
      %2173 = vmatprep.subr.mxu0 0.0
      %2174 = vmatpush1.msra.mxu0 0.0
      %2175 = vmatprep.subr.mxu0 0.0
      %2176 = vmatpush1.msra.mxu0 0.0
      %2177 = vmatprep.subr.mxu0 0.0
      %2178 = vmatpush1.msra.mxu0 0.0
      %2179 = vmatprep.subr.mxu0 0.0
      %2180 = vmatpush1.msra.mxu0 0.0
      %2181 = vmatprep.subr.mxu0 0.0
      %2182 = vmatpush1.msra.mxu0 0.0
      %2183 = vmatprep.subr.mxu0 0.0
      %2184 = vmatpush1.msra.mxu0 0.0
      %2185 = vmatprep.subr.mxu0 0.0
      %2186 = vmatpush1.msra.mxu0 0.0
      %2187 = vmatprep.subr.mxu0 0.0
      %2188 = vmatpush1.msra.mxu0 0.0
      %2189 = vmatprep.subr.mxu0 0.0
      %2190 = vmatpush1.msra.mxu0 0.0
      %2191 = vmatprep.subr.mxu0 0.0
      %2192 = vmatpush1.msra.mxu0 0.0
      %2193 = vmatprep.subr.mxu0 0.0
      %2194 = vmatpush1.msra.mxu0 0.0
      %2195 = vmatprep.subr.mxu0 0.0
      %2196 = vmatpush1.msra.mxu0 0.0
      %2197 = vmatprep.subr.mxu0 0.0
      %2198 = vmatpush1.msra.mxu0 0.0
      %2199 = vmatprep.subr.mxu0 0.0
      %2200 = vmatpush1.msra.mxu0 0.0
      %2201 = vmatprep.subr.mxu0 0.0
      %2202 = vmatpush1.msra.mxu0 0.0
      %2203 = vmatprep.subr.mxu0 0.0
      %2204 = vmatpush1.msra.mxu0 0.0
      %2205 = vmatprep.subr.mxu0 0.0
      %2206 = vmatpush1.msra.mxu0 0.0
      %2207 = vmatprep.subr.mxu0 0.0
      %2208 = vmatpush1.msra.mxu0 0.0
      %2209 = vmatprep.mubr.f32.mxu0 0.0
      %2210 = vmatmul.mubr.f32.gmra.mrb[0].mxu0 %v2047
      %v2211 = vpop.f32.mrb[0].mxu0
      %v2212 = vadd.f32 0.0, %v2211
      %v2213 = vpop.f32.mrb[0].mxu0
      %2214 = vmatprep.mubr.f32.mxu0 0.0
      %2215 = vmatmul.mubr.f32.gmra.mrb[0].mxu0 %v2050
      %v2216 = vpop.f32.mrb[0].mxu0
      %v2217 = vadd.f32 0.0, %v2216
      %v2218 = vpop.f32.mrb[0].mxu0
      %2219 = vmatprep.mubr.f32.mxu0 0.0
      %2220 = vmatmul.mubr.f32.gmra.mrb[0].mxu0 %v2053
      %v2221 = vpop.f32.mrb[0].mxu0
      %v2222 = vadd.f32 0.0, %v2221
      %v2223 = vpop.f32.mrb[0].mxu0
      %2224 = vmatprep.mubr.f32.mxu0 0.0
      %2225 = vmatmul.mubr.f32.gmra.mrb[0].mxu0 %v2056
      %v2226 = vpop.f32.mrb[0].mxu0
      %v2227 = vadd.f32 0.0, %v2226
      %v2228 = vpop.f32.mrb[0].mxu0
      %2229 = vmatprep.mubr.f32.mxu0 0.0
      %2230 = vmatmul.mubr.f32.gmra.mrb[0].mxu0 %v2059
      %v2231 = vpop.f32.mrb[0].mxu0
      %v2232 = vadd.f32 0.0, %v2231
      %v2233 = vpop.f32.mrb[0].mxu0
      %2234 = vmatprep.mubr.f32.mxu0 0.0
      %2235 = vmatmul.mubr.f32.gmra.mrb[0].mxu0 %v2062
      %v2236 = vpop.f32.mrb[0].mxu0
      %v2237 = vadd.f32 0.0, %v2236
      %v2238 = vpop.f32.mrb[0].mxu0
      %2239 = vmatprep.mubr.f32.mxu0 0.0
      %2240 = vmatmul.mubr.f32.gmra.mrb[0].mxu0 %v2065
      %v2241 = vpop.f32.mrb[0].mxu0
      %v2242 = vadd.f32 0.0, %v2241
      %v2243 = vpop.f32.mrb[0].mxu0
      %2244 = vmatprep.mubr.f32.mxu0 0.0
      %2245 = vmatmul.mubr.f32.gmra.mrb[0].mxu0 %v2068
      %v2246 = vpop.f32.mrb[0].mxu0
      %v2247 = vadd.f32 0.0, %v2246
      %v2248 = vpop.f32.mrb[0].mxu0
      %2249 = vmatprep.mubr.f32.mxu0 0.0
      %2250 = vmatmul.mubr.f32.gmra.mrb[0].mxu0 %v2071
      %v2251 = vpop.f32.mrb[0].mxu0
      %v2252 = vadd.f32 0.0, %v2251
      %v2253 = vpop.f32.mrb[0].mxu0
      %2254 = vmatprep.mubr.f32.mxu0 0.0
      %2255 = vmatmul.mubr.f32.gmra.mrb[0].mxu0 %v2074
      %v2256 = vpop.f32.mrb[0].mxu0
      %v2257 = vadd.f32 0.0, %v2256
      %v2258 = vpop.f32.mrb[0].mxu0
      %2259 = vmatprep.mubr.f32.mxu0 0.0
      %2260 = vmatmul.mubr.f32.gmra.mrb[0].mxu0 %v2077
      %v2261 = vpop.f32.mrb[0].mxu0
      %v2262 = vadd.f32 0.0, %v2261
      %v2263 = vpop.f32.mrb[0].mxu0
      %2264 = vmatprep.mubr.f32.mxu0 0.0
      %2265 = vmatmul.mubr.f32.gmra.mrb[0].mxu0 %v2080
      %v2266 = vpop.f32.mrb[0].mxu0
      %v2267 = vadd.f32 0.0, %v2266
      %v2268 = vpop.f32.mrb[0].mxu0
      %2269 = vmatprep.mubr.f32.mxu0 0.0
      %2270 = vmatmul.mubr.f32.gmra.mrb[0].mxu0 %v2083
      %v2271 = vpop.f32.mrb[0].mxu0
      %v2272 = vadd.f32 0.0, %v2271
      %v2273 = vpop.f32.mrb[0].mxu0
      %2274 = vmatprep.mubr.f32.mxu0 0.0
      %2275 = vmatmul.mubr.f32.gmra.mrb[0].mxu0 %v2086
      %v2276 = vpop.f32.mrb[0].mxu0
      %v2277 = vadd.f32 0.0, %v2276
      %v2278 = vpop.f32.mrb[0].mxu0
      %2279 = vmatprep.mubr.f32.mxu0 0.0
      %2280 = vmatmul.mubr.f32.gmra.mrb[0].mxu0 %v2089
      %v2281 = vpop.f32.mrb[0].mxu0
      %v2282 = vadd.f32 0.0, %v2281
      %v2283 = vpop.f32.mrb[0].mxu0
      %2284 = vmatprep.mubr.f32.mxu0 0.0
      %2285 = vmatmul.mubr.f32.gmra.mrb[0].mxu0 %v2092
      %v2286 = vpop.f32.mrb[0].mxu0
      %v2287 = vadd.f32 0.0, %v2286
      %v2288 = vpop.f32.mrb[0].mxu0
      %2289 = vmatprep.mubr.f32.mxu0 0.0
      %2290 = vmatmul.mubr.f32.gmra.mrb[0].mxu0 %v2095
      %v2291 = vpop.f32.mrb[0].mxu0
      %v2292 = vadd.f32 0.0, %v2291
      %v2293 = vpop.f32.mrb[0].mxu0
      %2294 = vmatprep.mubr.f32.mxu0 0.0
      %2295 = vmatmul.mubr.f32.gmra.mrb[0].mxu0 %v2098
      %v2296 = vpop.f32.mrb[0].mxu0
      %v2297 = vadd.f32 0.0, %v2296
      %v2298 = vpop.f32.mrb[0].mxu0
      %2299 = vmatprep.mubr.f32.mxu0 0.0
      %2300 = vmatmul.mubr.f32.gmra.mrb[0].mxu0 %v2101
      %v2301 = vpop.f32.mrb[0].mxu0
      %v2302 = vadd.f32 0.0, %v2301
      %v2303 = vpop.f32.mrb[0].mxu0
      %2304 = vmatprep.mubr.f32.mxu0 0.0
      %2305 = vmatmul.mubr.f32.gmra.mrb[0].mxu0 %v2104
      %v2306 = vpop.f32.mrb[0].mxu0
      %v2307 = vadd.f32 0.0, %v2306
      %v2308 = vpop.f32.mrb[0].mxu0
      %2309 = vmatprep.mubr.f32.mxu0 0.0
      %2310 = vmatmul.mubr.f32.gmra.mrb[0].mxu0 %v2107
      %v2311 = vpop.f32.mrb[0].mxu0
      %v2312 = vadd.f32 0.0, %v2311
      %v2313 = vpop.f32.mrb[0].mxu0
      %2314 = vmatprep.mubr.f32.mxu0 0.0
      %2315 = vmatmul.mubr.f32.gmra.mrb[0].mxu0 %v2110
      %v2316 = vpop.f32.mrb[0].mxu0
      %v2317 = vadd.f32 0.0, %v2316
      %v2318 = vpop.f32.mrb[0].mxu0
      %2319 = vmatprep.mubr.f32.mxu0 0.0
      %2320 = vmatmul.mubr.f32.gmra.mrb[0].mxu0 %v2113
      %v2321 = vpop.f32.mrb[0].mxu0
      %v2322 = vadd.f32 0.0, %v2321
      %v2323 = vpop.f32.mrb[0].mxu0
      %2324 = vmatprep.mubr.f32.mxu0 0.0
      %2325 = vmatmul.mubr.f32.gmra.mrb[0].mxu0 %v2116
      %v2326 = vpop.f32.mrb[0].mxu0
      %v2327 = vadd.f32 0.0, %v2326
      %v2328 = vpop.f32.mrb[0].mxu0
      %2329 = vmatprep.mubr.f32.mxu0 0.0
      %2330 = vmatmul.mubr.f32.gmra.mrb[0].mxu0 %v2119
      %v2331 = vpop.f32.mrb[0].mxu0
      %v2332 = vadd.f32 0.0, %v2331
      %v2333 = vpop.f32.mrb[0].mxu0
      %2334 = vmatprep.mubr.f32.mxu0 0.0
      %2335 = vmatmul.mubr.f32.gmra.mrb[0].mxu0 %v2122
      %v2336 = vpop.f32.mrb[0].mxu0
      %v2337 = vadd.f32 0.0, %v2336
      %v2338 = vpop.f32.mrb[0].mxu0
      %2339 = vmatprep.mubr.f32.mxu0 0.0
      %2340 = vmatmul.mubr.f32.gmra.mrb[0].mxu0 %v2125
      %v2341 = vpop.f32.mrb[0].mxu0
      %v2342 = vadd.f32 0.0, %v2341
      %v2343 = vpop.f32.mrb[0].mxu0
      %2344 = vmatprep.mubr.f32.mxu0 0.0
      %2345 = vmatmul.mubr.f32.gmra.mrb[0].mxu0 %v2128
      %v2346 = vpop.f32.mrb[0].mxu0
      %v2347 = vadd.f32 0.0, %v2346
      %v2348 = vpop.f32.mrb[0].mxu0
      %2349 = vmatprep.mubr.f32.mxu0 0.0
      %2350 = vmatmul.mubr.f32.gmra.mrb[0].mxu0 %v2131
      %v2351 = vpop.f32.mrb[0].mxu0
      %v2352 = vadd.f32 0.0, %v2351
      %v2353 = vpop.f32.mrb[0].mxu0
      %2354 = vmatprep.mubr.f32.mxu0 0.0
      %2355 = vmatmul.mubr.f32.gmra.mrb[0].mxu0 %v2134
      %v2356 = vpop.f32.mrb[0].mxu0
      %v2357 = vadd.f32 0.0, %v2356
      %v2358 = vpop.f32.mrb[0].mxu0
      %2359 = vmatprep.mubr.f32.mxu0 0.0
      %2360 = vmatmul.mubr.f32.gmra.mrb[0].mxu0 %v2137
      %v2361 = vpop.f32.mrb[0].mxu0
      %v2362 = vadd.f32 0.0, %v2361
      %v2363 = vpop.f32.mrb[0].mxu0
      %2364 = vmatprep.mubr.f32.mxu0 0.0
      %2365 = vmatmul.mubr.f32.gmra.mrb[0].mxu0 %v2140
      %v2366 = vpop.f32.mrb[0].mxu0
      %v2367 = vadd.f32 0.0, %v2366
      %v2368 = vpop.f32.mrb[0].mxu0
      %2369 = vdwg.mxu0
      %v2370 = vadd.f32 %v1980, %v2212
      %v2371 = vadd.f32 %v1981, %v2217
      %v2372 = vadd.f32 %v1982, %v2222
      %v2373 = vadd.f32 %v1983, %v2227
      %v2374 = vadd.f32 %v1984, %v2232
      %v2375 = vadd.f32 %v1985, %v2237
      %v2376 = vadd.f32 %v1986, %v2242
      %v2377 = vadd.f32 %v1987, %v2247
      %v2378 = vadd.f32 %v1988, %v2252
      %v2379 = vadd.f32 %v1989, %v2257
      %v2380 = vadd.f32 %v1990, %v2262
      %v2381 = vadd.f32 %v1991, %v2267
      %v2382 = vadd.f32 %v1992, %v2272
      %v2383 = vadd.f32 %v1993, %v2277
      %v2384 = vadd.f32 %v1994, %v2282
      %v2385 = vadd.f32 %v1995, %v2287
      %v2386 = vadd.f32 %v1996, %v2292
      %v2387 = vadd.f32 %v1997, %v2297
      %v2388 = vadd.f32 %v1998, %v2302
      %v2389 = vadd.f32 %v1999, %v2307
      %v2390 = vadd.f32 %v2000, %v2312
      %v2391 = vadd.f32 %v2001, %v2317
      %v2392 = vadd.f32 %v2002, %v2322
      %v2393 = vadd.f32 %v2003, %v2327
      %v2394 = vadd.f32 %v2004, %v2332
      %v2395 = vadd.f32 %v2005, %v2337
      %v2396 = vadd.f32 %v2006, %v2342
      %v2397 = vadd.f32 %v2007, %v2347
      %v2398 = vadd.f32 %v2008, %v2352
      %v2399 = vadd.f32 %v2009, %v2357
      %v2400 = vadd.f32 %v2010, %v2362
      %v2401 = vadd.f32 %v2011, %v2367
      %v2402 = vld [vmem:[%s483 + $0x2] sm:$0xff]
      %v2403 = vld [vmem:[%s483 + $0xa] sm:$0xff]
      %v2404 = vld [vmem:[%s483 + $0x1a] sm:$0xff]
      %v2405 = vld [vmem:[%s483 + $0x22] sm:$0xff]
      %v2406 = vld [vmem:[%s483 + $0x32] sm:$0xff]
      %v2407 = vld [vmem:[%s483 + $0x3a] sm:$0xff]
      %v2408 = vld [vmem:[%s483 + $0x4a] sm:$0xff]
      %v2409 = vld [vmem:[%s483 + $0x52] sm:$0xff]
      %v2410 = vld [vmem:[%s483 + $0x62] sm:$0xff]
      %v2411 = vld [vmem:[%s483 + $0x6a] sm:$0xff]
      %v2412 = vld [vmem:[%s483 + $0x7a] sm:$0xff]
      %v2413 = vld [vmem:[%s483 + $0x82] sm:$0xff]
      %v2414 = vld [vmem:[%s483 + $0x92] sm:$0xff]
      %v2415 = vld [vmem:[%s483 + $0x9a] sm:$0xff]
      %v2416 = vld [vmem:[%s483 + $0xaa] sm:$0xff]
      %v2417 = vld [vmem:[%s483 + $0xb2] sm:$0xff]
      %v2418 = vld [vmem:[%s483 + $0xc2] sm:$0xff]
      %v2419 = vld [vmem:[%s483 + $0xca] sm:$0xff]
      %v2420 = vld [vmem:[%s483 + $0xda] sm:$0xff]
      %v2421 = vld [vmem:[%s483 + $0xe2] sm:$0xff]
      %v2422 = vld [vmem:[%s483 + $0xf2] sm:$0xff]
      %v2423 = vld [vmem:[%s483 + $0xfa] sm:$0xff]
      %v2424 = vld [vmem:[%s483 + $0x10a] sm:$0xff]
      %v2425 = vld [vmem:[%s483 + $0x112] sm:$0xff]
      %v2426 = vld [vmem:[%s483 + $0x122] sm:$0xff]
      %v2427 = vld [vmem:[%s483 + $0x12a] sm:$0xff]
      %v2428 = vld [vmem:[%s483 + $0x13a] sm:$0xff]
      %v2429 = vld [vmem:[%s483 + $0x142] sm:$0xff]
      %v2430 = vld [vmem:[%s483 + $0x152] sm:$0xff]
      %v2431 = vld [vmem:[%s483 + $0x15a] sm:$0xff]
      %v2432 = vld [vmem:[%s483 + $0x16a] sm:$0xff]
      %v2433 = vld [vmem:[%s483 + $0x172] sm:$0xff]
      %s2434 = scalar_lea.vmem %s302, 20
      %v2435 = vld [vmem:[%s2434] sm:$0xf]
      %v2437 = vsel %vm317, %v2402, 0
      %v2440 = vsel %vm317, %v2403, 0
      %v2443 = vsel %vm317, %v2404, 0
      %v2446 = vsel %vm317, %v2405, 0
      %v2449 = vsel %vm317, %v2406, 0
      %v2452 = vsel %vm317, %v2407, 0
      %v2455 = vsel %vm317, %v2408, 0
      %v2458 = vsel %vm317, %v2409, 0
      %v2461 = vsel %vm317, %v2410, 0
      %v2464 = vsel %vm317, %v2411, 0
      %v2467 = vsel %vm317, %v2412, 0
      %v2470 = vsel %vm317, %v2413, 0
      %v2473 = vsel %vm317, %v2414, 0
      %v2476 = vsel %vm317, %v2415, 0
      %v2479 = vsel %vm317, %v2416, 0
      %v2482 = vsel %vm317, %v2417, 0
      %v2485 = vsel %vm317, %v2418, 0
      %v2488 = vsel %vm317, %v2419, 0
      %v2491 = vsel %vm317, %v2420, 0
      %v2494 = vsel %vm317, %v2421, 0
      %v2497 = vsel %vm317, %v2422, 0
      %v2500 = vsel %vm317, %v2423, 0
      %v2503 = vsel %vm317, %v2424, 0
      %v2506 = vsel %vm317, %v2425, 0
      %v2509 = vsel %vm317, %v2426, 0
      %v2512 = vsel %vm317, %v2427, 0
      %v2515 = vsel %vm317, %v2428, 0
      %v2518 = vsel %vm317, %v2429, 0
      %v2521 = vsel %vm317, %v2430, 0
      %v2524 = vsel %vm317, %v2431, 0
      %v2527 = vsel %vm317, %v2432, 0
      %v2530 = vsel %vm317, %v2433, 0
      %v2533 = vsel %vm679, %v2435, 0
      %2535 = vmatprep.subr.mxu0 0.0
      %2536 = vmatpush1.msra.mxu0 %v2533
      %2537 = vmatprep.subr.mxu0 0.0
      %2538 = vmatpush1.msra.mxu0 0.0
      %2539 = vmatprep.subr.mxu0 0.0
      %2540 = vmatpush1.msra.mxu0 0.0
      %2541 = vmatprep.subr.mxu0 0.0
      %2542 = vmatpush1.msra.mxu0 0.0
      %2543 = vmatprep.subr.mxu0 0.0
      %2544 = vmatpush1.msra.mxu0 0.0
      %2545 = vmatprep.subr.mxu0 0.0
      %2546 = vmatpush1.msra.mxu0 0.0
      %2547 = vmatprep.subr.mxu0 0.0
      %2548 = vmatpush1.msra.mxu0 0.0
      %2549 = vmatprep.subr.mxu0 0.0
      %2550 = vmatpush1.msra.mxu0 0.0
      %2551 = vmatprep.subr.mxu0 0.0
      %2552 = vmatpush1.msra.mxu0 0.0
      %2553 = vmatprep.subr.mxu0 0.0
      %2554 = vmatpush1.msra.mxu0 0.0
      %2555 = vmatprep.subr.mxu0 0.0
      %2556 = vmatpush1.msra.mxu0 0.0
      %2557 = vmatprep.subr.mxu0 0.0
      %2558 = vmatpush1.msra.mxu0 0.0
      %2559 = vmatprep.subr.mxu0 0.0
      %2560 = vmatpush1.msra.mxu0 0.0
      %2561 = vmatprep.subr.mxu0 0.0
      %2562 = vmatpush1.msra.mxu0 0.0
      %2563 = vmatprep.subr.mxu0 0.0
      %2564 = vmatpush1.msra.mxu0 0.0
      %2565 = vmatprep.subr.mxu0 0.0
      %2566 = vmatpush1.msra.mxu0 0.0
      %2567 = vmatprep.subr.mxu0 0.0
      %2568 = vmatpush1.msra.mxu0 0.0
      %2569 = vmatprep.subr.mxu0 0.0
      %2570 = vmatpush1.msra.mxu0 0.0
      %2571 = vmatprep.subr.mxu0 0.0
      %2572 = vmatpush1.msra.mxu0 0.0
      %2573 = vmatprep.subr.mxu0 0.0
      %2574 = vmatpush1.msra.mxu0 0.0
      %2575 = vmatprep.subr.mxu0 0.0
      %2576 = vmatpush1.msra.mxu0 0.0
      %2577 = vmatprep.subr.mxu0 0.0
      %2578 = vmatpush1.msra.mxu0 0.0
      %2579 = vmatprep.subr.mxu0 0.0
      %2580 = vmatpush1.msra.mxu0 0.0
      %2581 = vmatprep.subr.mxu0 0.0
      %2582 = vmatpush1.msra.mxu0 0.0
      %2583 = vmatprep.subr.mxu0 0.0
      %2584 = vmatpush1.msra.mxu0 0.0
      %2585 = vmatprep.subr.mxu0 0.0
      %2586 = vmatpush1.msra.mxu0 0.0
      %2587 = vmatprep.subr.mxu0 0.0
      %2588 = vmatpush1.msra.mxu0 0.0
      %2589 = vmatprep.subr.mxu0 0.0
      %2590 = vmatpush1.msra.mxu0 0.0
      %2591 = vmatprep.subr.mxu0 0.0
      %2592 = vmatpush1.msra.mxu0 0.0
      %2593 = vmatprep.subr.mxu0 0.0
      %2594 = vmatpush1.msra.mxu0 0.0
      %2595 = vmatprep.subr.mxu0 0.0
      %2596 = vmatpush1.msra.mxu0 0.0
      %2597 = vmatprep.subr.mxu0 0.0
      %2598 = vmatpush1.msra.mxu0 0.0
      %2599 = vmatprep.mubr.f32.mxu0 0.0
      %2600 = vmatmul.mubr.f32.gmra.mrb[0].mxu0 %v2437
      %v2601 = vpop.f32.mrb[0].mxu0
      %v2602 = vadd.f32 0.0, %v2601
      %v2603 = vpop.f32.mrb[0].mxu0
      %2604 = vmatprep.mubr.f32.mxu0 0.0
      %2605 = vmatmul.mubr.f32.gmra.mrb[0].mxu0 %v2440
      %v2606 = vpop.f32.mrb[0].mxu0
      %v2607 = vadd.f32 0.0, %v2606
      %v2608 = vpop.f32.mrb[0].mxu0
      %2609 = vmatprep.mubr.f32.mxu0 0.0
      %2610 = vmatmul.mubr.f32.gmra.mrb[0].mxu0 %v2443
      %v2611 = vpop.f32.mrb[0].mxu0
      %v2612 = vadd.f32 0.0, %v2611
      %v2613 = vpop.f32.mrb[0].mxu0
      %2614 = vmatprep.mubr.f32.mxu0 0.0
      %2615 = vmatmul.mubr.f32.gmra.mrb[0].mxu0 %v2446
      %v2616 = vpop.f32.mrb[0].mxu0
      %v2617 = vadd.f32 0.0, %v2616
      %v2618 = vpop.f32.mrb[0].mxu0
      %2619 = vmatprep.mubr.f32.mxu0 0.0
      %2620 = vmatmul.mubr.f32.gmra.mrb[0].mxu0 %v2449
      %v2621 = vpop.f32.mrb[0].mxu0
      %v2622 = vadd.f32 0.0, %v2621
      %v2623 = vpop.f32.mrb[0].mxu0
      %2624 = vmatprep.mubr.f32.mxu0 0.0
      %2625 = vmatmul.mubr.f32.gmra.mrb[0].mxu0 %v2452
      %v2626 = vpop.f32.mrb[0].mxu0
      %v2627 = vadd.f32 0.0, %v2626
      %v2628 = vpop.f32.mrb[0].mxu0
      %2629 = vmatprep.mubr.f32.mxu0 0.0
      %2630 = vmatmul.mubr.f32.gmra.mrb[0].mxu0 %v2455
      %v2631 = vpop.f32.mrb[0].mxu0
      %v2632 = vadd.f32 0.0, %v2631
      %v2633 = vpop.f32.mrb[0].mxu0
      %2634 = vmatprep.mubr.f32.mxu0 0.0
      %2635 = vmatmul.mubr.f32.gmra.mrb[0].mxu0 %v2458
      %v2636 = vpop.f32.mrb[0].mxu0
      %v2637 = vadd.f32 0.0, %v2636
      %v2638 = vpop.f32.mrb[0].mxu0
      %2639 = vmatprep.mubr.f32.mxu0 0.0
      %2640 = vmatmul.mubr.f32.gmra.mrb[0].mxu0 %v2461
      %v2641 = vpop.f32.mrb[0].mxu0
      %v2642 = vadd.f32 0.0, %v2641
      %v2643 = vpop.f32.mrb[0].mxu0
      %2644 = vmatprep.mubr.f32.mxu0 0.0
      %2645 = vmatmul.mubr.f32.gmra.mrb[0].mxu0 %v2464
      %v2646 = vpop.f32.mrb[0].mxu0
      %v2647 = vadd.f32 0.0, %v2646
      %v2648 = vpop.f32.mrb[0].mxu0
      %2649 = vmatprep.mubr.f32.mxu0 0.0
      %2650 = vmatmul.mubr.f32.gmra.mrb[0].mxu0 %v2467
      %v2651 = vpop.f32.mrb[0].mxu0
      %v2652 = vadd.f32 0.0, %v2651
      %v2653 = vpop.f32.mrb[0].mxu0
      %2654 = vmatprep.mubr.f32.mxu0 0.0
      %2655 = vmatmul.mubr.f32.gmra.mrb[0].mxu0 %v2470
      %v2656 = vpop.f32.mrb[0].mxu0
      %v2657 = vadd.f32 0.0, %v2656
      %v2658 = vpop.f32.mrb[0].mxu0
      %2659 = vmatprep.mubr.f32.mxu0 0.0
      %2660 = vmatmul.mubr.f32.gmra.mrb[0].mxu0 %v2473
      %v2661 = vpop.f32.mrb[0].mxu0
      %v2662 = vadd.f32 0.0, %v2661
      %v2663 = vpop.f32.mrb[0].mxu0
      %2664 = vmatprep.mubr.f32.mxu0 0.0
      %2665 = vmatmul.mubr.f32.gmra.mrb[0].mxu0 %v2476
      %v2666 = vpop.f32.mrb[0].mxu0
      %v2667 = vadd.f32 0.0, %v2666
      %v2668 = vpop.f32.mrb[0].mxu0
      %2669 = vmatprep.mubr.f32.mxu0 0.0
      %2670 = vmatmul.mubr.f32.gmra.mrb[0].mxu0 %v2479
      %v2671 = vpop.f32.mrb[0].mxu0
      %v2672 = vadd.f32 0.0, %v2671
      %v2673 = vpop.f32.mrb[0].mxu0
      %2674 = vmatprep.mubr.f32.mxu0 0.0
      %2675 = vmatmul.mubr.f32.gmra.mrb[0].mxu0 %v2482
      %v2676 = vpop.f32.mrb[0].mxu0
      %v2677 = vadd.f32 0.0, %v2676
      %v2678 = vpop.f32.mrb[0].mxu0
      %2679 = vmatprep.mubr.f32.mxu0 0.0
      %2680 = vmatmul.mubr.f32.gmra.mrb[0].mxu0 %v2485
      %v2681 = vpop.f32.mrb[0].mxu0
      %v2682 = vadd.f32 0.0, %v2681
      %v2683 = vpop.f32.mrb[0].mxu0
      %2684 = vmatprep.mubr.f32.mxu0 0.0
      %2685 = vmatmul.mubr.f32.gmra.mrb[0].mxu0 %v2488
      %v2686 = vpop.f32.mrb[0].mxu0
      %v2687 = vadd.f32 0.0, %v2686
      %v2688 = vpop.f32.mrb[0].mxu0
      %2689 = vmatprep.mubr.f32.mxu0 0.0
      %2690 = vmatmul.mubr.f32.gmra.mrb[0].mxu0 %v2491
      %v2691 = vpop.f32.mrb[0].mxu0
      %v2692 = vadd.f32 0.0, %v2691
      %v2693 = vpop.f32.mrb[0].mxu0
      %2694 = vmatprep.mubr.f32.mxu0 0.0
      %2695 = vmatmul.mubr.f32.gmra.mrb[0].mxu0 %v2494
      %v2696 = vpop.f32.mrb[0].mxu0
      %v2697 = vadd.f32 0.0, %v2696
      %v2698 = vpop.f32.mrb[0].mxu0
      %2699 = vmatprep.mubr.f32.mxu0 0.0
      %2700 = vmatmul.mubr.f32.gmra.mrb[0].mxu0 %v2497
      %v2701 = vpop.f32.mrb[0].mxu0
      %v2702 = vadd.f32 0.0, %v2701
      %v2703 = vpop.f32.mrb[0].mxu0
      %2704 = vmatprep.mubr.f32.mxu0 0.0
      %2705 = vmatmul.mubr.f32.gmra.mrb[0].mxu0 %v2500
      %v2706 = vpop.f32.mrb[0].mxu0
      %v2707 = vadd.f32 0.0, %v2706
      %v2708 = vpop.f32.mrb[0].mxu0
      %2709 = vmatprep.mubr.f32.mxu0 0.0
      %2710 = vmatmul.mubr.f32.gmra.mrb[0].mxu0 %v2503
      %v2711 = vpop.f32.mrb[0].mxu0
      %v2712 = vadd.f32 0.0, %v2711
      %v2713 = vpop.f32.mrb[0].mxu0
      %2714 = vmatprep.mubr.f32.mxu0 0.0
      %2715 = vmatmul.mubr.f32.gmra.mrb[0].mxu0 %v2506
      %v2716 = vpop.f32.mrb[0].mxu0
      %v2717 = vadd.f32 0.0, %v2716
      %v2718 = vpop.f32.mrb[0].mxu0
      %2719 = vmatprep.mubr.f32.mxu0 0.0
      %2720 = vmatmul.mubr.f32.gmra.mrb[0].mxu0 %v2509
      %v2721 = vpop.f32.mrb[0].mxu0
      %v2722 = vadd.f32 0.0, %v2721
      %v2723 = vpop.f32.mrb[0].mxu0
      %2724 = vmatprep.mubr.f32.mxu0 0.0
      %2725 = vmatmul.mubr.f32.gmra.mrb[0].mxu0 %v2512
      %v2726 = vpop.f32.mrb[0].mxu0
      %v2727 = vadd.f32 0.0, %v2726
      %v2728 = vpop.f32.mrb[0].mxu0
      %2729 = vmatprep.mubr.f32.mxu0 0.0
      %2730 = vmatmul.mubr.f32.gmra.mrb[0].mxu0 %v2515
      %v2731 = vpop.f32.mrb[0].mxu0
      %v2732 = vadd.f32 0.0, %v2731
      %v2733 = vpop.f32.mrb[0].mxu0
      %2734 = vmatprep.mubr.f32.mxu0 0.0
      %2735 = vmatmul.mubr.f32.gmra.mrb[0].mxu0 %v2518
      %v2736 = vpop.f32.mrb[0].mxu0
      %v2737 = vadd.f32 0.0, %v2736
      %v2738 = vpop.f32.mrb[0].mxu0
      %2739 = vmatprep.mubr.f32.mxu0 0.0
      %2740 = vmatmul.mubr.f32.gmra.mrb[0].mxu0 %v2521
      %v2741 = vpop.f32.mrb[0].mxu0
      %v2742 = vadd.f32 0.0, %v2741
      %v2743 = vpop.f32.mrb[0].mxu0
      %2744 = vmatprep.mubr.f32.mxu0 0.0
      %2745 = vmatmul.mubr.f32.gmra.mrb[0].mxu0 %v2524
      %v2746 = vpop.f32.mrb[0].mxu0
      %v2747 = vadd.f32 0.0, %v2746
      %v2748 = vpop.f32.mrb[0].mxu0
      %2749 = vmatprep.mubr.f32.mxu0 0.0
      %2750 = vmatmul.mubr.f32.gmra.mrb[0].mxu0 %v2527
      %v2751 = vpop.f32.mrb[0].mxu0
      %v2752 = vadd.f32 0.0, %v2751
      %v2753 = vpop.f32.mrb[0].mxu0
      %2754 = vmatprep.mubr.f32.mxu0 0.0
      %2755 = vmatmul.mubr.f32.gmra.mrb[0].mxu0 %v2530
      %v2756 = vpop.f32.mrb[0].mxu0
      %v2757 = vadd.f32 0.0, %v2756
      %v2758 = vpop.f32.mrb[0].mxu0
      %2759 = vdwg.mxu0
      %v2760 = vadd.f32 %v2370, %v2602
      %v2761 = vadd.f32 %v2371, %v2607
      %v2762 = vadd.f32 %v2372, %v2612
      %v2763 = vadd.f32 %v2373, %v2617
      %v2764 = vadd.f32 %v2374, %v2622
      %v2765 = vadd.f32 %v2375, %v2627
      %v2766 = vadd.f32 %v2376, %v2632
      %v2767 = vadd.f32 %v2377, %v2637
      %v2768 = vadd.f32 %v2378, %v2642
      %v2769 = vadd.f32 %v2379, %v2647
      %v2770 = vadd.f32 %v2380, %v2652
      %v2771 = vadd.f32 %v2381, %v2657
      %v2772 = vadd.f32 %v2382, %v2662
      %v2773 = vadd.f32 %v2383, %v2667
      %v2774 = vadd.f32 %v2384, %v2672
      %v2775 = vadd.f32 %v2385, %v2677
      %v2776 = vadd.f32 %v2386, %v2682
      %v2777 = vadd.f32 %v2387, %v2687
      %v2778 = vadd.f32 %v2388, %v2692
      %v2779 = vadd.f32 %v2389, %v2697
      %v2780 = vadd.f32 %v2390, %v2702
      %v2781 = vadd.f32 %v2391, %v2707
      %v2782 = vadd.f32 %v2392, %v2712
      %v2783 = vadd.f32 %v2393, %v2717
      %v2784 = vadd.f32 %v2394, %v2722
      %v2785 = vadd.f32 %v2395, %v2727
      %v2786 = vadd.f32 %v2396, %v2732
      %v2787 = vadd.f32 %v2397, %v2737
      %v2788 = vadd.f32 %v2398, %v2742
      %v2789 = vadd.f32 %v2399, %v2747
      %v2790 = vadd.f32 %v2400, %v2752
      %v2791 = vadd.f32 %v2401, %v2757
      %s2792 = scalar_lea.vmem [#allocation2], 48
      %v2793 = vld [vmem:[%s2792] sm:$0xff]
      %v2794 = vld [vmem:[%s2792 + $0x8] sm:$0xff]
      %v2795 = vld [vmem:[%s2792 + $0x18] sm:$0xff]
      %v2796 = vld [vmem:[%s2792 + $0x20] sm:$0xff]
      %v2797 = vld [vmem:[%s2792 + $0x30] sm:$0xff]
      %v2798 = vld [vmem:[%s2792 + $0x38] sm:$0xff]
      %v2799 = vld [vmem:[%s2792 + $0x48] sm:$0xff]
      %v2800 = vld [vmem:[%s2792 + $0x50] sm:$0xff]
      %v2801 = vld [vmem:[%s2792 + $0x60] sm:$0xff]
      %v2802 = vld [vmem:[%s2792 + $0x68] sm:$0xff]
      %v2803 = vld [vmem:[%s2792 + $0x78] sm:$0xff]
      %v2804 = vld [vmem:[%s2792 + $0x80] sm:$0xff]
      %v2805 = vld [vmem:[%s2792 + $0x90] sm:$0xff]
      %v2806 = vld [vmem:[%s2792 + $0x98] sm:$0xff]
      %v2807 = vld [vmem:[%s2792 + $0xa8] sm:$0xff]
      %v2808 = vld [vmem:[%s2792 + $0xb0] sm:$0xff]
      %v2809 = vld [vmem:[%s2792 + $0xc0] sm:$0xff]
      %v2810 = vld [vmem:[%s2792 + $0xc8] sm:$0xff]
      %v2811 = vld [vmem:[%s2792 + $0xd8] sm:$0xff]
      %v2812 = vld [vmem:[%s2792 + $0xe0] sm:$0xff]
      %v2813 = vld [vmem:[%s2792 + $0xf0] sm:$0xff]
      %v2814 = vld [vmem:[%s2792 + $0xf8] sm:$0xff]
      %v2815 = vld [vmem:[%s2792 + $0x108] sm:$0xff]
      %v2816 = vld [vmem:[%s2792 + $0x110] sm:$0xff]
      %v2817 = vld [vmem:[%s2792 + $0x120] sm:$0xff]
      %v2818 = vld [vmem:[%s2792 + $0x128] sm:$0xff]
      %v2819 = vld [vmem:[%s2792 + $0x138] sm:$0xff]
      %v2820 = vld [vmem:[%s2792 + $0x140] sm:$0xff]
      %v2821 = vld [vmem:[%s2792 + $0x150] sm:$0xff]
      %v2822 = vld [vmem:[%s2792 + $0x158] sm:$0xff]
      %v2823 = vld [vmem:[%s2792 + $0x168] sm:$0xff]
      %v2824 = vld [vmem:[%s2792 + $0x170] sm:$0xff]
      %s2825 = scalar_lea.vmem %s302, 24
      %v2826 = vld [vmem:[%s2825] sm:$0xf]
      %v2828 = vsel %vm317, %v2793, 0
      %v2831 = vsel %vm317, %v2794, 0
      %v2834 = vsel %vm317, %v2795, 0
      %v2837 = vsel %vm317, %v2796, 0
      %v2840 = vsel %vm317, %v2797, 0
      %v2843 = vsel %vm317, %v2798, 0
      %v2846 = vsel %vm317, %v2799, 0
      %v2849 = vsel %vm317, %v2800, 0
      %v2852 = vsel %vm317, %v2801, 0
      %v2855 = vsel %vm317, %v2802, 0
      %v2858 = vsel %vm317, %v2803, 0
      %v2861 = vsel %vm317, %v2804, 0
      %v2864 = vsel %vm317, %v2805, 0
      %v2867 = vsel %vm317, %v2806, 0
      %v2870 = vsel %vm317, %v2807, 0
      %v2873 = vsel %vm317, %v2808, 0
      %v2876 = vsel %vm317, %v2809, 0
      %v2879 = vsel %vm317, %v2810, 0
      %v2882 = vsel %vm317, %v2811, 0
      %v2885 = vsel %vm317, %v2812, 0
      %v2888 = vsel %vm317, %v2813, 0
      %v2891 = vsel %vm317, %v2814, 0
      %v2894 = vsel %vm317, %v2815, 0
      %v2897 = vsel %vm317, %v2816, 0
      %v2900 = vsel %vm317, %v2817, 0
      %v2903 = vsel %vm317, %v2818, 0
      %v2906 = vsel %vm317, %v2819, 0
      %v2909 = vsel %vm317, %v2820, 0
      %v2912 = vsel %vm317, %v2821, 0
      %v2915 = vsel %vm317, %v2822, 0
      %v2918 = vsel %vm317, %v2823, 0
      %v2921 = vsel %vm317, %v2824, 0
      %v2924 = vsel %vm679, %v2826, 0
      %2926 = vmatprep.subr.mxu0 0.0
      %2927 = vmatpush1.msra.mxu0 %v2924
      %2928 = vmatprep.subr.mxu0 0.0
      %2929 = vmatpush1.msra.mxu0 0.0
      %2930 = vmatprep.subr.mxu0 0.0
      %2931 = vmatpush1.msra.mxu0 0.0
      %2932 = vmatprep.subr.mxu0 0.0
      %2933 = vmatpush1.msra.mxu0 0.0
      %2934 = vmatprep.subr.mxu0 0.0
      %2935 = vmatpush1.msra.mxu0 0.0
      %2936 = vmatprep.subr.mxu0 0.0
      %2937 = vmatpush1.msra.mxu0 0.0
      %2938 = vmatprep.subr.mxu0 0.0
      %2939 = vmatpush1.msra.mxu0 0.0
      %2940 = vmatprep.subr.mxu0 0.0
      %2941 = vmatpush1.msra.mxu0 0.0
      %2942 = vmatprep.subr.mxu0 0.0
      %2943 = vmatpush1.msra.mxu0 0.0
      %2944 = vmatprep.subr.mxu0 0.0
      %2945 = vmatpush1.msra.mxu0 0.0
      %2946 = vmatprep.subr.mxu0 0.0
      %2947 = vmatpush1.msra.mxu0 0.0
      %2948 = vmatprep.subr.mxu0 0.0
      %2949 = vmatpush1.msra.mxu0 0.0
      %2950 = vmatprep.subr.mxu0 0.0
      %2951 = vmatpush1.msra.mxu0 0.0
      %2952 = vmatprep.subr.mxu0 0.0
      %2953 = vmatpush1.msra.mxu0 0.0
      %2954 = vmatprep.subr.mxu0 0.0
      %2955 = vmatpush1.msra.mxu0 0.0
      %2956 = vmatprep.subr.mxu0 0.0
      %2957 = vmatpush1.msra.mxu0 0.0
      %2958 = vmatprep.subr.mxu0 0.0
      %2959 = vmatpush1.msra.mxu0 0.0
      %2960 = vmatprep.subr.mxu0 0.0
      %2961 = vmatpush1.msra.mxu0 0.0
      %2962 = vmatprep.subr.mxu0 0.0
      %2963 = vmatpush1.msra.mxu0 0.0
      %2964 = vmatprep.subr.mxu0 0.0
      %2965 = vmatpush1.msra.mxu0 0.0
      %2966 = vmatprep.subr.mxu0 0.0
      %2967 = vmatpush1.msra.mxu0 0.0
      %2968 = vmatprep.subr.mxu0 0.0
      %2969 = vmatpush1.msra.mxu0 0.0
      %2970 = vmatprep.subr.mxu0 0.0
      %2971 = vmatpush1.msra.mxu0 0.0
      %2972 = vmatprep.subr.mxu0 0.0
      %2973 = vmatpush1.msra.mxu0 0.0
      %2974 = vmatprep.subr.mxu0 0.0
      %2975 = vmatpush1.msra.mxu0 0.0
      %2976 = vmatprep.subr.mxu0 0.0
      %2977 = vmatpush1.msra.mxu0 0.0
      %2978 = vmatprep.subr.mxu0 0.0
      %2979 = vmatpush1.msra.mxu0 0.0
      %2980 = vmatprep.subr.mxu0 0.0
      %2981 = vmatpush1.msra.mxu0 0.0
      %2982 = vmatprep.subr.mxu0 0.0
      %2983 = vmatpush1.msra.mxu0 0.0
      %2984 = vmatprep.subr.mxu0 0.0
      %2985 = vmatpush1.msra.mxu0 0.0
      %2986 = vmatprep.subr.mxu0 0.0
      %2987 = vmatpush1.msra.mxu0 0.0
      %2988 = vmatprep.subr.mxu0 0.0
      %2989 = vmatpush1.msra.mxu0 0.0
      %2990 = vmatprep.mubr.f32.mxu0 0.0
      %2991 = vmatmul.mubr.f32.gmra.mrb[0].mxu0 %v2828
      %v2992 = vpop.f32.mrb[0].mxu0
      %v2993 = vadd.f32 0.0, %v2992
      %v2994 = vpop.f32.mrb[0].mxu0
      %2995 = vmatprep.mubr.f32.mxu0 0.0
      %2996 = vmatmul.mubr.f32.gmra.mrb[0].mxu0 %v2831
      %v2997 = vpop.f32.mrb[0].mxu0
      %v2998 = vadd.f32 0.0, %v2997
      %v2999 = vpop.f32.mrb[0].mxu0
      %3000 = vmatprep.mubr.f32.mxu0 0.0
      %3001 = vmatmul.mubr.f32.gmra.mrb[0].mxu0 %v2834
      %v3002 = vpop.f32.mrb[0].mxu0
      %v3003 = vadd.f32 0.0, %v3002
      %v3004 = vpop.f32.mrb[0].mxu0
      %3005 = vmatprep.mubr.f32.mxu0 0.0
      %3006 = vmatmul.mubr.f32.gmra.mrb[0].mxu0 %v2837
      %v3007 = vpop.f32.mrb[0].mxu0
      %v3008 = vadd.f32 0.0, %v3007
      %v3009 = vpop.f32.mrb[0].mxu0
      %3010 = vmatprep.mubr.f32.mxu0 0.0
      %3011 = vmatmul.mubr.f32.gmra.mrb[0].mxu0 %v2840
      %v3012 = vpop.f32.mrb[0].mxu0
      %v3013 = vadd.f32 0.0, %v3012
      %v3014 = vpop.f32.mrb[0].mxu0
      %3015 = vmatprep.mubr.f32.mxu0 0.0
      %3016 = vmatmul.mubr.f32.gmra.mrb[0].mxu0 %v2843
      %v3017 = vpop.f32.mrb[0].mxu0
      %v3018 = vadd.f32 0.0, %v3017
      %v3019 = vpop.f32.mrb[0].mxu0
      %3020 = vmatprep.mubr.f32.mxu0 0.0
      %3021 = vmatmul.mubr.f32.gmra.mrb[0].mxu0 %v2846
      %v3022 = vpop.f32.mrb[0].mxu0
      %v3023 = vadd.f32 0.0, %v3022
      %v3024 = vpop.f32.mrb[0].mxu0
      %3025 = vmatprep.mubr.f32.mxu0 0.0
      %3026 = vmatmul.mubr.f32.gmra.mrb[0].mxu0 %v2849
      %v3027 = vpop.f32.mrb[0].mxu0
      %v3028 = vadd.f32 0.0, %v3027
      %v3029 = vpop.f32.mrb[0].mxu0
      %3030 = vmatprep.mubr.f32.mxu0 0.0
      %3031 = vmatmul.mubr.f32.gmra.mrb[0].mxu0 %v2852
      %v3032 = vpop.f32.mrb[0].mxu0
      %v3033 = vadd.f32 0.0, %v3032
      %v3034 = vpop.f32.mrb[0].mxu0
      %3035 = vmatprep.mubr.f32.mxu0 0.0
      %3036 = vmatmul.mubr.f32.gmra.mrb[0].mxu0 %v2855
      %v3037 = vpop.f32.mrb[0].mxu0
      %v3038 = vadd.f32 0.0, %v3037
      %v3039 = vpop.f32.mrb[0].mxu0
      %3040 = vmatprep.mubr.f32.mxu0 0.0
      %3041 = vmatmul.mubr.f32.gmra.mrb[0].mxu0 %v2858
      %v3042 = vpop.f32.mrb[0].mxu0
      %v3043 = vadd.f32 0.0, %v3042
      %v3044 = vpop.f32.mrb[0].mxu0
      %3045 = vmatprep.mubr.f32.mxu0 0.0
      %3046 = vmatmul.mubr.f32.gmra.mrb[0].mxu0 %v2861
      %v3047 = vpop.f32.mrb[0].mxu0
      %v3048 = vadd.f32 0.0, %v3047
      %v3049 = vpop.f32.mrb[0].mxu0
      %3050 = vmatprep.mubr.f32.mxu0 0.0
      %3051 = vmatmul.mubr.f32.gmra.mrb[0].mxu0 %v2864
      %v3052 = vpop.f32.mrb[0].mxu0
      %v3053 = vadd.f32 0.0, %v3052
      %v3054 = vpop.f32.mrb[0].mxu0
      %3055 = vmatprep.mubr.f32.mxu0 0.0
      %3056 = vmatmul.mubr.f32.gmra.mrb[0].mxu0 %v2867
      %v3057 = vpop.f32.mrb[0].mxu0
      %v3058 = vadd.f32 0.0, %v3057
      %v3059 = vpop.f32.mrb[0].mxu0
      %3060 = vmatprep.mubr.f32.mxu0 0.0
      %3061 = vmatmul.mubr.f32.gmra.mrb[0].mxu0 %v2870
      %v3062 = vpop.f32.mrb[0].mxu0
      %v3063 = vadd.f32 0.0, %v3062
      %v3064 = vpop.f32.mrb[0].mxu0
      %3065 = vmatprep.mubr.f32.mxu0 0.0
      %3066 = vmatmul.mubr.f32.gmra.mrb[0].mxu0 %v2873
      %v3067 = vpop.f32.mrb[0].mxu0
      %v3068 = vadd.f32 0.0, %v3067
      %v3069 = vpop.f32.mrb[0].mxu0
      %3070 = vmatprep.mubr.f32.mxu0 0.0
      %3071 = vmatmul.mubr.f32.gmra.mrb[0].mxu0 %v2876
      %v3072 = vpop.f32.mrb[0].mxu0
      %v3073 = vadd.f32 0.0, %v3072
      %v3074 = vpop.f32.mrb[0].mxu0
      %3075 = vmatprep.mubr.f32.mxu0 0.0
      %3076 = vmatmul.mubr.f32.gmra.mrb[0].mxu0 %v2879
      %v3077 = vpop.f32.mrb[0].mxu0
      %v3078 = vadd.f32 0.0, %v3077
      %v3079 = vpop.f32.mrb[0].mxu0
      %3080 = vmatprep.mubr.f32.mxu0 0.0
      %3081 = vmatmul.mubr.f32.gmra.mrb[0].mxu0 %v2882
      %v3082 = vpop.f32.mrb[0].mxu0
      %v3083 = vadd.f32 0.0, %v3082
      %v3084 = vpop.f32.mrb[0].mxu0
      %3085 = vmatprep.mubr.f32.mxu0 0.0
      %3086 = vmatmul.mubr.f32.gmra.mrb[0].mxu0 %v2885
      %v3087 = vpop.f32.mrb[0].mxu0
      %v3088 = vadd.f32 0.0, %v3087
      %v3089 = vpop.f32.mrb[0].mxu0
      %3090 = vmatprep.mubr.f32.mxu0 0.0
      %3091 = vmatmul.mubr.f32.gmra.mrb[0].mxu0 %v2888
      %v3092 = vpop.f32.mrb[0].mxu0
      %v3093 = vadd.f32 0.0, %v3092
      %v3094 = vpop.f32.mrb[0].mxu0
      %3095 = vmatprep.mubr.f32.mxu0 0.0
      %3096 = vmatmul.mubr.f32.gmra.mrb[0].mxu0 %v2891
      %v3097 = vpop.f32.mrb[0].mxu0
      %v3098 = vadd.f32 0.0, %v3097
      %v3099 = vpop.f32.mrb[0].mxu0
      %3100 = vmatprep.mubr.f32.mxu0 0.0
      %3101 = vmatmul.mubr.f32.gmra.mrb[0].mxu0 %v2894
      %v3102 = vpop.f32.mrb[0].mxu0
      %v3103 = vadd.f32 0.0, %v3102
      %v3104 = vpop.f32.mrb[0].mxu0
      %3105 = vmatprep.mubr.f32.mxu0 0.0
      %3106 = vmatmul.mubr.f32.gmra.mrb[0].mxu0 %v2897
      %v3107 = vpop.f32.mrb[0].mxu0
      %v3108 = vadd.f32 0.0, %v3107
      %v3109 = vpop.f32.mrb[0].mxu0
      %3110 = vmatprep.mubr.f32.mxu0 0.0
      %3111 = vmatmul.mubr.f32.gmra.mrb[0].mxu0 %v2900
      %v3112 = vpop.f32.mrb[0].mxu0
      %v3113 = vadd.f32 0.0, %v3112
      %v3114 = vpop.f32.mrb[0].mxu0
      %3115 = vmatprep.mubr.f32.mxu0 0.0
      %3116 = vmatmul.mubr.f32.gmra.mrb[0].mxu0 %v2903
      %v3117 = vpop.f32.mrb[0].mxu0
      %v3118 = vadd.f32 0.0, %v3117
      %v3119 = vpop.f32.mrb[0].mxu0
      %3120 = vmatprep.mubr.f32.mxu0 0.0
      %3121 = vmatmul.mubr.f32.gmra.mrb[0].mxu0 %v2906
      %v3122 = vpop.f32.mrb[0].mxu0
      %v3123 = vadd.f32 0.0, %v3122
      %v3124 = vpop.f32.mrb[0].mxu0
      %3125 = vmatprep.mubr.f32.mxu0 0.0
      %3126 = vmatmul.mubr.f32.gmra.mrb[0].mxu0 %v2909
      %v3127 = vpop.f32.mrb[0].mxu0
      %v3128 = vadd.f32 0.0, %v3127
      %v3129 = vpop.f32.mrb[0].mxu0
      %3130 = vmatprep.mubr.f32.mxu0 0.0
      %3131 = vmatmul.mubr.f32.gmra.mrb[0].mxu0 %v2912
      %v3132 = vpop.f32.mrb[0].mxu0
      %v3133 = vadd.f32 0.0, %v3132
      %v3134 = vpop.f32.mrb[0].mxu0
      %3135 = vmatprep.mubr.f32.mxu0 0.0
      %3136 = vmatmul.mubr.f32.gmra.mrb[0].mxu0 %v2915
      %v3137 = vpop.f32.mrb[0].mxu0
      %v3138 = vadd.f32 0.0, %v3137
      %v3139 = vpop.f32.mrb[0].mxu0
      %3140 = vmatprep.mubr.f32.mxu0 0.0
      %3141 = vmatmul.mubr.f32.gmra.mrb[0].mxu0 %v2918
      %v3142 = vpop.f32.mrb[0].mxu0
      %v3143 = vadd.f32 0.0, %v3142
      %v3144 = vpop.f32.mrb[0].mxu0
      %3145 = vmatprep.mubr.f32.mxu0 0.0
      %3146 = vmatmul.mubr.f32.gmra.mrb[0].mxu0 %v2921
      %v3147 = vpop.f32.mrb[0].mxu0
      %v3148 = vadd.f32 0.0, %v3147
      %v3149 = vpop.f32.mrb[0].mxu0
      %3150 = vdwg.mxu0
      %v3151 = vadd.f32 %v2760, %v2993
      %v3152 = vadd.f32 %v2761, %v2998
      %v3153 = vadd.f32 %v2762, %v3003
      %v3154 = vadd.f32 %v2763, %v3008
      %v3155 = vadd.f32 %v2764, %v3013
      %v3156 = vadd.f32 %v2765, %v3018
      %v3157 = vadd.f32 %v2766, %v3023
      %v3158 = vadd.f32 %v2767, %v3028
      %v3159 = vadd.f32 %v2768, %v3033
      %v3160 = vadd.f32 %v2769, %v3038
      %v3161 = vadd.f32 %v2770, %v3043
      %v3162 = vadd.f32 %v2771, %v3048
      %v3163 = vadd.f32 %v2772, %v3053
      %v3164 = vadd.f32 %v2773, %v3058
      %v3165 = vadd.f32 %v2774, %v3063
      %v3166 = vadd.f32 %v2775, %v3068
      %v3167 = vadd.f32 %v2776, %v3073
      %v3168 = vadd.f32 %v2777, %v3078
      %v3169 = vadd.f32 %v2778, %v3083
      %v3170 = vadd.f32 %v2779, %v3088
      %v3171 = vadd.f32 %v2780, %v3093
      %v3172 = vadd.f32 %v2781, %v3098
      %v3173 = vadd.f32 %v2782, %v3103
      %v3174 = vadd.f32 %v2783, %v3108
      %v3175 = vadd.f32 %v2784, %v3113
      %v3176 = vadd.f32 %v2785, %v3118
      %v3177 = vadd.f32 %v2786, %v3123
      %v3178 = vadd.f32 %v2787, %v3128
      %v3179 = vadd.f32 %v2788, %v3133
      %v3180 = vadd.f32 %v2789, %v3138
      %v3181 = vadd.f32 %v2790, %v3143
      %v3182 = vadd.f32 %v2791, %v3148
      %v3183 = vld [vmem:[%s2792 + $0x1] sm:$0xff]
      %v3184 = vld [vmem:[%s2792 + $0x9] sm:$0xff]
      %v3185 = vld [vmem:[%s2792 + $0x19] sm:$0xff]
      %v3186 = vld [vmem:[%s2792 + $0x21] sm:$0xff]
      %v3187 = vld [vmem:[%s2792 + $0x31] sm:$0xff]
      %v3188 = vld [vmem:[%s2792 + $0x39] sm:$0xff]
      %v3189 = vld [vmem:[%s2792 + $0x49] sm:$0xff]
      %v3190 = vld [vmem:[%s2792 + $0x51] sm:$0xff]
      %v3191 = vld [vmem:[%s2792 + $0x61] sm:$0xff]
      %v3192 = vld [vmem:[%s2792 + $0x69] sm:$0xff]
      %v3193 = vld [vmem:[%s2792 + $0x79] sm:$0xff]
      %v3194 = vld [vmem:[%s2792 + $0x81] sm:$0xff]
      %v3195 = vld [vmem:[%s2792 + $0x91] sm:$0xff]
      %v3196 = vld [vmem:[%s2792 + $0x99] sm:$0xff]
      %v3197 = vld [vmem:[%s2792 + $0xa9] sm:$0xff]
      %v3198 = vld [vmem:[%s2792 + $0xb1] sm:$0xff]
      %v3199 = vld [vmem:[%s2792 + $0xc1] sm:$0xff]
      %v3200 = vld [vmem:[%s2792 + $0xc9] sm:$0xff]
      %v3201 = vld [vmem:[%s2792 + $0xd9] sm:$0xff]
      %v3202 = vld [vmem:[%s2792 + $0xe1] sm:$0xff]
      %v3203 = vld [vmem:[%s2792 + $0xf1] sm:$0xff]
      %v3204 = vld [vmem:[%s2792 + $0xf9] sm:$0xff]
      %v3205 = vld [vmem:[%s2792 + $0x109] sm:$0xff]
      %v3206 = vld [vmem:[%s2792 + $0x111] sm:$0xff]
      %v3207 = vld [vmem:[%s2792 + $0x121] sm:$0xff]
      %v3208 = vld [vmem:[%s2792 + $0x129] sm:$0xff]
      %v3209 = vld [vmem:[%s2792 + $0x139] sm:$0xff]
      %v3210 = vld [vmem:[%s2792 + $0x141] sm:$0xff]
      %v3211 = vld [vmem:[%s2792 + $0x151] sm:$0xff]
      %v3212 = vld [vmem:[%s2792 + $0x159] sm:$0xff]
      %v3213 = vld [vmem:[%s2792 + $0x169] sm:$0xff]
      %v3214 = vld [vmem:[%s2792 + $0x171] sm:$0xff]
      %s3215 = scalar_lea.vmem %s302, 28
      %v3216 = vld [vmem:[%s3215] sm:$0xf]
      %v3218 = vsel %vm317, %v3183, 0
      %v3221 = vsel %vm317, %v3184, 0
      %v3224 = vsel %vm317, %v3185, 0
      %v3227 = vsel %vm317, %v3186, 0
      %v3230 = vsel %vm317, %v3187, 0
      %v3233 = vsel %vm317, %v3188, 0
      %v3236 = vsel %vm317, %v3189, 0
      %v3239 = vsel %vm317, %v3190, 0
      %v3242 = vsel %vm317, %v3191, 0
      %v3245 = vsel %vm317, %v3192, 0
      %v3248 = vsel %vm317, %v3193, 0
      %v3251 = vsel %vm317, %v3194, 0
      %v3254 = vsel %vm317, %v3195, 0
      %v3257 = vsel %vm317, %v3196, 0
      %v3260 = vsel %vm317, %v3197, 0
      %v3263 = vsel %vm317, %v3198, 0
      %v3266 = vsel %vm317, %v3199, 0
      %v3269 = vsel %vm317, %v3200, 0
      %v3272 = vsel %vm317, %v3201, 0
      %v3275 = vsel %vm317, %v3202, 0
      %v3278 = vsel %vm317, %v3203, 0
      %v3281 = vsel %vm317, %v3204, 0
      %v3284 = vsel %vm317, %v3205, 0
      %v3287 = vsel %vm317, %v3206, 0
      %v3290 = vsel %vm317, %v3207, 0
      %v3293 = vsel %vm317, %v3208, 0
      %v3296 = vsel %vm317, %v3209, 0
      %v3299 = vsel %vm317, %v3210, 0
      %v3302 = vsel %vm317, %v3211, 0
      %v3305 = vsel %vm317, %v3212, 0
      %v3308 = vsel %vm317, %v3213, 0
      %v3311 = vsel %vm317, %v3214, 0
      %v3314 = vsel %vm679, %v3216, 0
      %3316 = vmatprep.subr.mxu0 0.0
      %3317 = vmatpush1.msra.mxu0 %v3314
      %3318 = vmatprep.subr.mxu0 0.0
      %3319 = vmatpush1.msra.mxu0 0.0
      %3320 = vmatprep.subr.mxu0 0.0
      %3321 = vmatpush1.msra.mxu0 0.0
      %3322 = vmatprep.subr.mxu0 0.0
      %3323 = vmatpush1.msra.mxu0 0.0
      %3324 = vmatprep.subr.mxu0 0.0
      %3325 = vmatpush1.msra.mxu0 0.0
      %3326 = vmatprep.subr.mxu0 0.0
      %3327 = vmatpush1.msra.mxu0 0.0
      %3328 = vmatprep.subr.mxu0 0.0
      %3329 = vmatpush1.msra.mxu0 0.0
      %3330 = vmatprep.subr.mxu0 0.0
      %3331 = vmatpush1.msra.mxu0 0.0
      %3332 = vmatprep.subr.mxu0 0.0
      %3333 = vmatpush1.msra.mxu0 0.0
      %3334 = vmatprep.subr.mxu0 0.0
      %3335 = vmatpush1.msra.mxu0 0.0
      %3336 = vmatprep.subr.mxu0 0.0
      %3337 = vmatpush1.msra.mxu0 0.0
      %3338 = vmatprep.subr.mxu0 0.0
      %3339 = vmatpush1.msra.mxu0 0.0
      %3340 = vmatprep.subr.mxu0 0.0
      %3341 = vmatpush1.msra.mxu0 0.0
      %3342 = vmatprep.subr.mxu0 0.0
      %3343 = vmatpush1.msra.mxu0 0.0
      %3344 = vmatprep.subr.mxu0 0.0
      %3345 = vmatpush1.msra.mxu0 0.0
      %3346 = vmatprep.subr.mxu0 0.0
      %3347 = vmatpush1.msra.mxu0 0.0
      %3348 = vmatprep.subr.mxu0 0.0
      %3349 = vmatpush1.msra.mxu0 0.0
      %3350 = vmatprep.subr.mxu0 0.0
      %3351 = vmatpush1.msra.mxu0 0.0
      %3352 = vmatprep.subr.mxu0 0.0
      %3353 = vmatpush1.msra.mxu0 0.0
      %3354 = vmatprep.subr.mxu0 0.0
      %3355 = vmatpush1.msra.mxu0 0.0
      %3356 = vmatprep.subr.mxu0 0.0
      %3357 = vmatpush1.msra.mxu0 0.0
      %3358 = vmatprep.subr.mxu0 0.0
      %3359 = vmatpush1.msra.mxu0 0.0
      %3360 = vmatprep.subr.mxu0 0.0
      %3361 = vmatpush1.msra.mxu0 0.0
      %3362 = vmatprep.subr.mxu0 0.0
      %3363 = vmatpush1.msra.mxu0 0.0
      %3364 = vmatprep.subr.mxu0 0.0
      %3365 = vmatpush1.msra.mxu0 0.0
      %3366 = vmatprep.subr.mxu0 0.0
      %3367 = vmatpush1.msra.mxu0 0.0
      %3368 = vmatprep.subr.mxu0 0.0
      %3369 = vmatpush1.msra.mxu0 0.0
      %3370 = vmatprep.subr.mxu0 0.0
      %3371 = vmatpush1.msra.mxu0 0.0
      %3372 = vmatprep.subr.mxu0 0.0
      %3373 = vmatpush1.msra.mxu0 0.0
      %3374 = vmatprep.subr.mxu0 0.0
      %3375 = vmatpush1.msra.mxu0 0.0
      %3376 = vmatprep.subr.mxu0 0.0
      %3377 = vmatpush1.msra.mxu0 0.0
      %3378 = vmatprep.subr.mxu0 0.0
      %3379 = vmatpush1.msra.mxu0 0.0
      %3380 = vmatprep.mubr.f32.mxu0 0.0
      %3381 = vmatmul.mubr.f32.gmra.mrb[0].mxu0 %v3218
      %v3382 = vpop.f32.mrb[0].mxu0
      %v3383 = vadd.f32 0.0, %v3382
      %v3384 = vpop.f32.mrb[0].mxu0
      %3385 = vmatprep.mubr.f32.mxu0 0.0
      %3386 = vmatmul.mubr.f32.gmra.mrb[0].mxu0 %v3221
      %v3387 = vpop.f32.mrb[0].mxu0
      %v3388 = vadd.f32 0.0, %v3387
      %v3389 = vpop.f32.mrb[0].mxu0
      %3390 = vmatprep.mubr.f32.mxu0 0.0
      %3391 = vmatmul.mubr.f32.gmra.mrb[0].mxu0 %v3224
      %v3392 = vpop.f32.mrb[0].mxu0
      %v3393 = vadd.f32 0.0, %v3392
      %v3394 = vpop.f32.mrb[0].mxu0
      %3395 = vmatprep.mubr.f32.mxu0 0.0
      %3396 = vmatmul.mubr.f32.gmra.mrb[0].mxu0 %v3227
      %v3397 = vpop.f32.mrb[0].mxu0
      %v3398 = vadd.f32 0.0, %v3397
      %v3399 = vpop.f32.mrb[0].mxu0
      %3400 = vmatprep.mubr.f32.mxu0 0.0
      %3401 = vmatmul.mubr.f32.gmra.mrb[0].mxu0 %v3230
      %v3402 = vpop.f32.mrb[0].mxu0
      %v3403 = vadd.f32 0.0, %v3402
      %v3404 = vpop.f32.mrb[0].mxu0
      %3405 = vmatprep.mubr.f32.mxu0 0.0
      %3406 = vmatmul.mubr.f32.gmra.mrb[0].mxu0 %v3233
      %v3407 = vpop.f32.mrb[0].mxu0
      %v3408 = vadd.f32 0.0, %v3407
      %v3409 = vpop.f32.mrb[0].mxu0
      %3410 = vmatprep.mubr.f32.mxu0 0.0
      %3411 = vmatmul.mubr.f32.gmra.mrb[0].mxu0 %v3236
      %v3412 = vpop.f32.mrb[0].mxu0
      %v3413 = vadd.f32 0.0, %v3412
      %v3414 = vpop.f32.mrb[0].mxu0
      %3415 = vmatprep.mubr.f32.mxu0 0.0
      %3416 = vmatmul.mubr.f32.gmra.mrb[0].mxu0 %v3239
      %v3417 = vpop.f32.mrb[0].mxu0
      %v3418 = vadd.f32 0.0, %v3417
      %v3419 = vpop.f32.mrb[0].mxu0
      %3420 = vmatprep.mubr.f32.mxu0 0.0
      %3421 = vmatmul.mubr.f32.gmra.mrb[0].mxu0 %v3242
      %v3422 = vpop.f32.mrb[0].mxu0
      %v3423 = vadd.f32 0.0, %v3422
      %v3424 = vpop.f32.mrb[0].mxu0
      %3425 = vmatprep.mubr.f32.mxu0 0.0
      %3426 = vmatmul.mubr.f32.gmra.mrb[0].mxu0 %v3245
      %v3427 = vpop.f32.mrb[0].mxu0
      %v3428 = vadd.f32 0.0, %v3427
      %v3429 = vpop.f32.mrb[0].mxu0
      %3430 = vmatprep.mubr.f32.mxu0 0.0
      %3431 = vmatmul.mubr.f32.gmra.mrb[0].mxu0 %v3248
      %v3432 = vpop.f32.mrb[0].mxu0
      %v3433 = vadd.f32 0.0, %v3432
      %v3434 = vpop.f32.mrb[0].mxu0
      %3435 = vmatprep.mubr.f32.mxu0 0.0
      %3436 = vmatmul.mubr.f32.gmra.mrb[0].mxu0 %v3251
      %v3437 = vpop.f32.mrb[0].mxu0
      %v3438 = vadd.f32 0.0, %v3437
      %v3439 = vpop.f32.mrb[0].mxu0
      %3440 = vmatprep.mubr.f32.mxu0 0.0
      %3441 = vmatmul.mubr.f32.gmra.mrb[0].mxu0 %v3254
      %v3442 = vpop.f32.mrb[0].mxu0
      %v3443 = vadd.f32 0.0, %v3442
      %v3444 = vpop.f32.mrb[0].mxu0
      %3445 = vmatprep.mubr.f32.mxu0 0.0
      %3446 = vmatmul.mubr.f32.gmra.mrb[0].mxu0 %v3257
      %v3447 = vpop.f32.mrb[0].mxu0
      %v3448 = vadd.f32 0.0, %v3447
      %v3449 = vpop.f32.mrb[0].mxu0
      %3450 = vmatprep.mubr.f32.mxu0 0.0
      %3451 = vmatmul.mubr.f32.gmra.mrb[0].mxu0 %v3260
      %v3452 = vpop.f32.mrb[0].mxu0
      %v3453 = vadd.f32 0.0, %v3452
      %v3454 = vpop.f32.mrb[0].mxu0
      %3455 = vmatprep.mubr.f32.mxu0 0.0
      %3456 = vmatmul.mubr.f32.gmra.mrb[0].mxu0 %v3263
      %v3457 = vpop.f32.mrb[0].mxu0
      %v3458 = vadd.f32 0.0, %v3457
      %v3459 = vpop.f32.mrb[0].mxu0
      %3460 = vmatprep.mubr.f32.mxu0 0.0
      %3461 = vmatmul.mubr.f32.gmra.mrb[0].mxu0 %v3266
      %v3462 = vpop.f32.mrb[0].mxu0
      %v3463 = vadd.f32 0.0, %v3462
      %v3464 = vpop.f32.mrb[0].mxu0
      %3465 = vmatprep.mubr.f32.mxu0 0.0
      %3466 = vmatmul.mubr.f32.gmra.mrb[0].mxu0 %v3269
      %v3467 = vpop.f32.mrb[0].mxu0
      %v3468 = vadd.f32 0.0, %v3467
      %v3469 = vpop.f32.mrb[0].mxu0
      %3470 = vmatprep.mubr.f32.mxu0 0.0
      %3471 = vmatmul.mubr.f32.gmra.mrb[0].mxu0 %v3272
      %v3472 = vpop.f32.mrb[0].mxu0
      %v3473 = vadd.f32 0.0, %v3472
      %v3474 = vpop.f32.mrb[0].mxu0
      %3475 = vmatprep.mubr.f32.mxu0 0.0
      %3476 = vmatmul.mubr.f32.gmra.mrb[0].mxu0 %v3275
      %v3477 = vpop.f32.mrb[0].mxu0
      %v3478 = vadd.f32 0.0, %v3477
      %v3479 = vpop.f32.mrb[0].mxu0
      %3480 = vmatprep.mubr.f32.mxu0 0.0
      %3481 = vmatmul.mubr.f32.gmra.mrb[0].mxu0 %v3278
      %v3482 = vpop.f32.mrb[0].mxu0
      %v3483 = vadd.f32 0.0, %v3482
      %v3484 = vpop.f32.mrb[0].mxu0
      %3485 = vmatprep.mubr.f32.mxu0 0.0
      %3486 = vmatmul.mubr.f32.gmra.mrb[0].mxu0 %v3281
      %v3487 = vpop.f32.mrb[0].mxu0
      %v3488 = vadd.f32 0.0, %v3487
      %v3489 = vpop.f32.mrb[0].mxu0
      %3490 = vmatprep.mubr.f32.mxu0 0.0
      %3491 = vmatmul.mubr.f32.gmra.mrb[0].mxu0 %v3284
      %v3492 = vpop.f32.mrb[0].mxu0
      %v3493 = vadd.f32 0.0, %v3492
      %v3494 = vpop.f32.mrb[0].mxu0
      %3495 = vmatprep.mubr.f32.mxu0 0.0
      %3496 = vmatmul.mubr.f32.gmra.mrb[0].mxu0 %v3287
      %v3497 = vpop.f32.mrb[0].mxu0
      %v3498 = vadd.f32 0.0, %v3497
      %v3499 = vpop.f32.mrb[0].mxu0
      %3500 = vmatprep.mubr.f32.mxu0 0.0
      %3501 = vmatmul.mubr.f32.gmra.mrb[0].mxu0 %v3290
      %v3502 = vpop.f32.mrb[0].mxu0
      %v3503 = vadd.f32 0.0, %v3502
      %v3504 = vpop.f32.mrb[0].mxu0
      %3505 = vmatprep.mubr.f32.mxu0 0.0
      %3506 = vmatmul.mubr.f32.gmra.mrb[0].mxu0 %v3293
      %v3507 = vpop.f32.mrb[0].mxu0
      %v3508 = vadd.f32 0.0, %v3507
      %v3509 = vpop.f32.mrb[0].mxu0
      %3510 = vmatprep.mubr.f32.mxu0 0.0
      %3511 = vmatmul.mubr.f32.gmra.mrb[0].mxu0 %v3296
      %v3512 = vpop.f32.mrb[0].mxu0
      %v3513 = vadd.f32 0.0, %v3512
      %v3514 = vpop.f32.mrb[0].mxu0
      %3515 = vmatprep.mubr.f32.mxu0 0.0
      %3516 = vmatmul.mubr.f32.gmra.mrb[0].mxu0 %v3299
      %v3517 = vpop.f32.mrb[0].mxu0
      %v3518 = vadd.f32 0.0, %v3517
      %v3519 = vpop.f32.mrb[0].mxu0
      %3520 = vmatprep.mubr.f32.mxu0 0.0
      %3521 = vmatmul.mubr.f32.gmra.mrb[0].mxu0 %v3302
      %v3522 = vpop.f32.mrb[0].mxu0
      %v3523 = vadd.f32 0.0, %v3522
      %v3524 = vpop.f32.mrb[0].mxu0
      %3525 = vmatprep.mubr.f32.mxu0 0.0
      %3526 = vmatmul.mubr.f32.gmra.mrb[0].mxu0 %v3305
      %v3527 = vpop.f32.mrb[0].mxu0
      %v3528 = vadd.f32 0.0, %v3527
      %v3529 = vpop.f32.mrb[0].mxu0
      %3530 = vmatprep.mubr.f32.mxu0 0.0
      %3531 = vmatmul.mubr.f32.gmra.mrb[0].mxu0 %v3308
      %v3532 = vpop.f32.mrb[0].mxu0
      %v3533 = vadd.f32 0.0, %v3532
      %v3534 = vpop.f32.mrb[0].mxu0
      %3535 = vmatprep.mubr.f32.mxu0 0.0
      %3536 = vmatmul.mubr.f32.gmra.mrb[0].mxu0 %v3311
      %v3537 = vpop.f32.mrb[0].mxu0
      %v3538 = vadd.f32 0.0, %v3537
      %v3539 = vpop.f32.mrb[0].mxu0
      %3540 = vdwg.mxu0
      %v3541 = vadd.f32 %v3151, %v3383
      %v3542 = vadd.f32 %v3152, %v3388
      %v3543 = vadd.f32 %v3153, %v3393
      %v3544 = vadd.f32 %v3154, %v3398
      %v3545 = vadd.f32 %v3155, %v3403
      %v3546 = vadd.f32 %v3156, %v3408
      %v3547 = vadd.f32 %v3157, %v3413
      %v3548 = vadd.f32 %v3158, %v3418
      %v3549 = vadd.f32 %v3159, %v3423
      %v3550 = vadd.f32 %v3160, %v3428
      %v3551 = vadd.f32 %v3161, %v3433
      %v3552 = vadd.f32 %v3162, %v3438
      %v3553 = vadd.f32 %v3163, %v3443
      %v3554 = vadd.f32 %v3164, %v3448
      %v3555 = vadd.f32 %v3165, %v3453
      %v3556 = vadd.f32 %v3166, %v3458
      %v3557 = vadd.f32 %v3167, %v3463
      %v3558 = vadd.f32 %v3168, %v3468
      %v3559 = vadd.f32 %v3169, %v3473
      %v3560 = vadd.f32 %v3170, %v3478
      %v3561 = vadd.f32 %v3171, %v3483
      %v3562 = vadd.f32 %v3172, %v3488
      %v3563 = vadd.f32 %v3173, %v3493
      %v3564 = vadd.f32 %v3174, %v3498
      %v3565 = vadd.f32 %v3175, %v3503
      %v3566 = vadd.f32 %v3176, %v3508
      %v3567 = vadd.f32 %v3177, %v3513
      %v3568 = vadd.f32 %v3178, %v3518
      %v3569 = vadd.f32 %v3179, %v3523
      %v3570 = vadd.f32 %v3180, %v3528
      %v3571 = vadd.f32 %v3181, %v3533
      %v3572 = vadd.f32 %v3182, %v3538
      %v3573 = vld [vmem:[%s2792 + $0x2] sm:$0xff]
      %v3574 = vld [vmem:[%s2792 + $0xa] sm:$0xff]
      %v3575 = vld [vmem:[%s2792 + $0x1a] sm:$0xff]
      %v3576 = vld [vmem:[%s2792 + $0x22] sm:$0xff]
      %v3577 = vld [vmem:[%s2792 + $0x32] sm:$0xff]
      %v3578 = vld [vmem:[%s2792 + $0x3a] sm:$0xff]
      %v3579 = vld [vmem:[%s2792 + $0x4a] sm:$0xff]
      %v3580 = vld [vmem:[%s2792 + $0x52] sm:$0xff]
      %v3581 = vld [vmem:[%s2792 + $0x62] sm:$0xff]
      %v3582 = vld [vmem:[%s2792 + $0x6a] sm:$0xff]
      %v3583 = vld [vmem:[%s2792 + $0x7a] sm:$0xff]
      %v3584 = vld [vmem:[%s2792 + $0x82] sm:$0xff]
      %v3585 = vld [vmem:[%s2792 + $0x92] sm:$0xff]
      %v3586 = vld [vmem:[%s2792 + $0x9a] sm:$0xff]
      %v3587 = vld [vmem:[%s2792 + $0xaa] sm:$0xff]
      %v3588 = vld [vmem:[%s2792 + $0xb2] sm:$0xff]
      %v3589 = vld [vmem:[%s2792 + $0xc2] sm:$0xff]
      %v3590 = vld [vmem:[%s2792 + $0xca] sm:$0xff]
      %v3591 = vld [vmem:[%s2792 + $0xda] sm:$0xff]
      %v3592 = vld [vmem:[%s2792 + $0xe2] sm:$0xff]
      %v3593 = vld [vmem:[%s2792 + $0xf2] sm:$0xff]
      %v3594 = vld [vmem:[%s2792 + $0xfa] sm:$0xff]
      %v3595 = vld [vmem:[%s2792 + $0x10a] sm:$0xff]
      %v3596 = vld [vmem:[%s2792 + $0x112] sm:$0xff]
      %v3597 = vld [vmem:[%s2792 + $0x122] sm:$0xff]
      %v3598 = vld [vmem:[%s2792 + $0x12a] sm:$0xff]
      %v3599 = vld [vmem:[%s2792 + $0x13a] sm:$0xff]
      %v3600 = vld [vmem:[%s2792 + $0x142] sm:$0xff]
      %v3601 = vld [vmem:[%s2792 + $0x152] sm:$0xff]
      %v3602 = vld [vmem:[%s2792 + $0x15a] sm:$0xff]
      %v3603 = vld [vmem:[%s2792 + $0x16a] sm:$0xff]
      %v3604 = vld [vmem:[%s2792 + $0x172] sm:$0xff]
      %s3605 = scalar_lea.vmem %s302, 32
      %v3606 = vld [vmem:[%s3605] sm:$0xf]
      %v3608 = vsel %vm317, %v3573, 0
      %v3611 = vsel %vm317, %v3574, 0
      %v3614 = vsel %vm317, %v3575, 0
      %v3617 = vsel %vm317, %v3576, 0
      %v3620 = vsel %vm317, %v3577, 0
      %v3623 = vsel %vm317, %v3578, 0
      %v3626 = vsel %vm317, %v3579, 0
      %v3629 = vsel %vm317, %v3580, 0
      %v3632 = vsel %vm317, %v3581, 0
      %v3635 = vsel %vm317, %v3582, 0
      %v3638 = vsel %vm317, %v3583, 0
      %v3641 = vsel %vm317, %v3584, 0
      %v3644 = vsel %vm317, %v3585, 0
      %v3647 = vsel %vm317, %v3586, 0
      %v3650 = vsel %vm317, %v3587, 0
      %v3653 = vsel %vm317, %v3588, 0
      %v3656 = vsel %vm317, %v3589, 0
      %v3659 = vsel %vm317, %v3590, 0
      %v3662 = vsel %vm317, %v3591, 0
      %v3665 = vsel %vm317, %v3592, 0
      %v3668 = vsel %vm317, %v3593, 0
      %v3671 = vsel %vm317, %v3594, 0
      %v3674 = vsel %vm317, %v3595, 0
      %v3677 = vsel %vm317, %v3596, 0
      %v3680 = vsel %vm317, %v3597, 0
      %v3683 = vsel %vm317, %v3598, 0
      %v3686 = vsel %vm317, %v3599, 0
      %v3689 = vsel %vm317, %v3600, 0
      %v3692 = vsel %vm317, %v3601, 0
      %v3695 = vsel %vm317, %v3602, 0
      %v3698 = vsel %vm317, %v3603, 0
      %v3701 = vsel %vm317, %v3604, 0
      %v3704 = vsel %vm679, %v3606, 0
      %3706 = vmatprep.subr.mxu0 0.0
      %3707 = vmatpush1.msra.mxu0 %v3704
      %3708 = vmatprep.subr.mxu0 0.0
      %3709 = vmatpush1.msra.mxu0 0.0
      %3710 = vmatprep.subr.mxu0 0.0
      %3711 = vmatpush1.msra.mxu0 0.0
      %3712 = vmatprep.subr.mxu0 0.0
      %3713 = vmatpush1.msra.mxu0 0.0
      %3714 = vmatprep.subr.mxu0 0.0
      %3715 = vmatpush1.msra.mxu0 0.0
      %3716 = vmatprep.subr.mxu0 0.0
      %3717 = vmatpush1.msra.mxu0 0.0
      %3718 = vmatprep.subr.mxu0 0.0
      %3719 = vmatpush1.msra.mxu0 0.0
      %3720 = vmatprep.subr.mxu0 0.0
      %3721 = vmatpush1.msra.mxu0 0.0
      %3722 = vmatprep.subr.mxu0 0.0
      %3723 = vmatpush1.msra.mxu0 0.0
      %3724 = vmatprep.subr.mxu0 0.0
      %3725 = vmatpush1.msra.mxu0 0.0
      %3726 = vmatprep.subr.mxu0 0.0
      %3727 = vmatpush1.msra.mxu0 0.0
      %3728 = vmatprep.subr.mxu0 0.0
      %3729 = vmatpush1.msra.mxu0 0.0
      %3730 = vmatprep.subr.mxu0 0.0
      %3731 = vmatpush1.msra.mxu0 0.0
      %3732 = vmatprep.subr.mxu0 0.0
      %3733 = vmatpush1.msra.mxu0 0.0
      %3734 = vmatprep.subr.mxu0 0.0
      %3735 = vmatpush1.msra.mxu0 0.0
      %3736 = vmatprep.subr.mxu0 0.0
      %3737 = vmatpush1.msra.mxu0 0.0
      %3738 = vmatprep.subr.mxu0 0.0
      %3739 = vmatpush1.msra.mxu0 0.0
      %3740 = vmatprep.subr.mxu0 0.0
      %3741 = vmatpush1.msra.mxu0 0.0
      %3742 = vmatprep.subr.mxu0 0.0
      %3743 = vmatpush1.msra.mxu0 0.0
      %3744 = vmatprep.subr.mxu0 0.0
      %3745 = vmatpush1.msra.mxu0 0.0
      %3746 = vmatprep.subr.mxu0 0.0
      %3747 = vmatpush1.msra.mxu0 0.0
      %3748 = vmatprep.subr.mxu0 0.0
      %3749 = vmatpush1.msra.mxu0 0.0
      %3750 = vmatprep.subr.mxu0 0.0
      %3751 = vmatpush1.msra.mxu0 0.0
      %3752 = vmatprep.subr.mxu0 0.0
      %3753 = vmatpush1.msra.mxu0 0.0
      %3754 = vmatprep.subr.mxu0 0.0
      %3755 = vmatpush1.msra.mxu0 0.0
      %3756 = vmatprep.subr.mxu0 0.0
      %3757 = vmatpush1.msra.mxu0 0.0
      %3758 = vmatprep.subr.mxu0 0.0
      %3759 = vmatpush1.msra.mxu0 0.0
      %3760 = vmatprep.subr.mxu0 0.0
      %3761 = vmatpush1.msra.mxu0 0.0
      %3762 = vmatprep.subr.mxu0 0.0
      %3763 = vmatpush1.msra.mxu0 0.0
      %3764 = vmatprep.subr.mxu0 0.0
      %3765 = vmatpush1.msra.mxu0 0.0
      %3766 = vmatprep.subr.mxu0 0.0
      %3767 = vmatpush1.msra.mxu0 0.0
      %3768 = vmatprep.subr.mxu0 0.0
      %3769 = vmatpush1.msra.mxu0 0.0
      %3770 = vmatprep.mubr.f32.mxu0 0.0
      %3771 = vmatmul.mubr.f32.gmra.mrb[0].mxu0 %v3608
      %v3772 = vpop.f32.mrb[0].mxu0
      %v3773 = vadd.f32 0.0, %v3772
      %v3774 = vpop.f32.mrb[0].mxu0
      %3775 = vmatprep.mubr.f32.mxu0 0.0
      %3776 = vmatmul.mubr.f32.gmra.mrb[0].mxu0 %v3611
      %v3777 = vpop.f32.mrb[0].mxu0
      %v3778 = vadd.f32 0.0, %v3777
      %v3779 = vpop.f32.mrb[0].mxu0
      %3780 = vmatprep.mubr.f32.mxu0 0.0
      %3781 = vmatmul.mubr.f32.gmra.mrb[0].mxu0 %v3614
      %v3782 = vpop.f32.mrb[0].mxu0
      %v3783 = vadd.f32 0.0, %v3782
      %v3784 = vpop.f32.mrb[0].mxu0
      %3785 = vmatprep.mubr.f32.mxu0 0.0
      %3786 = vmatmul.mubr.f32.gmra.mrb[0].mxu0 %v3617
      %v3787 = vpop.f32.mrb[0].mxu0
      %v3788 = vadd.f32 0.0, %v3787
      %v3789 = vpop.f32.mrb[0].mxu0
      %3790 = vmatprep.mubr.f32.mxu0 0.0
      %3791 = vmatmul.mubr.f32.gmra.mrb[0].mxu0 %v3620
      %v3792 = vpop.f32.mrb[0].mxu0
      %v3793 = vadd.f32 0.0, %v3792
      %v3794 = vpop.f32.mrb[0].mxu0
      %3795 = vmatprep.mubr.f32.mxu0 0.0
      %3796 = vmatmul.mubr.f32.gmra.mrb[0].mxu0 %v3623
      %v3797 = vpop.f32.mrb[0].mxu0
      %v3798 = vadd.f32 0.0, %v3797
      %v3799 = vpop.f32.mrb[0].mxu0
      %3800 = vmatprep.mubr.f32.mxu0 0.0
      %3801 = vmatmul.mubr.f32.gmra.mrb[0].mxu0 %v3626
      %v3802 = vpop.f32.mrb[0].mxu0
      %v3803 = vadd.f32 0.0, %v3802
      %v3804 = vpop.f32.mrb[0].mxu0
      %3805 = vmatprep.mubr.f32.mxu0 0.0
      %3806 = vmatmul.mubr.f32.gmra.mrb[0].mxu0 %v3629
      %v3807 = vpop.f32.mrb[0].mxu0
      %v3808 = vadd.f32 0.0, %v3807
      %v3809 = vpop.f32.mrb[0].mxu0
      %3810 = vmatprep.mubr.f32.mxu0 0.0
      %3811 = vmatmul.mubr.f32.gmra.mrb[0].mxu0 %v3632
      %v3812 = vpop.f32.mrb[0].mxu0
      %v3813 = vadd.f32 0.0, %v3812
      %v3814 = vpop.f32.mrb[0].mxu0
      %3815 = vmatprep.mubr.f32.mxu0 0.0
      %3816 = vmatmul.mubr.f32.gmra.mrb[0].mxu0 %v3635
      %v3817 = vpop.f32.mrb[0].mxu0
      %v3818 = vadd.f32 0.0, %v3817
      %v3819 = vpop.f32.mrb[0].mxu0
      %3820 = vmatprep.mubr.f32.mxu0 0.0
      %3821 = vmatmul.mubr.f32.gmra.mrb[0].mxu0 %v3638
      %v3822 = vpop.f32.mrb[0].mxu0
      %v3823 = vadd.f32 0.0, %v3822
      %v3824 = vpop.f32.mrb[0].mxu0
      %3825 = vmatprep.mubr.f32.mxu0 0.0
      %3826 = vmatmul.mubr.f32.gmra.mrb[0].mxu0 %v3641
      %v3827 = vpop.f32.mrb[0].mxu0
      %v3828 = vadd.f32 0.0, %v3827
      %v3829 = vpop.f32.mrb[0].mxu0
      %3830 = vmatprep.mubr.f32.mxu0 0.0
      %3831 = vmatmul.mubr.f32.gmra.mrb[0].mxu0 %v3644
      %v3832 = vpop.f32.mrb[0].mxu0
      %v3833 = vadd.f32 0.0, %v3832
      %v3834 = vpop.f32.mrb[0].mxu0
      %3835 = vmatprep.mubr.f32.mxu0 0.0
      %3836 = vmatmul.mubr.f32.gmra.mrb[0].mxu0 %v3647
      %v3837 = vpop.f32.mrb[0].mxu0
      %v3838 = vadd.f32 0.0, %v3837
      %v3839 = vpop.f32.mrb[0].mxu0
      %3840 = vmatprep.mubr.f32.mxu0 0.0
      %3841 = vmatmul.mubr.f32.gmra.mrb[0].mxu0 %v3650
      %v3842 = vpop.f32.mrb[0].mxu0
      %v3843 = vadd.f32 0.0, %v3842
      %v3844 = vpop.f32.mrb[0].mxu0
      %3845 = vmatprep.mubr.f32.mxu0 0.0
      %3846 = vmatmul.mubr.f32.gmra.mrb[0].mxu0 %v3653
      %v3847 = vpop.f32.mrb[0].mxu0
      %v3848 = vadd.f32 0.0, %v3847
      %v3849 = vpop.f32.mrb[0].mxu0
      %3850 = vmatprep.mubr.f32.mxu0 0.0
      %3851 = vmatmul.mubr.f32.gmra.mrb[0].mxu0 %v3656
      %v3852 = vpop.f32.mrb[0].mxu0
      %v3853 = vadd.f32 0.0, %v3852
      %v3854 = vpop.f32.mrb[0].mxu0
      %3855 = vmatprep.mubr.f32.mxu0 0.0
      %3856 = vmatmul.mubr.f32.gmra.mrb[0].mxu0 %v3659
      %v3857 = vpop.f32.mrb[0].mxu0
      %v3858 = vadd.f32 0.0, %v3857
      %v3859 = vpop.f32.mrb[0].mxu0
      %3860 = vmatprep.mubr.f32.mxu0 0.0
      %3861 = vmatmul.mubr.f32.gmra.mrb[0].mxu0 %v3662
      %v3862 = vpop.f32.mrb[0].mxu0
      %v3863 = vadd.f32 0.0, %v3862
      %v3864 = vpop.f32.mrb[0].mxu0
      %3865 = vmatprep.mubr.f32.mxu0 0.0
      %3866 = vmatmul.mubr.f32.gmra.mrb[0].mxu0 %v3665
      %v3867 = vpop.f32.mrb[0].mxu0
      %v3868 = vadd.f32 0.0, %v3867
      %v3869 = vpop.f32.mrb[0].mxu0
      %3870 = vmatprep.mubr.f32.mxu0 0.0
      %3871 = vmatmul.mubr.f32.gmra.mrb[0].mxu0 %v3668
      %v3872 = vpop.f32.mrb[0].mxu0
      %v3873 = vadd.f32 0.0, %v3872
      %v3874 = vpop.f32.mrb[0].mxu0
      %3875 = vmatprep.mubr.f32.mxu0 0.0
      %3876 = vmatmul.mubr.f32.gmra.mrb[0].mxu0 %v3671
      %v3877 = vpop.f32.mrb[0].mxu0
      %v3878 = vadd.f32 0.0, %v3877
      %v3879 = vpop.f32.mrb[0].mxu0
      %3880 = vmatprep.mubr.f32.mxu0 0.0
      %3881 = vmatmul.mubr.f32.gmra.mrb[0].mxu0 %v3674
      %v3882 = vpop.f32.mrb[0].mxu0
      %v3883 = vadd.f32 0.0, %v3882
      %v3884 = vpop.f32.mrb[0].mxu0
      %3885 = vmatprep.mubr.f32.mxu0 0.0
      %3886 = vmatmul.mubr.f32.gmra.mrb[0].mxu0 %v3677
      %v3887 = vpop.f32.mrb[0].mxu0
      %v3888 = vadd.f32 0.0, %v3887
      %v3889 = vpop.f32.mrb[0].mxu0
      %3890 = vmatprep.mubr.f32.mxu0 0.0
      %3891 = vmatmul.mubr.f32.gmra.mrb[0].mxu0 %v3680
      %v3892 = vpop.f32.mrb[0].mxu0
      %v3893 = vadd.f32 0.0, %v3892
      %v3894 = vpop.f32.mrb[0].mxu0
      %3895 = vmatprep.mubr.f32.mxu0 0.0
      %3896 = vmatmul.mubr.f32.gmra.mrb[0].mxu0 %v3683
      %v3897 = vpop.f32.mrb[0].mxu0
      %v3898 = vadd.f32 0.0, %v3897
      %v3899 = vpop.f32.mrb[0].mxu0
      %3900 = vmatprep.mubr.f32.mxu0 0.0
      %3901 = vmatmul.mubr.f32.gmra.mrb[0].mxu0 %v3686
      %v3902 = vpop.f32.mrb[0].mxu0
      %v3903 = vadd.f32 0.0, %v3902
      %v3904 = vpop.f32.mrb[0].mxu0
      %3905 = vmatprep.mubr.f32.mxu0 0.0
      %3906 = vmatmul.mubr.f32.gmra.mrb[0].mxu0 %v3689
      %v3907 = vpop.f32.mrb[0].mxu0
      %v3908 = vadd.f32 0.0, %v3907
      %v3909 = vpop.f32.mrb[0].mxu0
      %3910 = vmatprep.mubr.f32.mxu0 0.0
      %3911 = vmatmul.mubr.f32.gmra.mrb[0].mxu0 %v3692
      %v3912 = vpop.f32.mrb[0].mxu0
      %v3913 = vadd.f32 0.0, %v3912
      %v3914 = vpop.f32.mrb[0].mxu0
      %3915 = vmatprep.mubr.f32.mxu0 0.0
      %3916 = vmatmul.mubr.f32.gmra.mrb[0].mxu0 %v3695
      %v3917 = vpop.f32.mrb[0].mxu0
      %v3918 = vadd.f32 0.0, %v3917
      %v3919 = vpop.f32.mrb[0].mxu0
      %3920 = vmatprep.mubr.f32.mxu0 0.0
      %3921 = vmatmul.mubr.f32.gmra.mrb[0].mxu0 %v3698
      %v3922 = vpop.f32.mrb[0].mxu0
      %v3923 = vadd.f32 0.0, %v3922
      %v3924 = vpop.f32.mrb[0].mxu0
      %3925 = vmatprep.mubr.f32.mxu0 0.0
      %3926 = vmatmul.mubr.f32.gmra.mrb[0].mxu0 %v3701
      %v3927 = vpop.f32.mrb[0].mxu0
      %v3928 = vadd.f32 0.0, %v3927
      %v3929 = vpop.f32.mrb[0].mxu0
      %3930 = vdwg.mxu0
      %v3931 = vadd.f32 %v3541, %v3773
      %v3932 = vadd.f32 %v3542, %v3778
      %v3933 = vadd.f32 %v3543, %v3783
      %v3934 = vadd.f32 %v3544, %v3788
      %v3935 = vadd.f32 %v3545, %v3793
      %v3936 = vadd.f32 %v3546, %v3798
      %v3937 = vadd.f32 %v3547, %v3803
      %v3938 = vadd.f32 %v3548, %v3808
      %v3939 = vadd.f32 %v3549, %v3813
      %v3940 = vadd.f32 %v3550, %v3818
      %v3941 = vadd.f32 %v3551, %v3823
      %v3942 = vadd.f32 %v3552, %v3828
      %v3943 = vadd.f32 %v3553, %v3833
      %v3944 = vadd.f32 %v3554, %v3838
      %v3945 = vadd.f32 %v3555, %v3843
      %v3946 = vadd.f32 %v3556, %v3848
      %v3947 = vadd.f32 %v3557, %v3853
      %v3948 = vadd.f32 %v3558, %v3858
      %v3949 = vadd.f32 %v3559, %v3863
      %v3950 = vadd.f32 %v3560, %v3868
      %v3951 = vadd.f32 %v3561, %v3873
      %v3952 = vadd.f32 %v3562, %v3878
      %v3953 = vadd.f32 %v3563, %v3883
      %v3954 = vadd.f32 %v3564, %v3888
      %v3955 = vadd.f32 %v3565, %v3893
      %v3956 = vadd.f32 %v3566, %v3898
      %v3957 = vadd.f32 %v3567, %v3903
      %v3958 = vadd.f32 %v3568, %v3908
      %v3959 = vadd.f32 %v3569, %v3913
      %v3960 = vadd.f32 %v3570, %v3918
      %v3961 = vadd.f32 %v3571, %v3923
      %v3962 = vadd.f32 %v3572, %v3928
      %v3963 = vld [vmem:[%s305] sm:$0x1]
      %v3965 = vlaneseq
      %v3966 = vshrl.u32 %v3965, 7
      %v3967 = vsub.s32 0, %v3966
      %v3968 = vrot.slane %v3963, %v3967
      %v3970 = vadd.f32 %v3931, %v3968
      %v3971 = vadd.f32 %v3932, %v3968
      %v3972 = vadd.f32 %v3933, %v3968
      %v3973 = vadd.f32 %v3934, %v3968
      %v3974 = vadd.f32 %v3935, %v3968
      %v3975 = vadd.f32 %v3936, %v3968
      %v3976 = vadd.f32 %v3937, %v3968
      %v3977 = vadd.f32 %v3938, %v3968
      %v3978 = vadd.f32 %v3939, %v3968
      %v3979 = vadd.f32 %v3940, %v3968
      %v3980 = vadd.f32 %v3941, %v3968
      %v3981 = vadd.f32 %v3942, %v3968
      %v3982 = vadd.f32 %v3943, %v3968
      %v3983 = vadd.f32 %v3944, %v3968
      %v3984 = vadd.f32 %v3945, %v3968
      %v3985 = vadd.f32 %v3946, %v3968
      %v3986 = vadd.f32 %v3947, %v3968
      %v3987 = vadd.f32 %v3948, %v3968
      %v3988 = vadd.f32 %v3949, %v3968
      %v3989 = vadd.f32 %v3950, %v3968
      %v3990 = vadd.f32 %v3951, %v3968
      %v3991 = vadd.f32 %v3952, %v3968
      %v3992 = vadd.f32 %v3953, %v3968
      %v3993 = vadd.f32 %v3954, %v3968
      %v3994 = vadd.f32 %v3955, %v3968
      %v3995 = vadd.f32 %v3956, %v3968
      %v3996 = vadd.f32 %v3957, %v3968
      %v3997 = vadd.f32 %v3958, %v3968
      %v3998 = vadd.f32 %v3959, %v3968
      %v3999 = vadd.f32 %v3960, %v3968
      %v4000 = vadd.f32 %v3961, %v3968
      %v4001 = vadd.f32 %v3962, %v3968
      %vm4002 = vcmp.ge.f32.partialorder %v3970, 0.0
      %vm4003 = vcmp.ge.f32.partialorder %v3971, 0.0
      %vm4004 = vcmp.ge.f32.partialorder %v3972, 0.0
      %vm4005 = vcmp.ge.f32.partialorder %v3973, 0.0
      %vm4006 = vcmp.ge.f32.partialorder %v3974, 0.0
      %vm4007 = vcmp.ge.f32.partialorder %v3975, 0.0
      %vm4008 = vcmp.ge.f32.partialorder %v3976, 0.0
      %vm4009 = vcmp.ge.f32.partialorder %v3977, 0.0
      %vm4010 = vcmp.ge.f32.partialorder %v3978, 0.0
      %vm4011 = vcmp.ge.f32.partialorder %v3979, 0.0
      %vm4012 = vcmp.ge.f32.partialorder %v3980, 0.0
      %vm4013 = vcmp.ge.f32.partialorder %v3981, 0.0
      %vm4014 = vcmp.ge.f32.partialorder %v3982, 0.0
      %vm4015 = vcmp.ge.f32.partialorder %v3983, 0.0
      %vm4016 = vcmp.ge.f32.partialorder %v3984, 0.0
      %vm4017 = vcmp.ge.f32.partialorder %v3985, 0.0
      %vm4018 = vcmp.ge.f32.partialorder %v3986, 0.0
      %vm4019 = vcmp.ge.f32.partialorder %v3987, 0.0
      %vm4020 = vcmp.ge.f32.partialorder %v3988, 0.0
      %vm4021 = vcmp.ge.f32.partialorder %v3989, 0.0
      %vm4022 = vcmp.ge.f32.partialorder %v3990, 0.0
      %vm4023 = vcmp.ge.f32.partialorder %v3991, 0.0
      %vm4024 = vcmp.ge.f32.partialorder %v3992, 0.0
      %vm4025 = vcmp.ge.f32.partialorder %v3993, 0.0
      %vm4026 = vcmp.ge.f32.partialorder %v3994, 0.0
      %vm4027 = vcmp.ge.f32.partialorder %v3995, 0.0
      %vm4028 = vcmp.ge.f32.partialorder %v3996, 0.0
      %vm4029 = vcmp.ge.f32.partialorder %v3997, 0.0
      %vm4030 = vcmp.ge.f32.partialorder %v3998, 0.0
      %vm4031 = vcmp.ge.f32.partialorder %v3999, 0.0
      %vm4032 = vcmp.ge.f32.partialorder %v4000, 0.0
      %vm4033 = vcmp.ge.f32.partialorder %v4001, 0.0
      %v4034 = vld [vmem:[%s308] sm:$0x1]
      %v4036 = vlaneseq
      %v4037 = vshrl.u32 %v4036, 7
      %v4038 = vsub.s32 0, %v4037
      %v4039 = vrot.slane %v4034, %v4038
      %v4041 = vmul.f32 %v4039, %v3970
      %v4042 = vmul.f32 %v4039, %v3971
      %v4043 = vmul.f32 %v4039, %v3972
      %v4044 = vmul.f32 %v4039, %v3973
      %v4045 = vmul.f32 %v4039, %v3974
      %v4046 = vmul.f32 %v4039, %v3975
      %v4047 = vmul.f32 %v4039, %v3976
      %v4048 = vmul.f32 %v4039, %v3977
      %v4049 = vmul.f32 %v4039, %v3978
      %v4050 = vmul.f32 %v4039, %v3979
      %v4051 = vmul.f32 %v4039, %v3980
      %v4052 = vmul.f32 %v4039, %v3981
      %v4053 = vmul.f32 %v4039, %v3982
      %v4054 = vmul.f32 %v4039, %v3983
      %v4055 = vmul.f32 %v4039, %v3984
      %v4056 = vmul.f32 %v4039, %v3985
      %v4057 = vmul.f32 %v4039, %v3986
      %v4058 = vmul.f32 %v4039, %v3987
      %v4059 = vmul.f32 %v4039, %v3988
      %v4060 = vmul.f32 %v4039, %v3989
      %v4061 = vmul.f32 %v4039, %v3990
      %v4062 = vmul.f32 %v4039, %v3991
      %v4063 = vmul.f32 %v4039, %v3992
      %v4064 = vmul.f32 %v4039, %v3993
      %v4065 = vmul.f32 %v4039, %v3994
      %v4066 = vmul.f32 %v4039, %v3995
      %v4067 = vmul.f32 %v4039, %v3996
      %v4068 = vmul.f32 %v4039, %v3997
      %v4069 = vmul.f32 %v4039, %v3998
      %v4070 = vmul.f32 %v4039, %v3999
      %v4071 = vmul.f32 %v4039, %v4000
      %v4072 = vmul.f32 %v4039, %v4001
      %v4073 = vsel %vm4002, %v3970, %v4041
      %v4074 = vsel %vm4003, %v3971, %v4042
      %v4075 = vsel %vm4004, %v3972, %v4043
      %v4076 = vsel %vm4005, %v3973, %v4044
      %v4077 = vsel %vm4006, %v3974, %v4045
      %v4078 = vsel %vm4007, %v3975, %v4046
      %v4079 = vsel %vm4008, %v3976, %v4047
      %v4080 = vsel %vm4009, %v3977, %v4048
      %v4081 = vsel %vm4010, %v3978, %v4049
      %v4082 = vsel %vm4011, %v3979, %v4050
      %v4083 = vsel %vm4012, %v3980, %v4051
      %v4084 = vsel %vm4013, %v3981, %v4052
      %v4085 = vsel %vm4014, %v3982, %v4053
      %v4086 = vsel %vm4015, %v3983, %v4054
      %v4087 = vsel %vm4016, %v3984, %v4055
      %v4088 = vsel %vm4017, %v3985, %v4056
      %v4089 = vsel %vm4018, %v3986, %v4057
      %v4090 = vsel %vm4019, %v3987, %v4058
      %v4091 = vsel %vm4020, %v3988, %v4059
      %v4092 = vsel %vm4021, %v3989, %v4060
      %v4093 = vsel %vm4022, %v3990, %v4061
      %v4094 = vsel %vm4023, %v3991, %v4062
      %v4095 = vsel %vm4024, %v3992, %v4063
      %v4096 = vsel %vm4025, %v3993, %v4064
      %v4097 = vsel %vm4026, %v3994, %v4065
      %v4098 = vsel %vm4027, %v3995, %v4066
      %v4099 = vsel %vm4028, %v3996, %v4067
      %v4100 = vsel %vm4029, %v3997, %v4068
      %v4101 = vsel %vm4030, %v3998, %v4069
      %v4102 = vsel %vm4031, %v3999, %v4070
      %v4103 = vsel %vm4032, %v4000, %v4071
      %v4104 = vsel %vm4033, %v4001, %v4072
      %vm4105 = vcmask 64512
      %4106 = vst.msk [vmem:[%s316] sm:$0xff] %vm4105, %v4073
      %4107 = vst.msk [vmem:[%s316 + $0x8] sm:$0xff] %vm4105, %v4074
      %4108 = vst.msk [vmem:[%s316 + $0x10] sm:$0xff] %vm4105, %v4075
      %4109 = vst.msk [vmem:[%s316 + $0x18] sm:$0xff] %vm4105, %v4076
      %4110 = vst.msk [vmem:[%s316 + $0x20] sm:$0xff] %vm4105, %v4077
      %4111 = vst.msk [vmem:[%s316 + $0x28] sm:$0xff] %vm4105, %v4078
      %4112 = vst.msk [vmem:[%s316 + $0x30] sm:$0xff] %vm4105, %v4079
      %4113 = vst.msk [vmem:[%s316 + $0x38] sm:$0xff] %vm4105, %v4080
      %4114 = vst.msk [vmem:[%s316 + $0x40] sm:$0xff] %vm4105, %v4081
      %4115 = vst.msk [vmem:[%s316 + $0x48] sm:$0xff] %vm4105, %v4082
      %4116 = vst.msk [vmem:[%s316 + $0x50] sm:$0xff] %vm4105, %v4083
      %4117 = vst.msk [vmem:[%s316 + $0x58] sm:$0xff] %vm4105, %v4084
      %4118 = vst.msk [vmem:[%s316 + $0x60] sm:$0xff] %vm4105, %v4085
      %4119 = vst.msk [vmem:[%s316 + $0x68] sm:$0xff] %vm4105, %v4086
      %4120 = vst.msk [vmem:[%s316 + $0x70] sm:$0xff] %vm4105, %v4087
      %4121 = vst.msk [vmem:[%s316 + $0x78] sm:$0xff] %vm4105, %v4088
      %4122 = vst.msk [vmem:[%s316 + $0x80] sm:$0xff] %vm4105, %v4089
      %4123 = vst.msk [vmem:[%s316 + $0x88] sm:$0xff] %vm4105, %v4090
      %4124 = vst.msk [vmem:[%s316 + $0x90] sm:$0xff] %vm4105, %v4091
      %4125 = vst.msk [vmem:[%s316 + $0x98] sm:$0xff] %vm4105, %v4092
      %4126 = vst.msk [vmem:[%s316 + $0xa0] sm:$0xff] %vm4105, %v4093
      %4127 = vst.msk [vmem:[%s316 + $0xa8] sm:$0xff] %vm4105, %v4094
      %4128 = vst.msk [vmem:[%s316 + $0xb0] sm:$0xff] %vm4105, %v4095
      %4129 = vst.msk [vmem:[%s316 + $0xb8] sm:$0xff] %vm4105, %v4096
      %4130 = vst.msk [vmem:[%s316 + $0xc0] sm:$0xff] %vm4105, %v4097
      %4131 = vst.msk [vmem:[%s316 + $0xc8] sm:$0xff] %vm4105, %v4098
      %4132 = vst.msk [vmem:[%s316 + $0xd0] sm:$0xff] %vm4105, %v4099
      %4133 = vst.msk [vmem:[%s316 + $0xd8] sm:$0xff] %vm4105, %v4100
      %4134 = vst.msk [vmem:[%s316 + $0xe0] sm:$0xff] %vm4105, %v4101
      %4135 = vst.msk [vmem:[%s316 + $0xe8] sm:$0xff] %vm4105, %v4102
      %4136 = vst.msk [vmem:[%s316 + $0xf0] sm:$0xff] %vm4105, %v4103
      %4137 = vst.msk [vmem:[%s316 + $0xf8] sm:$0xff] %vm4105, %v4104
      %p4138 = scmp.lt.s32.totalorder %s21, 1
      %s4139 = scalar_select %p4138, %s21, 1
      %p4140 = scmp.lt.s32.totalorder %s22, 0
      %s4141 = scalar_select %p4140, %s22, 0
      %s4142 = smul.addr %s4139, 32
      %s4143 = sadd.s32 %s4141, %s4142
      %s4144 = smul.addr %s4143, 8
      %s4145 = scalar_lea.vmem %s6, %s4144
      // Predicated region
      $region45: #{tpu_custom_call.1} parent=43 // pred_check
        %p4146 = pneg %p195
      $region46: #{tpu_custom_call.1} parent=43 // pred_check_branch
        %4148 = sbr.rel (%p4146) target = $region48
      $region47: #{tpu_custom_call.1} parent=43 // pred_region
        _
      $region48: #{tpu_custom_call.1} parent=43 // pred_fallthru
        _
    $region44: #{tpu_custom_call.1} parent=5 // pred_fallthru
      _
    %p4149 = scmp.le.s32.totalorder 2, %s12
    // Predicated region
    $region49: #{tpu_custom_call.1} parent=5 // pred_check
      %p4150 = pneg %p4149
    $region50: #{tpu_custom_call.1} parent=5 // pred_check_branch
      %4152 = sbr.rel (%p4150) target = $region52
    $region51: #{tpu_custom_call.1} parent=5 // pred_region
      %s4153 = ssub.s32 %s12, 2
      // Predicated region
      $region53: #{tpu_custom_call.1} parent=51 // pred_check
        %p4154 = pneg %p201
      $region54: #{tpu_custom_call.1} parent=51 // pred_check_branch
        %4156 = sbr.rel (%p4154) target = $region56
      $region55: #{tpu_custom_call.1} parent=51 // pred_region
        %p4157 = scmp.lt.s32.totalorder %s23, 1
        %s4158 = scalar_select %p4157, %s23, 1
        %p4159 = scmp.lt.s32.totalorder %s24, 0
        %s4160 = scalar_select %p4159, %s24, 0
        %s4161 = smul.addr %s4158, 32
        %s4162 = sadd.s32 %s4160, %s4161
        %s4163 = smul.addr %s4162, 8
        %s4164 = scalar_lea.vmem %s6, %s4163
      $region56: #{tpu_custom_call.1} parent=51 // pred_fallthru
        _
    $region52: #{tpu_custom_call.1} parent=5 // pred_fallthru
      _
  $region6: #{tpu_custom_call.1} parent=0 // loop_footer
    %s16 = sadd.s32 1, %s12
  $region7: #{tpu_custom_call.1} parent=0 // loop_footer_branch
    %11 = sbr.rel target = $region3
  $region8: #{tpu_custom_call.1} parent=0 // loop_exit
    _

</llo_original>
